<compile_context>
chip_gen: v6e
topology: v6e:2x2x1
jax: 0.10.0
libtpu: 0.0.40
codegen_flags: <defaults>
</compile_context>

<pallas_src>
import functools

import numpy as np
import jax
import jax.numpy as jnp
from jax.experimental import pallas as pl
from jax.experimental.pallas import tpu as pltpu

EPS = 1e-3          # SyncBatchNorm(eps=0.001)
LANE = 128          # TPU lane width; channel dims are padded to this


def _round_up(x, m):
    return (x + m - 1) // m * m


def _interp_matrix(n_in: int, n_out: int) -> np.ndarray:
    """Bilinear interpolation matrix (align_corners=True), shape (n_out, n_in)."""
    if n_in == 1:
        return np.ones((n_out, 1), np.float32)
    src = np.arange(n_out, dtype=np.float64) * (n_in - 1) / (n_out - 1)
    i0 = np.clip(np.floor(src).astype(np.int64), 0, n_in - 1)
    i1 = np.minimum(i0 + 1, n_in - 1)
    frac = src - i0
    A = np.zeros((n_out, n_in), np.float64)
    A[np.arange(n_out), i0] += 1.0 - frac
    A[np.arange(n_out), i1] += frac
    return A.astype(np.float32)


# --------------------------------------------------------------------------
# Kernel A: 3x3 conv (pad=1, no bias) + per-image BN partial statistics.
# --------------------------------------------------------------------------
def _conv_stats_kernel(x_ref, w_ref, y_ref, stats_ref, xpad_ref, slab_ref):
    # x_ref:     (1, H, W, C)    one image, channels padded to LANE
    # w_ref:     (9*C, Co)       weights, (ky, kx, cin) flattened row-major
    # y_ref:     (1, H, W, Co)   f32 conv output
    # stats_ref: (1, 2, Co)      row 0 = sum, row 1 = sum of squares
    # xpad_ref:  (H+2, W+2, C)   VMEM scratch (halo zero-padded)
    # slab_ref:  (H, W, 9*C)     VMEM scratch (im2col slab)
    _, H, W, C = x_ref.shape
    Co = y_ref.shape[3]

    # Halo padding done in VMEM (no HBM round-trip in the wrapper).
    xpad_ref[...] = jnp.zeros_like(xpad_ref)
    xpad_ref[1:H + 1, 1:W + 1, :] = x_ref[0].astype(xpad_ref.dtype)

    # im2col: 9 shifted views written to lane-aligned column blocks.
    for ky in range(3):
        for kx in range(3):
            k = ky * 3 + kx
            slab_ref[:, :, k * C:(k + 1) * C] = xpad_ref[ky:ky + H, kx:kx + W, :]

    # One big-K matmul (K = 9*C) on the MXU, f32 accumulation.
    slab = slab_ref[...].reshape(H * W, 9 * C)
    y = jnp.dot(slab, w_ref[...], preferred_element_type=jnp.float32)  # (H*W, Co)

    y_ref[0] = y.reshape(H, W, Co).astype(y_ref.dtype)

    # Fused BN partial statistics (conv result read only once, in-register).
    s = jnp.sum(y, axis=0, keepdims=True)          # (1, Co)
    ss = jnp.sum(y * y, axis=0, keepdims=True)     # (1, Co)
    stats_ref[0] = jnp.concatenate([s, ss], axis=0)


# --------------------------------------------------------------------------
# Kernel B: normalize + ReLU (+ separable 2x bilinear upsample).
# --------------------------------------------------------------------------
def _bn_relu_kernel(y_ref, scale_ref, shift_ref, o_ref):
    z = jnp.maximum(y_ref[0] * scale_ref[...] + shift_ref[...], 0.0)
    o_ref[0] = z.astype(o_ref.dtype)


def _bn_relu_upsample_kernel(y_ref, scale_ref, shift_ref, ah_ref, aw_ref,
                             o_ref, *, mm_dtype):
    # y_ref:  (1, H, W, C) f32 conv output
    # ah_ref: (HO, H)      height interpolation matrix
    # aw_ref: (WO, W)      width interpolation matrix
    # o_ref:  (1, HO, WO, C)
    _, H, W, C = y_ref.shape
    HO, WO = o_ref.shape[1], o_ref.shape[2]

    z = jnp.maximum(y_ref[0] * scale_ref[...] + shift_ref[...], 0.0)   # (H, W, C)

    # Height pass: one 2D matmul, channels stay on the lane dim.
    zh = z.reshape(H, W * C).astype(mm_dtype)
    t = jnp.dot(ah_ref[...].astype(mm_dtype), zh,
                preferred_element_type=jnp.float32)                    # (HO, W*C)

    # Width pass: batched matmul over the HO rows (no dense kron operator).
    t3 = t.reshape(HO, W, C).astype(mm_dtype)
    awb = jnp.broadcast_to(aw_ref[...].astype(mm_dtype), (HO, WO, W))
    out = jnp.einsum('bpw,bwc->bpc', awb, t3,
                     preferred_element_type=jnp.float32)               # (HO, WO, C)
    o_ref[0] = out.astype(o_ref.dtype)


# --------------------------------------------------------------------------
# One Conv3x3GNReLU block (channel-padded NHWC in / out).
# --------------------------------------------------------------------------
def conv_bn_relu_block(x, w_p, gamma_p, beta_p, upsample, mm_dtype):
    N, H, W, C = x.shape
    Co = w_p.shape[-1]
    w2d = w_p.reshape(9 * C, Co).astype(mm_dtype)

    cparams = pltpu.CompilerParams(
        dimension_semantics=("parallel",),           # shard N across TCs (v7x)
        vmem_limit_bytes=32 * 1024 * 1024)

    # ---- pass 1: conv + per-image BN partial stats ----------------------
    y, stats = pl.pallas_call(
        _conv_stats_kernel,
        out_shape=(jax.ShapeDtypeStruct((N, H, W, Co), jnp.float32),
                   jax.ShapeDtypeStruct((N, 2, Co), jnp.float32)),
        grid=(N,),
        in_specs=[pl.BlockSpec((1, H, W, C), lambda n: (n, 0, 0, 0)),
                  pl.BlockSpec((9 * C, Co), lambda n: (0, 0))],
        out_specs=(pl.BlockSpec((1, H, W, Co), lambda n: (n, 0, 0, 0)),
                   pl.BlockSpec((1, 2, Co), lambda n: (n, 0, 0))),
        scratch_shapes=[pltpu.VMEM((H + 2, W + 2, C), mm_dtype),
                        pltpu.VMEM((H, W, 9 * C), mm_dtype)],
        compiler_params=cparams,
    )(x, w2d)

    # ---- BN scale/shift from batch statistics (tiny O(C) glue) ----------
    count = float(N * H * W)
    tot = jnp.sum(stats, axis=0)                        # (2, Co)
    mean = tot[0] / count
    var = jnp.maximum(tot[1] / count - mean * mean, 0.0)
    scale = gamma_p * jax.lax.rsqrt(var + EPS)
    shift = beta_p - mean * scale
    scale = scale.reshape(1, Co).astype(jnp.float32)
    shift = shift.reshape(1, Co).astype(jnp.float32)

    # ---- pass 2: normalize + ReLU (+ separable upsample) ----------------
    if upsample:
        HO, WO = 2 * H, 2 * W
        ah = jnp.asarray(_interp_matrix(H, HO))
        aw = jnp.asarray(_interp_matrix(W, WO))
        return pl.pallas_call(
            functools.partial(_bn_relu_upsample_kernel, mm_dtype=mm_dtype),
            out_shape=jax.ShapeDtypeStruct((N, HO, WO, Co), jnp.float32),
            grid=(N,),
            in_specs=[pl.BlockSpec((1, H, W, Co), lambda n: (n, 0, 0, 0)),
                      pl.BlockSpec((1, Co), lambda n: (0, 0)),
                      pl.BlockSpec((1, Co), lambda n: (0, 0)),
                      pl.BlockSpec((HO, H), lambda n: (0, 0)),
                      pl.BlockSpec((WO, W), lambda n: (0, 0))],
            out_specs=pl.BlockSpec((1, HO, WO, Co), lambda n: (n, 0, 0, 0)),
            compiler_params=cparams,
        )(y, scale, shift, ah, aw)

    # upsample=False: no interpolation work at all (no identity matmul).
    return pl.pallas_call(
        _bn_relu_kernel,
        out_shape=jax.ShapeDtypeStruct((N, H, W, Co), jnp.float32),
        grid=(N,),
        in_specs=[pl.BlockSpec((1, H, W, Co), lambda n: (n, 0, 0, 0)),
                  pl.BlockSpec((1, Co), lambda n: (0, 0)),
                  pl.BlockSpec((1, Co), lambda n: (0, 0))],
        out_specs=pl.BlockSpec((1, H, W, Co), lambda n: (n, 0, 0, 0)),
        compiler_params=cparams,
    )(y, scale, shift)


# --------------------------------------------------------------------------
# SegmentationBlock forward (NCHW in / out, matching the PyTorch module).
# --------------------------------------------------------------------------
def segmentation_block(x_nchw, params, n_upsamples, matmul_dtype=jnp.float32):
    N, Cin, H, W = x_nchw.shape
    Cout = params[0][0].shape[-1]
    Cin_p = _round_up(Cin, LANE)
    Cout_p = _round_up(Cout, LANE)

    # NCHW -> NHWC, pad channels once (no-op for real FPN widths >= 128).
    x = jnp.transpose(x_nchw, (0, 2, 3, 1)).astype(jnp.float32)
    x = jnp.pad(x, ((0, 0), (0, 0), (0, 0), (0, Cin_p - Cin)))

    for b, (w, gamma, beta) in enumerate(params):
        upsample = bool(n_upsamples) if b == 0 else True
        c_now = x.shape[-1]
        w_p = jnp.pad(w, ((0, 0), (0, 0),
                          (0, c_now - w.shape[2]),
                          (0, Cout_p - Cout)))
        gamma_p = jnp.pad(gamma, (0, Cout_p - Cout))
        beta_p = jnp.pad(beta, (0, Cout_p - Cout))
        x = conv_bn_relu_block(x, w_p, gamma_p, beta_p, upsample, matmul_dtype)

    x = x[..., :Cout]
    return jnp.transpose(x, (0, 3, 1, 2))


def init_params(key, in_channels, out_channels, n_upsamples):
    """Deterministic parameter init matching the module's shapes (HWIO weights)."""
    n_blocks = n_upsamples if n_upsamples > 1 else 1
    params = []
    cin = in_channels
    for _ in range(n_blocks):
        key, k1 = jax.random.split(key)
        w = jax.random.normal(k1, (3, 3, cin, out_channels), jnp.float32) * 0.2
        gamma = 1.0 + 0.1 * jnp.cos(jnp.arange(out_channels, dtype=jnp.float32))
        beta = 0.05 * jnp.sin(jnp.arange(out_channels, dtype=jnp.float32))
        params.append((w, gamma, beta))
        cin = out_channels
    return params


# --------------------------------------------------------------------------
# Pure-JAX reference (validation only).
# --------------------------------------------------------------------------
def reference(x_nchw, params, n_upsamples):
    x = jnp.transpose(x_nchw, (0, 2, 3, 1))
    for b, (w, gamma, beta) in enumerate(params):
        y = jax.lax.conv_general_dilated(
            x, w, (1, 1), "SAME",
            dimension_numbers=("NHWC", "HWIO", "NHWC"))
        mean = jnp.mean(y, axis=(0, 1, 2))
        var = jnp.mean((y - mean) ** 2, axis=(0, 1, 2))
        y = (y - mean) * jax.lax.rsqrt(var + EPS) * gamma + beta
        y = jnp.maximum(y, 0.0)
        upsample = bool(n_upsamples) if b == 0 else True
        if upsample:
            Hc, Wc = y.shape[1], y.shape[2]
            A_h = jnp.asarray(_interp_matrix(Hc, 2 * Hc))
            A_w = jnp.asarray(_interp_matrix(Wc, 2 * Wc))
            y = jnp.einsum("oh,nhwc->nowc", A_h, y)
            y = jnp.einsum("pw,nowc->nopc", A_w, y)
        x = y
    return jnp.transpose(x, (0, 3, 1, 2))


if __name__ == "__main__":
    N, Cin, Cout, H, W = 2, 4, 8, 16, 16
    n_upsamples = 2

    key = jax.random.PRNGKey(0)
    kx, kp = jax.random.split(key)
    x = jax.random.normal(kx, (N, Cin, H, W), jnp.float32)   # NCHW like PyTorch
    params = init_params(kp, Cin, Cout, n_upsamples)

    # f32 path: strict check against the pure-JAX reference.
    out = jax.block_until_ready(segmentation_block(x, params, n_upsamples))
    assert out.shape == (N, Cout, H * 2 ** n_upsamples, W * 2 ** n_upsamples)
    ref = jax.block_until_ready(reference(x, params, n_upsamples))
    np.testing.assert_allclose(np.asarray(out), np.asarray(ref),
                               rtol=2e-3, atol=2e-3)

    # n_upsamples = 0 path (single block, no interpolation work at all).
    params0 = init_params(kp, Cin, Cout, 0)
    out0 = jax.block_until_ready(segmentation_block(x, params0, 0))
    ref0 = jax.block_until_ready(reference(x, params0, 0))
    assert out0.shape == (N, Cout, H, W)
    np.testing.assert_allclose(np.asarray(out0), np.asarray(ref0),
                               rtol=2e-3, atol=2e-3)

    # bf16 MXU-operand path (v6e/v7x): f32 accumulation + f32 BN math,
    # loose sanity check against the f32 reference.
    out_bf16 = jax.block_until_ready(
        segmentation_block(x, params, n_upsamples, matmul_dtype=jnp.bfloat16))
    assert out_bf16.shape == out.shape
    assert np.isfinite(np.asarray(out_bf16)).all()
    assert float(np.mean(np.abs(np.asarray(out_bf16) - np.asarray(ref)))) < 0.05

    print("KERNEL_OK")
</pallas_src>

<mosaic_0001>
module attributes {stable_mosaic.version = 11 : i64} {
  func.func @_conv_stats_kernel(%arg0: i32, %arg1: memref<1x16x16x128xf32, #tpu.memory_space<vmem>>, %arg2: memref<1152x128xf32, #tpu.memory_space<vmem>>, %arg3: memref<1x16x16x128xf32, #tpu.memory_space<vmem>>, %arg4: memref<1x2x128xf32, #tpu.memory_space<vmem>>, %arg5: memref<18x18x128xf32, #tpu.memory_space<vmem>>, %arg6: memref<16x16x1152xf32, #tpu.memory_space<vmem>>) attributes {dimension_semantics = [#tpu.dimension_semantics<parallel>], iteration_bounds = array<i64: 2>, scalar_prefetch = 0 : i64, scratch_operands = 2 : i64, tpu.core_type = #tpu.core_type<tc>, window_params = [{transform_indices = @transform_0, window_bounds = array<i64: 1, 16, 16, 128>}, {pipeline_mode = #tpu.pipeline_mode<synchronous>, transform_indices = @transform_1, window_bounds = array<i64: 1152, 128>}, {transform_indices = @transform_2, window_bounds = array<i64: 1, 16, 16, 128>}, {transform_indices = @transform_3, window_bounds = array<i64: 1, 2, 128>}]} {
    %cst = arith.constant 0.000000e+00 : f32
    %0 = vector.broadcast %cst : f32 to vector<18x18x128xf32>
    %c0 = arith.constant 0 : index
    %c0_0 = arith.constant 0 : index
    %c0_1 = arith.constant 0 : index
    %1 = vector.load %arg5[%c0, %c0_0, %c0_1] : memref<18x18x128xf32, #tpu.memory_space<vmem>>, vector<18x18x128xf32>
    tpu.vector_store %arg5[%c0, %c0_0, %c0_1], %0 {strides = array<i32>} : memref<18x18x128xf32, #tpu.memory_space<vmem>>, vector<18x18x128xf32>,
    %c0_2 = arith.constant 0 : index
    %c0_3 = arith.constant 0 : index
    %c0_4 = arith.constant 0 : index
    %c0_5 = arith.constant 0 : index
    %2 = vector.load %arg1[%c0_2, %c0_3, %c0_4, %c0_5] : memref<1x16x16x128xf32, #tpu.memory_space<vmem>>, vector<1x16x16x128xf32>
    %3 = vector.shape_cast %2 : vector<1x16x16x128xf32> to vector<16x16x128xf32>
    %c1 = arith.constant 1 : index
    %c1_6 = arith.constant 1 : index
    %c0_7 = arith.constant 0 : index
    %4 = vector.load %arg5[%c1, %c1_6, %c0_7] : memref<18x18x128xf32, #tpu.memory_space<vmem>>, vector<16x16x128xf32>
    tpu.vector_store %arg5[%c1, %c1_6, %c0_7], %3 {strides = array<i32>} : memref<18x18x128xf32, #tpu.memory_space<vmem>>, vector<16x16x128xf32>,
    %c0_8 = arith.constant 0 : index
    %c0_9 = arith.constant 0 : index
    %c0_10 = arith.constant 0 : index
    %5 = vector.load %arg5[%c0_8, %c0_9, %c0_10] : memref<18x18x128xf32, #tpu.memory_space<vmem>>, vector<16x16x128xf32>
    %c0_11 = arith.constant 0 : index
    %c0_12 = arith.constant 0 : index
    %c0_13 = arith.constant 0 : index
    %6 = vector.load %arg6[%c0_11, %c0_12, %c0_13] : memref<16x16x1152xf32, #tpu.memory_space<vmem>>, vector<16x16x128xf32>
    tpu.vector_store %arg6[%c0_11, %c0_12, %c0_13], %5 {strides = array<i32>} : memref<16x16x1152xf32, #tpu.memory_space<vmem>>, vector<16x16x128xf32>,
    %c0_14 = arith.constant 0 : index
    %c1_15 = arith.constant 1 : index
    %c0_16 = arith.constant 0 : index
    %7 = vector.load %arg5[%c0_14, %c1_15, %c0_16] : memref<18x18x128xf32, #tpu.memory_space<vmem>>, vector<16x16x128xf32>
    %c0_17 = arith.constant 0 : index
    %c0_18 = arith.constant 0 : index
    %c128 = arith.constant 128 : index
    %8 = vector.load %arg6[%c0_17, %c0_18, %c128] : memref<16x16x1152xf32, #tpu.memory_space<vmem>>, vector<16x16x128xf32>
    tpu.vector_store %arg6[%c0_17, %c0_18, %c128], %7 {strides = array<i32>} : memref<16x16x1152xf32, #tpu.memory_space<vmem>>, vector<16x16x128xf32>,
    %c0_19 = arith.constant 0 : index
    %c2 = arith.constant 2 : index
    %c0_20 = arith.constant 0 : index
    %9 = vector.load %arg5[%c0_19, %c2, %c0_20] : memref<18x18x128xf32, #tpu.memory_space<vmem>>, vector<16x16x128xf32>
    %c0_21 = arith.constant 0 : index
    %c0_22 = arith.constant 0 : index
    %c256 = arith.constant 256 : index
    %10 = vector.load %arg6[%c0_21, %c0_22, %c256] : memref<16x16x1152xf32, #tpu.memory_space<vmem>>, vector<16x16x128xf32>
    tpu.vector_store %arg6[%c0_21, %c0_22, %c256], %9 {strides = array<i32>} : memref<16x16x1152xf32, #tpu.memory_space<vmem>>, vector<16x16x128xf32>,
    %c1_23 = arith.constant 1 : index
    %c0_24 = arith.constant 0 : index
    %c0_25 = arith.constant 0 : index
    %11 = vector.load %arg5[%c1_23, %c0_24, %c0_25] : memref<18x18x128xf32, #tpu.memory_space<vmem>>, vector<16x16x128xf32>
    %c0_26 = arith.constant 0 : index
    %c0_27 = arith.constant 0 : index
    %c384 = arith.constant 384 : index
    %12 = vector.load %arg6[%c0_26, %c0_27, %c384] : memref<16x16x1152xf32, #tpu.memory_space<vmem>>, vector<16x16x128xf32>
    tpu.vector_store %arg6[%c0_26, %c0_27, %c384], %11 {strides = array<i32>} : memref<16x16x1152xf32, #tpu.memory_space<vmem>>, vector<16x16x128xf32>,
    %c1_28 = arith.constant 1 : index
    %c1_29 = arith.constant 1 : index
    %c0_30 = arith.constant 0 : index
    %13 = vector.load %arg5[%c1_28, %c1_29, %c0_30] : memref<18x18x128xf32, #tpu.memory_space<vmem>>, vector<16x16x128xf32>
    %c0_31 = arith.constant 0 : index
    %c0_32 = arith.constant 0 : index
    %c512 = arith.constant 512 : index
    %14 = vector.load %arg6[%c0_31, %c0_32, %c512] : memref<16x16x1152xf32, #tpu.memory_space<vmem>>, vector<16x16x128xf32>
    tpu.vector_store %arg6[%c0_31, %c0_32, %c512], %13 {strides = array<i32>} : memref<16x16x1152xf32, #tpu.memory_space<vmem>>, vector<16x16x128xf32>,
    %c1_33 = arith.constant 1 : index
    %c2_34 = arith.constant 2 : index
    %c0_35 = arith.constant 0 : index
    %15 = vector.load %arg5[%c1_33, %c2_34, %c0_35] : memref<18x18x128xf32, #tpu.memory_space<vmem>>, vector<16x16x128xf32>
    %c0_36 = arith.constant 0 : index
    %c0_37 = arith.constant 0 : index
    %c640 = arith.constant 640 : index
    %16 = vector.load %arg6[%c0_36, %c0_37, %c640] : memref<16x16x1152xf32, #tpu.memory_space<vmem>>, vector<16x16x128xf32>
    tpu.vector_store %arg6[%c0_36, %c0_37, %c640], %15 {strides = array<i32>} : memref<16x16x1152xf32, #tpu.memory_space<vmem>>, vector<16x16x128xf32>,
    %c2_38 = arith.constant 2 : index
    %c0_39 = arith.constant 0 : index
    %c0_40 = arith.constant 0 : index
    %17 = vector.load %arg5[%c2_38, %c0_39, %c0_40] : memref<18x18x128xf32, #tpu.memory_space<vmem>>, vector<16x16x128xf32>
    %c0_41 = arith.constant 0 : index
    %c0_42 = arith.constant 0 : index
    %c768 = arith.constant 768 : index
    %18 = vector.load %arg6[%c0_41, %c0_42, %c768] : memref<16x16x1152xf32, #tpu.memory_space<vmem>>, vector<16x16x128xf32>
    tpu.vector_store %arg6[%c0_41, %c0_42, %c768], %17 {strides = array<i32>} : memref<16x16x1152xf32, #tpu.memory_space<vmem>>, vector<16x16x128xf32>,
    %c2_43 = arith.constant 2 : index
    %c1_44 = arith.constant 1 : index
    %c0_45 = arith.constant 0 : index
    %19 = vector.load %arg5[%c2_43, %c1_44, %c0_45] : memref<18x18x128xf32, #tpu.memory_space<vmem>>, vector<16x16x128xf32>
    %c0_46 = arith.constant 0 : index
    %c0_47 = arith.constant 0 : index
    %c896 = arith.constant 896 : index
    %20 = vector.load %arg6[%c0_46, %c0_47, %c896] : memref<16x16x1152xf32, #tpu.memory_space<vmem>>, vector<16x16x128xf32>
    tpu.vector_store %arg6[%c0_46, %c0_47, %c896], %19 {strides = array<i32>} : memref<16x16x1152xf32, #tpu.memory_space<vmem>>, vector<16x16x128xf32>,
    %c2_48 = arith.constant 2 : index
    %c2_49 = arith.constant 2 : index
    %c0_50 = arith.constant 0 : index
    %21 = vector.load %arg5[%c2_48, %c2_49, %c0_50] : memref<18x18x128xf32, #tpu.memory_space<vmem>>, vector<16x16x128xf32>
    %c0_51 = arith.constant 0 : index
    %c0_52 = arith.constant 0 : index
    %c1024 = arith.constant 1024 : index
    %22 = vector.load %arg6[%c0_51, %c0_52, %c1024] : memref<16x16x1152xf32, #tpu.memory_space<vmem>>, vector<16x16x128xf32>
    tpu.vector_store %arg6[%c0_51, %c0_52, %c1024], %21 {strides = array<i32>} : memref<16x16x1152xf32, #tpu.memory_space<vmem>>, vector<16x16x128xf32>,
    %c0_53 = arith.constant 0 : index
    %c0_54 = arith.constant 0 : index
    %c0_55 = arith.constant 0 : index
    %23 = vector.load %arg6[%c0_53, %c0_54, %c0_55] : memref<16x16x1152xf32, #tpu.memory_space<vmem>>, vector<16x16x1152xf32>
    %24 = vector.shape_cast %23 : vector<16x16x1152xf32> to vector<256x1152xf32>
    %c0_56 = arith.constant 0 : index
    %c0_57 = arith.constant 0 : index
    %25 = vector.load %arg2[%c0_56, %c0_57] : memref<1152x128xf32, #tpu.memory_space<vmem>>, vector<1152x128xf32>
    %cst_58 = arith.constant dense<0.000000e+00> : vector<256x128xf32>
    %26 = tpu.matmul %24, %25, %cst_58 {dimension_numbers = #tpu.dot_dimension_numbers<[1], [0], [0], [1], [0, 0, 1, 1], [], []>} : vector<256x1152xf32>, vector<1152x128xf32>, vector<256x128xf32> -> vector<256x128xf32>
    %27 = vector.shape_cast %26 : vector<256x128xf32> to vector<16x16x128xf32>
    %c0_59 = arith.constant 0 : index
    %c0_60 = arith.constant 0 : index
    %c0_61 = arith.constant 0 : index
    %c0_62 = arith.constant 0 : index
    %28 = vector.load %arg3[%c0_59, %c0_60, %c0_61, %c0_62] : memref<1x16x16x128xf32, #tpu.memory_space<vmem>>, vector<1x16x16x128xf32>
    %29 = vector.shape_cast %28 : vector<1x16x16x128xf32> to vector<16x16x128xf32>
    %30 = vector.shape_cast %27 : vector<16x16x128xf32> to vector<1x16x16x128xf32>
    tpu.vector_store %arg3[%c0_59, %c0_60, %c0_61, %c0_62], %30 {strides = array<i32>} : memref<1x16x16x128xf32, #tpu.memory_space<vmem>>, vector<1x16x16x128xf32>,
    %cst_63 = arith.constant dense<0.000000e+00> : vector<128xf32>
    %31 = vector.multi_reduction <add>, %26, %cst_63 [0] : vector<256x128xf32> to vector<128xf32>
    %32 = vector.shape_cast %31 : vector<128xf32> to vector<1x128xf32>
    %33 = arith.mulf %26, %26 : vector<256x128xf32>
    %cst_64 = arith.constant dense<0.000000e+00> : vector<128xf32>
    %34 = vector.multi_reduction <add>, %33, %cst_64 [0] : vector<256x128xf32> to vector<128xf32>
    %35 = vector.shape_cast %34 : vector<128xf32> to vector<1x128xf32>
    %36 = tpu.concatenate %32, %35 in 0 : vector<1x128xf32>, vector<1x128xf32> -> vector<2x128xf32>
    %c0_65 = arith.constant 0 : index
    %c0_66 = arith.constant 0 : index
    %c0_67 = arith.constant 0 : index
    %37 = vector.load %arg4[%c0_65, %c0_66, %c0_67] : memref<1x2x128xf32, #tpu.memory_space<vmem>>, vector<1x2x128xf32>
    %38 = vector.shape_cast %37 : vector<1x2x128xf32> to vector<2x128xf32>
    %39 = vector.shape_cast %36 : vector<2x128xf32> to vector<1x2x128xf32>
    tpu.vector_store %arg4[%c0_65, %c0_66, %c0_67], %39 {strides = array<i32>} : memref<1x2x128xf32, #tpu.memory_space<vmem>>, vector<1x2x128xf32>,
    return
  }
  func.func @transform_0(%arg0: i32) -> (i32, i32, i32, i32) {
    %c0_i32 = arith.constant 0 : i32
    %c0_i32_0 = arith.constant 0 : i32
    %c0_i32_1 = arith.constant 0 : i32
    %c0_i32_2 = arith.constant 0 : i32
    return %arg0, %c0_i32, %c0_i32_0, %c0_i32_1 : i32, i32, i32, i32
  }
  func.func @transform_1(%arg0: i32) -> (i32, i32) {
    %c0_i32 = arith.constant 0 : i32
    %c0_i32_0 = arith.constant 0 : i32
    %c0_i32_1 = arith.constant 0 : i32
    return %c0_i32, %c0_i32_0 : i32, i32
  }
  func.func @transform_2(%arg0: i32) -> (i32, i32, i32, i32) {
    %c0_i32 = arith.constant 0 : i32
    %c0_i32_0 = arith.constant 0 : i32
    %c0_i32_1 = arith.constant 0 : i32
    %c0_i32_2 = arith.constant 0 : i32
    return %arg0, %c0_i32, %c0_i32_0, %c0_i32_1 : i32, i32, i32, i32
  }
  func.func @transform_3(%arg0: i32) -> (i32, i32, i32) {
    %c0_i32 = arith.constant 0 : i32
    %c0_i32_0 = arith.constant 0 : i32
    %c0_i32_1 = arith.constant 0 : i32
    return %arg0, %c0_i32, %c0_i32_0 : i32, i32, i32
  }
}

</mosaic_0001>

<llo_original>
// kernel: tpu_custom_call.1
$region0: #{tpu_custom_call.1}
  #allocation0 [shape = 'u32[]', space=smem, size = 0x4, offset = 0x4, fixed_abs, tag = 'smem constant byte address 0x4 - core index']
  #allocation1 [shape = 'u32[144,128]{1,0:T(1,128)}', space=vmem, size = 0x12000, scoped, tag = 'internal scratch']
  #allocation2 [shape = 'f32[18,18,128]{2,1,0:T(8,128)}', space=vmem, size = 0x36000, scoped, tag = 'scratch operand']
  #allocation3 [shape = 'f32[16,16,1152]{2,1,0:T(8,128)}', space=vmem, size = 0x120000, scoped, tag = 'scratch operand']
  %s0 = inlined_call_operand.hbm [shape: f32[2,16,16,128], index: 0, kind: input, shape index: {}]
  %s1 = inlined_call_operand.hbm [shape: f32[1152,128], index: 1, kind: input, shape index: {}]
  %s2 = inlined_call_operand.hbm [shape: f32[2,16,16,128], index: 2, kind: output, shape index: {0}]
  %s3 = inlined_call_operand.hbm [shape: f32[2,2,128], index: 3, kind: output, shape index: {1}]
  %4 = xla_tuple %s2, %s3
  %s5 = sld [smem:[#allocation0]]
  $region57: #{tpu_custom_call.1} parent=0
    _
  %s7 = ssub.s32 1, %s5
  %s8 = scalar_select 0, %s7, %s5
  $region1: #{tpu_custom_call.1} parent=0
    #allocation4 [shape = 'u8[262144]{0}', space=vmem, size = 0x40000, scoped, tag = 'input window, operand 0']
    #allocation5 [shape = 's32[2]{0}', space=sflag, size = 0x8, scoped, tag = 'scoped memory for tpu_custom_call.1']
    #allocation6 [shape = 's32[2]{0}', space=sflag, size = 0x8, scoped, tag = 'scoped memory for tpu_custom_call.1']
    #allocation7 [shape = 'u8[589824]{0}', space=vmem, size = 0x90000, scoped, tag = 'input window, operand 1, single buffered']
    #allocation8 [shape = 's32[1]{0}', space=sflag, size = 0x4, scoped, tag = 'scoped memory for tpu_custom_call.1']
    #allocation9 [shape = 'u8[262144]{0}', space=vmem, size = 0x40000, scoped, tag = 'output window, operand 0']
    #allocation10 [shape = 'u8[2048]{0}', space=vmem, size = 0x800, scoped, tag = 'output window, operand 1']
    #allocation11 [shape = 's32[2]{0}', space=sflag, size = 0x8, scoped, tag = 'scoped memory for tpu_custom_call.1']
    %9 = vsyncpa [#allocation5], 0
    %s10 = scalar_lea.sflag [#allocation5], 1
    %11 = vsyncpa %s10, 0
    %12 = vsyncpa [#allocation8], 0
    %13 = vsyncpa [#allocation6], 0
    %s14 = scalar_lea.sflag [#allocation6], 1
    %15 = vsyncpa %s14, 0
    %16 = vsyncpa [#allocation11], 0
    %s17 = scalar_lea.sflag [#allocation11], 1
    %18 = vsyncpa %s17, 0
    loop: start=0, step=1, limit=4
    $region2: #{tpu_custom_call.1} parent=1 // loop_pre_header
      _
    $region3: #{tpu_custom_call.1} parent=1 // loop_header
      %s20 = sphi 0, %s24
      %p21 = scmp.ge.s32.totalorder %s20, 4
      %s30 = sphi 0, %s32
      %s33 = sphi 0, %s30
      %s34 = sphi 0, %s33
      %s50 = sphi 0, %s34
      %s54 = sphi 0, %s54
      %s56 = sphi 0, %s54
      %s57 = sphi 0, %s56
      %s71 = sphi 0, %s57
      %s77 = sphi 0, %s79
      %s80 = sphi 0, %s77
      %s81 = sphi 0, %s80
      %s97 = sphi 0, %s81
      %s103 = sphi 0, %s105
      %s106 = sphi 0, %s103
      %s107 = sphi 0, %s106
      %s123 = sphi 0, %s107
    $region4: #{tpu_custom_call.1} parent=1 // loop_header_branch
      %23 = sbr.rel (%p21) target = $region8
    $region5: #{tpu_custom_call.1} parent=1 // loop_body
      %s25 = ssub.s32 %s20, 1
      %s26 = ssub.s32 %s20, 2
      %s27 = sadd.s32 %s20, 1
      %s28 = ssub.s32 %s20, %s27
      %p29 = scmp.eq.s32.totalorder %s28, 0
      %s31 = sadd.s32 %s30, 1
      %s32 = scalar_select %p29, %s30, %s31
      %p35 = pneg %p29
      %p36 = scmp.eq.s32.totalorder %s20, 1
      %p37 = por %p35, %p36
      %p38 = scmp.ne.s32.totalorder %s30, %s33
      %p39 = scmp.eq.s32.totalorder %s20, 0
      %p40 = por %p38, %p39
      %p41 = scmp.ne.s32.totalorder %s30, %s33
      %p42 = scmp.eq.s32.totalorder %s25, 1
      %p43 = por %p41, %p42
      %p44 = scmp.ne.s32.totalorder %s33, %s34
      %p45 = scmp.eq.s32.totalorder %s25, 0
      %p46 = por %p44, %p45
      %p47 = scmp.ne.s32.totalorder %s33, %s34
      %p48 = scmp.eq.s32.totalorder %s26, 1
      %p49 = por %p47, %p48
      %p51 = scmp.ne.s32.totalorder %s34, %s50
      %p52 = scmp.eq.s32.totalorder %s26, 0
      %p53 = por %p51, %p52
      %s55 = sadd.s32 %s54, 1
      %p58 = scmp.eq.s32.totalorder %s20, 1
      %p59 = scmp.ne.s32.totalorder %s54, %s56
      %p60 = scmp.eq.s32.totalorder %s20, 0
      %p61 = por %p59, %p60
      %p62 = scmp.ne.s32.totalorder %s54, %s56
      %p63 = scmp.eq.s32.totalorder %s25, 1
      %p64 = por %p62, %p63
      %p65 = scmp.ne.s32.totalorder %s56, %s57
      %p66 = scmp.eq.s32.totalorder %s25, 0
      %p67 = por %p65, %p66
      %p68 = scmp.ne.s32.totalorder %s56, %s57
      %p69 = scmp.eq.s32.totalorder %s26, 1
      %p70 = por %p68, %p69
      %p72 = scmp.ne.s32.totalorder %s57, %s71
      %p73 = scmp.eq.s32.totalorder %s26, 0
      %p74 = por %p72, %p73
      %s75 = ssub.s32 %s20, %s27
      %p76 = scmp.eq.s32.totalorder %s75, 0
      %s78 = sadd.s32 %s77, 1
      %s79 = scalar_select %p76, %s77, %s78
      %p82 = pneg %p76
      %p83 = scmp.eq.s32.totalorder %s20, 1
      %p84 = por %p82, %p83
      %p85 = scmp.ne.s32.totalorder %s77, %s80
      %p86 = scmp.eq.s32.totalorder %s20, 0
      %p87 = por %p85, %p86
      %p88 = scmp.ne.s32.totalorder %s77, %s80
      %p89 = scmp.eq.s32.totalorder %s25, 1
      %p90 = por %p88, %p89
      %p91 = scmp.ne.s32.totalorder %s80, %s81
      %p92 = scmp.eq.s32.totalorder %s25, 0
      %p93 = por %p91, %p92
      %p94 = scmp.ne.s32.totalorder %s80, %s81
      %p95 = scmp.eq.s32.totalorder %s26, 1
      %p96 = por %p94, %p95
      %p98 = scmp.ne.s32.totalorder %s81, %s97
      %p99 = scmp.eq.s32.totalorder %s26, 0
      %p100 = por %p98, %p99
      %s101 = ssub.s32 %s20, %s27
      %p102 = scmp.eq.s32.totalorder %s101, 0
      %s104 = sadd.s32 %s103, 1
      %s105 = scalar_select %p102, %s103, %s104
      %p108 = pneg %p102
      %p109 = scmp.eq.s32.totalorder %s20, 1
      %p110 = por %p108, %p109
      %p111 = scmp.ne.s32.totalorder %s103, %s106
      %p112 = scmp.eq.s32.totalorder %s20, 0
      %p113 = por %p111, %p112
      %p114 = scmp.ne.s32.totalorder %s103, %s106
      %p115 = scmp.eq.s32.totalorder %s25, 1
      %p116 = por %p114, %p115
      %p117 = scmp.ne.s32.totalorder %s106, %s107
      %p118 = scmp.eq.s32.totalorder %s25, 0
      %p119 = por %p117, %p118
      %p120 = scmp.ne.s32.totalorder %s106, %s107
      %p121 = scmp.eq.s32.totalorder %s26, 1
      %p122 = por %p120, %p121
      %p124 = scmp.ne.s32.totalorder %s107, %s123
      %p125 = scmp.eq.s32.totalorder %s26, 0
      %p126 = por %p124, %p125
      %p127 = scmp.le.s32.totalorder 1, %s20
      %p128 = scmp.lt.s32.totalorder %s20, 3
      %p129 = pnand %p127, %p128
      %p130 = pneg %p129
      // Predicated region
      $region9: #{tpu_custom_call.1} parent=5 // pred_check
        _
      $region10: #{tpu_custom_call.1} parent=5 // pred_check_branch
        %132 = sbr.rel (%p129) target = $region12
      $region11: #{tpu_custom_call.1} parent=5 // pred_region
        %s133 = ssub.s32 %s20, 1
        // Predicated region
        $region13: #{tpu_custom_call.1} parent=11 // pred_check
          %p134 = pneg %p67
        $region14: #{tpu_custom_call.1} parent=11 // pred_check_branch
          %136 = sbr.rel (%p134) target = $region16
        $region15: #{tpu_custom_call.1} parent=11 // pred_region
          %s138 = ssub.s32 18432, 18432
          %139 = vsyncadd [#allocation8], %s138
          %s140 = sshll.u32 [#allocation7], 4
          %s141 = int_to_ptr.vmem [resolvable:$true] %s140
          %146 = dma.hbm_to_vmem [thread:$0]  %s1, 18432, %s141, [#allocation8], 128, 128, 8
        $region16: #{tpu_custom_call.1} parent=11 // pred_fallthru
          _
      $region12: #{tpu_custom_call.1} parent=5 // pred_fallthru
        _
      %p147 = scmp.lt.s32.totalorder %s20, 2
      // Predicated region
      $region17: #{tpu_custom_call.1} parent=5 // pred_check
        %p148 = pneg %p147
      $region18: #{tpu_custom_call.1} parent=5 // pred_check_branch
        %150 = sbr.rel (%p148) target = $region20
      $region19: #{tpu_custom_call.1} parent=5 // pred_region
        // Predicated region
        $region21: #{tpu_custom_call.1} parent=19 // pred_check
          %p151 = pneg %p40
        $region22: #{tpu_custom_call.1} parent=19 // pred_check_branch
          %153 = sbr.rel (%p151) target = $region24
        $region23: #{tpu_custom_call.1} parent=19 // pred_region
          %s154 = sand.u32 %s30, 1
          %s155 = scalar_lea.sflag [#allocation5], %s154
          %s156 = sand.u32 %s30, 1
          %s157 = smul.addr %s156, 256
          %s158 = scalar_lea.vmem [#allocation4], %s157
          %s160 = ssub.s32 4096, 4096
          %161 = vsyncadd %s155, %s160
          %s162 = smul.addr %s20, 32
          %s163 = smul.addr %s162, 128
          %s164 = scalar_lea.hbm %s0, %s163
          %s165 = sshll.u32 %s158, 4
          %s166 = int_to_ptr.vmem [resolvable:$true] %s165
          %171 = dma.hbm_to_vmem [thread:$0]  %s164, 4096, %s166, %s155, 128, 128, 8
        $region24: #{tpu_custom_call.1} parent=19 // pred_fallthru
          _
      $region20: #{tpu_custom_call.1} parent=5 // pred_fallthru
        _
      %p172 = scmp.le.s32.totalorder 1, %s20
      %p173 = scmp.lt.s32.totalorder %s20, 3
      %p174 = pnand %p172, %p173
      %p175 = pneg %p174
      // Predicated region
      $region25: #{tpu_custom_call.1} parent=5 // pred_check
        _
      $region26: #{tpu_custom_call.1} parent=5 // pred_check_branch
        %177 = sbr.rel (%p174) target = $region28
      $region27: #{tpu_custom_call.1} parent=5 // pred_region
        %s178 = ssub.s32 %s20, 1
        %s179 = sand.u32 %s33, 1
        %s180 = scalar_lea.sflag [#allocation5], %s179
        %s181 = sand.u32 %s33, 1
        %s182 = smul.addr %s181, 256
        %s183 = scalar_lea.vmem [#allocation4], %s182
        // Predicated region
        $region29: #{tpu_custom_call.1} parent=27 // pred_check
          %p184 = pneg %p46
        $region30: #{tpu_custom_call.1} parent=27 // pred_check_branch
          %186 = sbr.rel (%p184) target = $region32
        $region31: #{tpu_custom_call.1} parent=27 // pred_region
          %187 = dma.done %s180, 4096
        $region32: #{tpu_custom_call.1} parent=27 // pred_fallthru
          _
        // Predicated region
        $region33: #{tpu_custom_call.1} parent=27 // pred_check
          %p188 = pneg %p67
        $region34: #{tpu_custom_call.1} parent=27 // pred_check_branch
          %190 = sbr.rel (%p188) target = $region36
        $region35: #{tpu_custom_call.1} parent=27 // pred_region
          %191 = dma.done [#allocation8], 18432
        $region36: #{tpu_custom_call.1} parent=27 // pred_fallthru
          _
        %s192 = sand.u32 %s33, 1
        %s193 = scalar_lea.sflag [#allocation5], %s192
        %s194 = sand.u32 %s33, 1
        %s195 = smul.addr %s194, 256
        %s196 = scalar_lea.vmem [#allocation4], %s195
        %p197 = pneg %p46
        %p198 = pneg %p43
        %p199 = pneg %p67
        %p200 = pneg %p64
        %p201 = pneg %p93
        %p202 = pneg %p90
        %s203 = sand.u32 %s80, 1
        %s204 = scalar_lea.sflag [#allocation6], %s203
        %s205 = sand.u32 %s80, 1
        %s206 = smul.addr %s205, 256
        %s207 = scalar_lea.vmem [#allocation9], %s206
        %p208 = pneg %p119
        %p209 = pneg %p116
        %s210 = sand.u32 %s106, 1
        %s211 = scalar_lea.sflag [#allocation11], %s210
        %s212 = sand.u32 %s106, 1
        %s213 = smul.addr %s212, 2
        %s214 = scalar_lea.vmem [#allocation10], %s213
        %215 = vst [vmem:[#allocation2] sm:$0xff] 0.0
        %216 = vst [vmem:[#allocation2 + $0x8] sm:$0xff] 0.0
        %217 = vst [vmem:[#allocation2 + $0x10] sm:$0x3] 0.0
        %218 = vst [vmem:[#allocation2 + $0x18] sm:$0xff] 0.0
        %219 = vst [vmem:[#allocation2 + $0x20] sm:$0xff] 0.0
        %220 = vst [vmem:[#allocation2 + $0x28] sm:$0x3] 0.0
        %221 = vst [vmem:[#allocation2 + $0x30] sm:$0xff] 0.0
        %222 = vst [vmem:[#allocation2 + $0x38] sm:$0xff] 0.0
        %223 = vst [vmem:[#allocation2 + $0x40] sm:$0x3] 0.0
        %224 = vst [vmem:[#allocation2 + $0x48] sm:$0xff] 0.0
        %225 = vst [vmem:[#allocation2 + $0x50] sm:$0xff] 0.0
        %226 = vst [vmem:[#allocation2 + $0x58] sm:$0x3] 0.0
        %227 = vst [vmem:[#allocation2 + $0x60] sm:$0xff] 0.0
        %228 = vst [vmem:[#allocation2 + $0x68] sm:$0xff] 0.0
        %229 = vst [vmem:[#allocation2 + $0x70] sm:$0x3] 0.0
        %230 = vst [vmem:[#allocation2 + $0x78] sm:$0xff] 0.0
        %231 = vst [vmem:[#allocation2 + $0x80] sm:$0xff] 0.0
        %232 = vst [vmem:[#allocation2 + $0x88] sm:$0x3] 0.0
        %233 = vst [vmem:[#allocation2 + $0x90] sm:$0xff] 0.0
        %234 = vst [vmem:[#allocation2 + $0x98] sm:$0xff] 0.0
        %235 = vst [vmem:[#allocation2 + $0xa0] sm:$0x3] 0.0
        %236 = vst [vmem:[#allocation2 + $0xa8] sm:$0xff] 0.0
        %237 = vst [vmem:[#allocation2 + $0xb0] sm:$0xff] 0.0
        %238 = vst [vmem:[#allocation2 + $0xb8] sm:$0x3] 0.0
        %239 = vst [vmem:[#allocation2 + $0xc0] sm:$0xff] 0.0
        %240 = vst [vmem:[#allocation2 + $0xc8] sm:$0xff] 0.0
        %241 = vst [vmem:[#allocation2 + $0xd0] sm:$0x3] 0.0
        %242 = vst [vmem:[#allocation2 + $0xd8] sm:$0xff] 0.0
        %243 = vst [vmem:[#allocation2 + $0xe0] sm:$0xff] 0.0
        %244 = vst [vmem:[#allocation2 + $0xe8] sm:$0x3] 0.0
        %245 = vst [vmem:[#allocation2 + $0xf0] sm:$0xff] 0.0
        %246 = vst [vmem:[#allocation2 + $0xf8] sm:$0xff] 0.0
        %247 = vst [vmem:[#allocation2 + $0x100] sm:$0x3] 0.0
        %248 = vst [vmem:[#allocation2 + $0x108] sm:$0xff] 0.0
        %249 = vst [vmem:[#allocation2 + $0x110] sm:$0xff] 0.0
        %250 = vst [vmem:[#allocation2 + $0x118] sm:$0x3] 0.0
        %251 = vst [vmem:[#allocation2 + $0x120] sm:$0xff] 0.0
        %252 = vst [vmem:[#allocation2 + $0x128] sm:$0xff] 0.0
        %253 = vst [vmem:[#allocation2 + $0x130] sm:$0x3] 0.0
        %254 = vst [vmem:[#allocation2 + $0x138] sm:$0xff] 0.0
        %255 = vst [vmem:[#allocation2 + $0x140] sm:$0xff] 0.0
        %256 = vst [vmem:[#allocation2 + $0x148] sm:$0x3] 0.0
        %257 = vst [vmem:[#allocation2 + $0x150] sm:$0xff] 0.0
        %258 = vst [vmem:[#allocation2 + $0x158] sm:$0xff] 0.0
        %259 = vst [vmem:[#allocation2 + $0x160] sm:$0x3] 0.0
        %260 = vst [vmem:[#allocation2 + $0x168] sm:$0xff] 0.0
        %261 = vst [vmem:[#allocation2 + $0x170] sm:$0xff] 0.0
        %262 = vst [vmem:[#allocation2 + $0x178] sm:$0x3] 0.0
        %263 = vst [vmem:[#allocation2 + $0x180] sm:$0xff] 0.0
        %264 = vst [vmem:[#allocation2 + $0x188] sm:$0xff] 0.0
        %265 = vst [vmem:[#allocation2 + $0x190] sm:$0x3] 0.0
        %266 = vst [vmem:[#allocation2 + $0x198] sm:$0xff] 0.0
        %267 = vst [vmem:[#allocation2 + $0x1a0] sm:$0xff] 0.0
        %268 = vst [vmem:[#allocation2 + $0x1a8] sm:$0x3] 0.0
        %v269 = vld [vmem:[%s183] sm:$0xff]
        %v270 = vld [vmem:[%s183 + $0x8] sm:$0xff]
        %v271 = vld [vmem:[%s183 + $0x10] sm:$0xff]
        %v272 = vld [vmem:[%s183 + $0x18] sm:$0xff]
        %v273 = vld [vmem:[%s183 + $0x20] sm:$0xff]
        %v274 = vld [vmem:[%s183 + $0x28] sm:$0xff]
        %v275 = vld [vmem:[%s183 + $0x30] sm:$0xff]
        %v276 = vld [vmem:[%s183 + $0x38] sm:$0xff]
        %v277 = vld [vmem:[%s183 + $0x40] sm:$0xff]
        %v278 = vld [vmem:[%s183 + $0x48] sm:$0xff]
        %v279 = vld [vmem:[%s183 + $0x50] sm:$0xff]
        %v280 = vld [vmem:[%s183 + $0x58] sm:$0xff]
        %v281 = vld [vmem:[%s183 + $0x60] sm:$0xff]
        %v282 = vld [vmem:[%s183 + $0x68] sm:$0xff]
        %v283 = vld [vmem:[%s183 + $0x70] sm:$0xff]
        %v284 = vld [vmem:[%s183 + $0x78] sm:$0xff]
        %v285 = vld [vmem:[%s183 + $0x80] sm:$0xff]
        %v286 = vld [vmem:[%s183 + $0x88] sm:$0xff]
        %v287 = vld [vmem:[%s183 + $0x90] sm:$0xff]
        %v288 = vld [vmem:[%s183 + $0x98] sm:$0xff]
        %v289 = vld [vmem:[%s183 + $0xa0] sm:$0xff]
        %v290 = vld [vmem:[%s183 + $0xa8] sm:$0xff]
        %v291 = vld [vmem:[%s183 + $0xb0] sm:$0xff]
        %v292 = vld [vmem:[%s183 + $0xb8] sm:$0xff]
        %v293 = vld [vmem:[%s183 + $0xc0] sm:$0xff]
        %v294 = vld [vmem:[%s183 + $0xc8] sm:$0xff]
        %v295 = vld [vmem:[%s183 + $0xd0] sm:$0xff]
        %v296 = vld [vmem:[%s183 + $0xd8] sm:$0xff]
        %v297 = vld [vmem:[%s183 + $0xe0] sm:$0xff]
        %v298 = vld [vmem:[%s183 + $0xe8] sm:$0xff]
        %v299 = vld [vmem:[%s183 + $0xf0] sm:$0xff]
        %v300 = vld [vmem:[%s183 + $0xf8] sm:$0xff]
        %s301 = scalar_lea.vmem [#allocation2], 24
        %302 = vst [vmem:[%s301 + $0x1] sm:$0xff] %v269
        %303 = vst [vmem:[%s301 + $0x9] sm:$0xff] %v270
        %304 = vst [vmem:[%s301 + $0x19] sm:$0xff] %v271
        %305 = vst [vmem:[%s301 + $0x21] sm:$0xff] %v272
        %306 = vst [vmem:[%s301 + $0x31] sm:$0xff] %v273
        %307 = vst [vmem:[%s301 + $0x39] sm:$0xff] %v274
        %308 = vst [vmem:[%s301 + $0x49] sm:$0xff] %v275
        %309 = vst [vmem:[%s301 + $0x51] sm:$0xff] %v276
        %310 = vst [vmem:[%s301 + $0x61] sm:$0xff] %v277
        %311 = vst [vmem:[%s301 + $0x69] sm:$0xff] %v278
        %312 = vst [vmem:[%s301 + $0x79] sm:$0xff] %v279
        %313 = vst [vmem:[%s301 + $0x81] sm:$0xff] %v280
        %314 = vst [vmem:[%s301 + $0x91] sm:$0xff] %v281
        %315 = vst [vmem:[%s301 + $0x99] sm:$0xff] %v282
        %316 = vst [vmem:[%s301 + $0xa9] sm:$0xff] %v283
        %317 = vst [vmem:[%s301 + $0xb1] sm:$0xff] %v284
        %318 = vst [vmem:[%s301 + $0xc1] sm:$0xff] %v285
        %319 = vst [vmem:[%s301 + $0xc9] sm:$0xff] %v286
        %320 = vst [vmem:[%s301 + $0xd9] sm:$0xff] %v287
        %321 = vst [vmem:[%s301 + $0xe1] sm:$0xff] %v288
        %322 = vst [vmem:[%s301 + $0xf1] sm:$0xff] %v289
        %323 = vst [vmem:[%s301 + $0xf9] sm:$0xff] %v290
        %324 = vst [vmem:[%s301 + $0x109] sm:$0xff] %v291
        %325 = vst [vmem:[%s301 + $0x111] sm:$0xff] %v292
        %326 = vst [vmem:[%s301 + $0x121] sm:$0xff] %v293
        %327 = vst [vmem:[%s301 + $0x129] sm:$0xff] %v294
        %328 = vst [vmem:[%s301 + $0x139] sm:$0xff] %v295
        %329 = vst [vmem:[%s301 + $0x141] sm:$0xff] %v296
        %330 = vst [vmem:[%s301 + $0x151] sm:$0xff] %v297
        %331 = vst [vmem:[%s301 + $0x159] sm:$0xff] %v298
        %332 = vst [vmem:[%s301 + $0x169] sm:$0xff] %v299
        %333 = vst [vmem:[%s301 + $0x171] sm:$0xff] %v300
        %v334 = vld [vmem:[#allocation2] sm:$0xff]
        %v335 = vld [vmem:[#allocation2 + $0x8] sm:$0xff]
        %v336 = vld [vmem:[#allocation2 + $0x18] sm:$0xff]
        %v337 = vld [vmem:[#allocation2 + $0x20] sm:$0xff]
        %v338 = vld [vmem:[#allocation2 + $0x30] sm:$0xff]
        %v339 = vld [vmem:[#allocation2 + $0x38] sm:$0xff]
        %v340 = vld [vmem:[#allocation2 + $0x48] sm:$0xff]
        %v341 = vld [vmem:[#allocation2 + $0x50] sm:$0xff]
        %v342 = vld [vmem:[#allocation2 + $0x60] sm:$0xff]
        %v343 = vld [vmem:[#allocation2 + $0x68] sm:$0xff]
        %v344 = vld [vmem:[#allocation2 + $0x78] sm:$0xff]
        %v345 = vld [vmem:[#allocation2 + $0x80] sm:$0xff]
        %v346 = vld [vmem:[#allocation2 + $0x90] sm:$0xff]
        %v347 = vld [vmem:[#allocation2 + $0x98] sm:$0xff]
        %v348 = vld [vmem:[#allocation2 + $0xa8] sm:$0xff]
        %v349 = vld [vmem:[#allocation2 + $0xb0] sm:$0xff]
        %v350 = vld [vmem:[#allocation2 + $0xc0] sm:$0xff]
        %v351 = vld [vmem:[#allocation2 + $0xc8] sm:$0xff]
        %v352 = vld [vmem:[#allocation2 + $0xd8] sm:$0xff]
        %v353 = vld [vmem:[#allocation2 + $0xe0] sm:$0xff]
        %v354 = vld [vmem:[#allocation2 + $0xf0] sm:$0xff]
        %v355 = vld [vmem:[#allocation2 + $0xf8] sm:$0xff]
        %v356 = vld [vmem:[#allocation2 + $0x108] sm:$0xff]
        %v357 = vld [vmem:[#allocation2 + $0x110] sm:$0xff]
        %v358 = vld [vmem:[#allocation2 + $0x120] sm:$0xff]
        %v359 = vld [vmem:[#allocation2 + $0x128] sm:$0xff]
        %v360 = vld [vmem:[#allocation2 + $0x138] sm:$0xff]
        %v361 = vld [vmem:[#allocation2 + $0x140] sm:$0xff]
        %v362 = vld [vmem:[#allocation2 + $0x150] sm:$0xff]
        %v363 = vld [vmem:[#allocation2 + $0x158] sm:$0xff]
        %v364 = vld [vmem:[#allocation2 + $0x168] sm:$0xff]
        %v365 = vld [vmem:[#allocation2 + $0x170] sm:$0xff]
        %366 = vst [vmem:[#allocation3] sm:$0xff] %v334
        %367 = vst [vmem:[#allocation3 + $0x48] sm:$0xff] %v335
        %368 = vst [vmem:[#allocation3 + $0x90] sm:$0xff] %v336
        %369 = vst [vmem:[#allocation3 + $0xd8] sm:$0xff] %v337
        %370 = vst [vmem:[#allocation3 + $0x120] sm:$0xff] %v338
        %371 = vst [vmem:[#allocation3 + $0x168] sm:$0xff] %v339
        %372 = vst [vmem:[#allocation3 + $0x1b0] sm:$0xff] %v340
        %373 = vst [vmem:[#allocation3 + $0x1f8] sm:$0xff] %v341
        %374 = vst [vmem:[#allocation3 + $0x240] sm:$0xff] %v342
        %375 = vst [vmem:[#allocation3 + $0x288] sm:$0xff] %v343
        %376 = vst [vmem:[#allocation3 + $0x2d0] sm:$0xff] %v344
        %377 = vst [vmem:[#allocation3 + $0x318] sm:$0xff] %v345
        %378 = vst [vmem:[#allocation3 + $0x360] sm:$0xff] %v346
        %379 = vst [vmem:[#allocation3 + $0x3a8] sm:$0xff] %v347
        %380 = vst [vmem:[#allocation3 + $0x3f0] sm:$0xff] %v348
        %381 = vst [vmem:[#allocation3 + $0x438] sm:$0xff] %v349
        %382 = vst [vmem:[#allocation3 + $0x480] sm:$0xff] %v350
        %383 = vst [vmem:[#allocation3 + $0x4c8] sm:$0xff] %v351
        %384 = vst [vmem:[#allocation3 + $0x510] sm:$0xff] %v352
        %385 = vst [vmem:[#allocation3 + $0x558] sm:$0xff] %v353
        %386 = vst [vmem:[#allocation3 + $0x5a0] sm:$0xff] %v354
        %387 = vst [vmem:[#allocation3 + $0x5e8] sm:$0xff] %v355
        %388 = vst [vmem:[#allocation3 + $0x630] sm:$0xff] %v356
        %389 = vst [vmem:[#allocation3 + $0x678] sm:$0xff] %v357
        %390 = vst [vmem:[#allocation3 + $0x6c0] sm:$0xff] %v358
        %391 = vst [vmem:[#allocation3 + $0x708] sm:$0xff] %v359
        %392 = vst [vmem:[#allocation3 + $0x750] sm:$0xff] %v360
        %393 = vst [vmem:[#allocation3 + $0x798] sm:$0xff] %v361
        %394 = vst [vmem:[#allocation3 + $0x7e0] sm:$0xff] %v362
        %395 = vst [vmem:[#allocation3 + $0x828] sm:$0xff] %v363
        %396 = vst [vmem:[#allocation3 + $0x870] sm:$0xff] %v364
        %397 = vst [vmem:[#allocation3 + $0x8b8] sm:$0xff] %v365
        %v398 = vld [vmem:[#allocation2 + $0x1] sm:$0xff]
        %v399 = vld [vmem:[#allocation2 + $0x9] sm:$0xff]
        %v400 = vld [vmem:[#allocation2 + $0x19] sm:$0xff]
        %v401 = vld [vmem:[#allocation2 + $0x21] sm:$0xff]
        %v402 = vld [vmem:[#allocation2 + $0x31] sm:$0xff]
        %v403 = vld [vmem:[#allocation2 + $0x39] sm:$0xff]
        %v404 = vld [vmem:[#allocation2 + $0x49] sm:$0xff]
        %v405 = vld [vmem:[#allocation2 + $0x51] sm:$0xff]
        %v406 = vld [vmem:[#allocation2 + $0x61] sm:$0xff]
        %v407 = vld [vmem:[#allocation2 + $0x69] sm:$0xff]
        %v408 = vld [vmem:[#allocation2 + $0x79] sm:$0xff]
        %v409 = vld [vmem:[#allocation2 + $0x81] sm:$0xff]
        %v410 = vld [vmem:[#allocation2 + $0x91] sm:$0xff]
        %v411 = vld [vmem:[#allocation2 + $0x99] sm:$0xff]
        %v412 = vld [vmem:[#allocation2 + $0xa9] sm:$0xff]
        %v413 = vld [vmem:[#allocation2 + $0xb1] sm:$0xff]
        %v414 = vld [vmem:[#allocation2 + $0xc1] sm:$0xff]
        %v415 = vld [vmem:[#allocation2 + $0xc9] sm:$0xff]
        %v416 = vld [vmem:[#allocation2 + $0xd9] sm:$0xff]
        %v417 = vld [vmem:[#allocation2 + $0xe1] sm:$0xff]
        %v418 = vld [vmem:[#allocation2 + $0xf1] sm:$0xff]
        %v419 = vld [vmem:[#allocation2 + $0xf9] sm:$0xff]
        %v420 = vld [vmem:[#allocation2 + $0x109] sm:$0xff]
        %v421 = vld [vmem:[#allocation2 + $0x111] sm:$0xff]
        %v422 = vld [vmem:[#allocation2 + $0x121] sm:$0xff]
        %v423 = vld [vmem:[#allocation2 + $0x129] sm:$0xff]
        %v424 = vld [vmem:[#allocation2 + $0x139] sm:$0xff]
        %v425 = vld [vmem:[#allocation2 + $0x141] sm:$0xff]
        %v426 = vld [vmem:[#allocation2 + $0x151] sm:$0xff]
        %v427 = vld [vmem:[#allocation2 + $0x159] sm:$0xff]
        %v428 = vld [vmem:[#allocation2 + $0x169] sm:$0xff]
        %v429 = vld [vmem:[#allocation2 + $0x171] sm:$0xff]
        %430 = vst [vmem:[#allocation3 + $0x8] sm:$0xff] %v398
        %431 = vst [vmem:[#allocation3 + $0x50] sm:$0xff] %v399
        %432 = vst [vmem:[#allocation3 + $0x98] sm:$0xff] %v400
        %433 = vst [vmem:[#allocation3 + $0xe0] sm:$0xff] %v401
        %434 = vst [vmem:[#allocation3 + $0x128] sm:$0xff] %v402
        %435 = vst [vmem:[#allocation3 + $0x170] sm:$0xff] %v403
        %436 = vst [vmem:[#allocation3 + $0x1b8] sm:$0xff] %v404
        %437 = vst [vmem:[#allocation3 + $0x200] sm:$0xff] %v405
        %438 = vst [vmem:[#allocation3 + $0x248] sm:$0xff] %v406
        %439 = vst [vmem:[#allocation3 + $0x290] sm:$0xff] %v407
        %440 = vst [vmem:[#allocation3 + $0x2d8] sm:$0xff] %v408
        %441 = vst [vmem:[#allocation3 + $0x320] sm:$0xff] %v409
        %442 = vst [vmem:[#allocation3 + $0x368] sm:$0xff] %v410
        %443 = vst [vmem:[#allocation3 + $0x3b0] sm:$0xff] %v411
        %444 = vst [vmem:[#allocation3 + $0x3f8] sm:$0xff] %v412
        %445 = vst [vmem:[#allocation3 + $0x440] sm:$0xff] %v413
        %446 = vst [vmem:[#allocation3 + $0x488] sm:$0xff] %v414
        %447 = vst [vmem:[#allocation3 + $0x4d0] sm:$0xff] %v415
        %448 = vst [vmem:[#allocation3 + $0x518] sm:$0xff] %v416
        %449 = vst [vmem:[#allocation3 + $0x560] sm:$0xff] %v417
        %450 = vst [vmem:[#allocation3 + $0x5a8] sm:$0xff] %v418
        %451 = vst [vmem:[#allocation3 + $0x5f0] sm:$0xff] %v419
        %452 = vst [vmem:[#allocation3 + $0x638] sm:$0xff] %v420
        %453 = vst [vmem:[#allocation3 + $0x680] sm:$0xff] %v421
        %454 = vst [vmem:[#allocation3 + $0x6c8] sm:$0xff] %v422
        %455 = vst [vmem:[#allocation3 + $0x710] sm:$0xff] %v423
        %456 = vst [vmem:[#allocation3 + $0x758] sm:$0xff] %v424
        %457 = vst [vmem:[#allocation3 + $0x7a0] sm:$0xff] %v425
        %458 = vst [vmem:[#allocation3 + $0x7e8] sm:$0xff] %v426
        %459 = vst [vmem:[#allocation3 + $0x830] sm:$0xff] %v427
        %460 = vst [vmem:[#allocation3 + $0x878] sm:$0xff] %v428
        %461 = vst [vmem:[#allocation3 + $0x8c0] sm:$0xff] %v429
        %v462 = vld [vmem:[#allocation2 + $0x2] sm:$0xff]
        %v463 = vld [vmem:[#allocation2 + $0xa] sm:$0xff]
        %v464 = vld [vmem:[#allocation2 + $0x1a] sm:$0xff]
        %v465 = vld [vmem:[#allocation2 + $0x22] sm:$0xff]
        %v466 = vld [vmem:[#allocation2 + $0x32] sm:$0xff]
        %v467 = vld [vmem:[#allocation2 + $0x3a] sm:$0xff]
        %v468 = vld [vmem:[#allocation2 + $0x4a] sm:$0xff]
        %v469 = vld [vmem:[#allocation2 + $0x52] sm:$0xff]
        %v470 = vld [vmem:[#allocation2 + $0x62] sm:$0xff]
        %v471 = vld [vmem:[#allocation2 + $0x6a] sm:$0xff]
        %v472 = vld [vmem:[#allocation2 + $0x7a] sm:$0xff]
        %v473 = vld [vmem:[#allocation2 + $0x82] sm:$0xff]
        %v474 = vld [vmem:[#allocation2 + $0x92] sm:$0xff]
        %v475 = vld [vmem:[#allocation2 + $0x9a] sm:$0xff]
        %v476 = vld [vmem:[#allocation2 + $0xaa] sm:$0xff]
        %v477 = vld [vmem:[#allocation2 + $0xb2] sm:$0xff]
        %v478 = vld [vmem:[#allocation2 + $0xc2] sm:$0xff]
        %v479 = vld [vmem:[#allocation2 + $0xca] sm:$0xff]
        %v480 = vld [vmem:[#allocation2 + $0xda] sm:$0xff]
        %v481 = vld [vmem:[#allocation2 + $0xe2] sm:$0xff]
        %v482 = vld [vmem:[#allocation2 + $0xf2] sm:$0xff]
        %v483 = vld [vmem:[#allocation2 + $0xfa] sm:$0xff]
        %v484 = vld [vmem:[#allocation2 + $0x10a] sm:$0xff]
        %v485 = vld [vmem:[#allocation2 + $0x112] sm:$0xff]
        %v486 = vld [vmem:[#allocation2 + $0x122] sm:$0xff]
        %v487 = vld [vmem:[#allocation2 + $0x12a] sm:$0xff]
        %v488 = vld [vmem:[#allocation2 + $0x13a] sm:$0xff]
        %v489 = vld [vmem:[#allocation2 + $0x142] sm:$0xff]
        %v490 = vld [vmem:[#allocation2 + $0x152] sm:$0xff]
        %v491 = vld [vmem:[#allocation2 + $0x15a] sm:$0xff]
        %v492 = vld [vmem:[#allocation2 + $0x16a] sm:$0xff]
        %v493 = vld [vmem:[#allocation2 + $0x172] sm:$0xff]
        %494 = vst [vmem:[#allocation3 + $0x10] sm:$0xff] %v462
        %495 = vst [vmem:[#allocation3 + $0x58] sm:$0xff] %v463
        %496 = vst [vmem:[#allocation3 + $0xa0] sm:$0xff] %v464
        %497 = vst [vmem:[#allocation3 + $0xe8] sm:$0xff] %v465
        %498 = vst [vmem:[#allocation3 + $0x130] sm:$0xff] %v466
        %499 = vst [vmem:[#allocation3 + $0x178] sm:$0xff] %v467
        %500 = vst [vmem:[#allocation3 + $0x1c0] sm:$0xff] %v468
        %501 = vst [vmem:[#allocation3 + $0x208] sm:$0xff] %v469
        %502 = vst [vmem:[#allocation3 + $0x250] sm:$0xff] %v470
        %503 = vst [vmem:[#allocation3 + $0x298] sm:$0xff] %v471
        %504 = vst [vmem:[#allocation3 + $0x2e0] sm:$0xff] %v472
        %505 = vst [vmem:[#allocation3 + $0x328] sm:$0xff] %v473
        %506 = vst [vmem:[#allocation3 + $0x370] sm:$0xff] %v474
        %507 = vst [vmem:[#allocation3 + $0x3b8] sm:$0xff] %v475
        %508 = vst [vmem:[#allocation3 + $0x400] sm:$0xff] %v476
        %509 = vst [vmem:[#allocation3 + $0x448] sm:$0xff] %v477
        %510 = vst [vmem:[#allocation3 + $0x490] sm:$0xff] %v478
        %511 = vst [vmem:[#allocation3 + $0x4d8] sm:$0xff] %v479
        %512 = vst [vmem:[#allocation3 + $0x520] sm:$0xff] %v480
        %513 = vst [vmem:[#allocation3 + $0x568] sm:$0xff] %v481
        %514 = vst [vmem:[#allocation3 + $0x5b0] sm:$0xff] %v482
        %515 = vst [vmem:[#allocation3 + $0x5f8] sm:$0xff] %v483
        %516 = vst [vmem:[#allocation3 + $0x640] sm:$0xff] %v484
        %517 = vst [vmem:[#allocation3 + $0x688] sm:$0xff] %v485
        %518 = vst [vmem:[#allocation3 + $0x6d0] sm:$0xff] %v486
        %519 = vst [vmem:[#allocation3 + $0x718] sm:$0xff] %v487
        %520 = vst [vmem:[#allocation3 + $0x760] sm:$0xff] %v488
        %521 = vst [vmem:[#allocation3 + $0x7a8] sm:$0xff] %v489
        %522 = vst [vmem:[#allocation3 + $0x7f0] sm:$0xff] %v490
        %523 = vst [vmem:[#allocation3 + $0x838] sm:$0xff] %v491
        %524 = vst [vmem:[#allocation3 + $0x880] sm:$0xff] %v492
        %525 = vst [vmem:[#allocation3 + $0x8c8] sm:$0xff] %v493
        %v526 = vld [vmem:[%s301] sm:$0xff]
        %v527 = vld [vmem:[%s301 + $0x8] sm:$0xff]
        %v528 = vld [vmem:[%s301 + $0x18] sm:$0xff]
        %v529 = vld [vmem:[%s301 + $0x20] sm:$0xff]
        %v530 = vld [vmem:[%s301 + $0x30] sm:$0xff]
        %v531 = vld [vmem:[%s301 + $0x38] sm:$0xff]
        %v532 = vld [vmem:[%s301 + $0x48] sm:$0xff]
        %v533 = vld [vmem:[%s301 + $0x50] sm:$0xff]
        %v534 = vld [vmem:[%s301 + $0x60] sm:$0xff]
        %v535 = vld [vmem:[%s301 + $0x68] sm:$0xff]
        %v536 = vld [vmem:[%s301 + $0x78] sm:$0xff]
        %v537 = vld [vmem:[%s301 + $0x80] sm:$0xff]
        %v538 = vld [vmem:[%s301 + $0x90] sm:$0xff]
        %v539 = vld [vmem:[%s301 + $0x98] sm:$0xff]
        %v540 = vld [vmem:[%s301 + $0xa8] sm:$0xff]
        %v541 = vld [vmem:[%s301 + $0xb0] sm:$0xff]
        %v542 = vld [vmem:[%s301 + $0xc0] sm:$0xff]
        %v543 = vld [vmem:[%s301 + $0xc8] sm:$0xff]
        %v544 = vld [vmem:[%s301 + $0xd8] sm:$0xff]
        %v545 = vld [vmem:[%s301 + $0xe0] sm:$0xff]
        %v546 = vld [vmem:[%s301 + $0xf0] sm:$0xff]
        %v547 = vld [vmem:[%s301 + $0xf8] sm:$0xff]
        %v548 = vld [vmem:[%s301 + $0x108] sm:$0xff]
        %v549 = vld [vmem:[%s301 + $0x110] sm:$0xff]
        %v550 = vld [vmem:[%s301 + $0x120] sm:$0xff]
        %v551 = vld [vmem:[%s301 + $0x128] sm:$0xff]
        %v552 = vld [vmem:[%s301 + $0x138] sm:$0xff]
        %v553 = vld [vmem:[%s301 + $0x140] sm:$0xff]
        %v554 = vld [vmem:[%s301 + $0x150] sm:$0xff]
        %v555 = vld [vmem:[%s301 + $0x158] sm:$0xff]
        %v556 = vld [vmem:[%s301 + $0x168] sm:$0xff]
        %v557 = vld [vmem:[%s301 + $0x170] sm:$0xff]
        %558 = vst [vmem:[#allocation3 + $0x18] sm:$0xff] %v526
        %559 = vst [vmem:[#allocation3 + $0x60] sm:$0xff] %v527
        %560 = vst [vmem:[#allocation3 + $0xa8] sm:$0xff] %v528
        %561 = vst [vmem:[#allocation3 + $0xf0] sm:$0xff] %v529
        %562 = vst [vmem:[#allocation3 + $0x138] sm:$0xff] %v530
        %563 = vst [vmem:[#allocation3 + $0x180] sm:$0xff] %v531
        %564 = vst [vmem:[#allocation3 + $0x1c8] sm:$0xff] %v532
        %565 = vst [vmem:[#allocation3 + $0x210] sm:$0xff] %v533
        %566 = vst [vmem:[#allocation3 + $0x258] sm:$0xff] %v534
        %567 = vst [vmem:[#allocation3 + $0x2a0] sm:$0xff] %v535
        %568 = vst [vmem:[#allocation3 + $0x2e8] sm:$0xff] %v536
        %569 = vst [vmem:[#allocation3 + $0x330] sm:$0xff] %v537
        %570 = vst [vmem:[#allocation3 + $0x378] sm:$0xff] %v538
        %571 = vst [vmem:[#allocation3 + $0x3c0] sm:$0xff] %v539
        %572 = vst [vmem:[#allocation3 + $0x408] sm:$0xff] %v540
        %573 = vst [vmem:[#allocation3 + $0x450] sm:$0xff] %v541
        %574 = vst [vmem:[#allocation3 + $0x498] sm:$0xff] %v542
        %575 = vst [vmem:[#allocation3 + $0x4e0] sm:$0xff] %v543
        %576 = vst [vmem:[#allocation3 + $0x528] sm:$0xff] %v544
        %577 = vst [vmem:[#allocation3 + $0x570] sm:$0xff] %v545
        %578 = vst [vmem:[#allocation3 + $0x5b8] sm:$0xff] %v546
        %579 = vst [vmem:[#allocation3 + $0x600] sm:$0xff] %v547
        %580 = vst [vmem:[#allocation3 + $0x648] sm:$0xff] %v548
        %581 = vst [vmem:[#allocation3 + $0x690] sm:$0xff] %v549
        %582 = vst [vmem:[#allocation3 + $0x6d8] sm:$0xff] %v550
        %583 = vst [vmem:[#allocation3 + $0x720] sm:$0xff] %v551
        %584 = vst [vmem:[#allocation3 + $0x768] sm:$0xff] %v552
        %585 = vst [vmem:[#allocation3 + $0x7b0] sm:$0xff] %v553
        %586 = vst [vmem:[#allocation3 + $0x7f8] sm:$0xff] %v554
        %587 = vst [vmem:[#allocation3 + $0x840] sm:$0xff] %v555
        %588 = vst [vmem:[#allocation3 + $0x888] sm:$0xff] %v556
        %589 = vst [vmem:[#allocation3 + $0x8d0] sm:$0xff] %v557
        %v590 = vld [vmem:[%s301 + $0x1] sm:$0xff]
        %v591 = vld [vmem:[%s301 + $0x9] sm:$0xff]
        %v592 = vld [vmem:[%s301 + $0x19] sm:$0xff]
        %v593 = vld [vmem:[%s301 + $0x21] sm:$0xff]
        %v594 = vld [vmem:[%s301 + $0x31] sm:$0xff]
        %v595 = vld [vmem:[%s301 + $0x39] sm:$0xff]
        %v596 = vld [vmem:[%s301 + $0x49] sm:$0xff]
        %v597 = vld [vmem:[%s301 + $0x51] sm:$0xff]
        %v598 = vld [vmem:[%s301 + $0x61] sm:$0xff]
        %v599 = vld [vmem:[%s301 + $0x69] sm:$0xff]
        %v600 = vld [vmem:[%s301 + $0x79] sm:$0xff]
        %v601 = vld [vmem:[%s301 + $0x81] sm:$0xff]
        %v602 = vld [vmem:[%s301 + $0x91] sm:$0xff]
        %v603 = vld [vmem:[%s301 + $0x99] sm:$0xff]
        %v604 = vld [vmem:[%s301 + $0xa9] sm:$0xff]
        %v605 = vld [vmem:[%s301 + $0xb1] sm:$0xff]
        %v606 = vld [vmem:[%s301 + $0xc1] sm:$0xff]
        %v607 = vld [vmem:[%s301 + $0xc9] sm:$0xff]
        %v608 = vld [vmem:[%s301 + $0xd9] sm:$0xff]
        %v609 = vld [vmem:[%s301 + $0xe1] sm:$0xff]
        %v610 = vld [vmem:[%s301 + $0xf1] sm:$0xff]
        %v611 = vld [vmem:[%s301 + $0xf9] sm:$0xff]
        %v612 = vld [vmem:[%s301 + $0x109] sm:$0xff]
        %v613 = vld [vmem:[%s301 + $0x111] sm:$0xff]
        %v614 = vld [vmem:[%s301 + $0x121] sm:$0xff]
        %v615 = vld [vmem:[%s301 + $0x129] sm:$0xff]
        %v616 = vld [vmem:[%s301 + $0x139] sm:$0xff]
        %v617 = vld [vmem:[%s301 + $0x141] sm:$0xff]
        %v618 = vld [vmem:[%s301 + $0x151] sm:$0xff]
        %v619 = vld [vmem:[%s301 + $0x159] sm:$0xff]
        %v620 = vld [vmem:[%s301 + $0x169] sm:$0xff]
        %v621 = vld [vmem:[%s301 + $0x171] sm:$0xff]
        %622 = vst [vmem:[#allocation3 + $0x20] sm:$0xff] %v590
        %623 = vst [vmem:[#allocation3 + $0x68] sm:$0xff] %v591
        %624 = vst [vmem:[#allocation3 + $0xb0] sm:$0xff] %v592
        %625 = vst [vmem:[#allocation3 + $0xf8] sm:$0xff] %v593
        %626 = vst [vmem:[#allocation3 + $0x140] sm:$0xff] %v594
        %627 = vst [vmem:[#allocation3 + $0x188] sm:$0xff] %v595
        %628 = vst [vmem:[#allocation3 + $0x1d0] sm:$0xff] %v596
        %629 = vst [vmem:[#allocation3 + $0x218] sm:$0xff] %v597
        %630 = vst [vmem:[#allocation3 + $0x260] sm:$0xff] %v598
        %631 = vst [vmem:[#allocation3 + $0x2a8] sm:$0xff] %v599
        %632 = vst [vmem:[#allocation3 + $0x2f0] sm:$0xff] %v600
        %633 = vst [vmem:[#allocation3 + $0x338] sm:$0xff] %v601
        %634 = vst [vmem:[#allocation3 + $0x380] sm:$0xff] %v602
        %635 = vst [vmem:[#allocation3 + $0x3c8] sm:$0xff] %v603
        %636 = vst [vmem:[#allocation3 + $0x410] sm:$0xff] %v604
        %637 = vst [vmem:[#allocation3 + $0x458] sm:$0xff] %v605
        %638 = vst [vmem:[#allocation3 + $0x4a0] sm:$0xff] %v606
        %639 = vst [vmem:[#allocation3 + $0x4e8] sm:$0xff] %v607
        %640 = vst [vmem:[#allocation3 + $0x530] sm:$0xff] %v608
        %641 = vst [vmem:[#allocation3 + $0x578] sm:$0xff] %v609
        %642 = vst [vmem:[#allocation3 + $0x5c0] sm:$0xff] %v610
        %643 = vst [vmem:[#allocation3 + $0x608] sm:$0xff] %v611
        %644 = vst [vmem:[#allocation3 + $0x650] sm:$0xff] %v612
        %645 = vst [vmem:[#allocation3 + $0x698] sm:$0xff] %v613
        %646 = vst [vmem:[#allocation3 + $0x6e0] sm:$0xff] %v614
        %647 = vst [vmem:[#allocation3 + $0x728] sm:$0xff] %v615
        %648 = vst [vmem:[#allocation3 + $0x770] sm:$0xff] %v616
        %649 = vst [vmem:[#allocation3 + $0x7b8] sm:$0xff] %v617
        %650 = vst [vmem:[#allocation3 + $0x800] sm:$0xff] %v618
        %651 = vst [vmem:[#allocation3 + $0x848] sm:$0xff] %v619
        %652 = vst [vmem:[#allocation3 + $0x890] sm:$0xff] %v620
        %653 = vst [vmem:[#allocation3 + $0x8d8] sm:$0xff] %v621
        %v654 = vld [vmem:[%s301 + $0x2] sm:$0xff]
        %v655 = vld [vmem:[%s301 + $0xa] sm:$0xff]
        %v656 = vld [vmem:[%s301 + $0x1a] sm:$0xff]
        %v657 = vld [vmem:[%s301 + $0x22] sm:$0xff]
        %v658 = vld [vmem:[%s301 + $0x32] sm:$0xff]
        %v659 = vld [vmem:[%s301 + $0x3a] sm:$0xff]
        %v660 = vld [vmem:[%s301 + $0x4a] sm:$0xff]
        %v661 = vld [vmem:[%s301 + $0x52] sm:$0xff]
        %v662 = vld [vmem:[%s301 + $0x62] sm:$0xff]
        %v663 = vld [vmem:[%s301 + $0x6a] sm:$0xff]
        %v664 = vld [vmem:[%s301 + $0x7a] sm:$0xff]
        %v665 = vld [vmem:[%s301 + $0x82] sm:$0xff]
        %v666 = vld [vmem:[%s301 + $0x92] sm:$0xff]
        %v667 = vld [vmem:[%s301 + $0x9a] sm:$0xff]
        %v668 = vld [vmem:[%s301 + $0xaa] sm:$0xff]
        %v669 = vld [vmem:[%s301 + $0xb2] sm:$0xff]
        %v670 = vld [vmem:[%s301 + $0xc2] sm:$0xff]
        %v671 = vld [vmem:[%s301 + $0xca] sm:$0xff]
        %v672 = vld [vmem:[%s301 + $0xda] sm:$0xff]
        %v673 = vld [vmem:[%s301 + $0xe2] sm:$0xff]
        %v674 = vld [vmem:[%s301 + $0xf2] sm:$0xff]
        %v675 = vld [vmem:[%s301 + $0xfa] sm:$0xff]
        %v676 = vld [vmem:[%s301 + $0x10a] sm:$0xff]
        %v677 = vld [vmem:[%s301 + $0x112] sm:$0xff]
        %v678 = vld [vmem:[%s301 + $0x122] sm:$0xff]
        %v679 = vld [vmem:[%s301 + $0x12a] sm:$0xff]
        %v680 = vld [vmem:[%s301 + $0x13a] sm:$0xff]
        %v681 = vld [vmem:[%s301 + $0x142] sm:$0xff]
        %v682 = vld [vmem:[%s301 + $0x152] sm:$0xff]
        %v683 = vld [vmem:[%s301 + $0x15a] sm:$0xff]
        %v684 = vld [vmem:[%s301 + $0x16a] sm:$0xff]
        %v685 = vld [vmem:[%s301 + $0x172] sm:$0xff]
        %686 = vst [vmem:[#allocation3 + $0x28] sm:$0xff] %v654
        %687 = vst [vmem:[#allocation3 + $0x70] sm:$0xff] %v655
        %688 = vst [vmem:[#allocation3 + $0xb8] sm:$0xff] %v656
        %689 = vst [vmem:[#allocation3 + $0x100] sm:$0xff] %v657
        %690 = vst [vmem:[#allocation3 + $0x148] sm:$0xff] %v658
        %691 = vst [vmem:[#allocation3 + $0x190] sm:$0xff] %v659
        %692 = vst [vmem:[#allocation3 + $0x1d8] sm:$0xff] %v660
        %693 = vst [vmem:[#allocation3 + $0x220] sm:$0xff] %v661
        %694 = vst [vmem:[#allocation3 + $0x268] sm:$0xff] %v662
        %695 = vst [vmem:[#allocation3 + $0x2b0] sm:$0xff] %v663
        %696 = vst [vmem:[#allocation3 + $0x2f8] sm:$0xff] %v664
        %697 = vst [vmem:[#allocation3 + $0x340] sm:$0xff] %v665
        %698 = vst [vmem:[#allocation3 + $0x388] sm:$0xff] %v666
        %699 = vst [vmem:[#allocation3 + $0x3d0] sm:$0xff] %v667
        %700 = vst [vmem:[#allocation3 + $0x418] sm:$0xff] %v668
        %701 = vst [vmem:[#allocation3 + $0x460] sm:$0xff] %v669
        %702 = vst [vmem:[#allocation3 + $0x4a8] sm:$0xff] %v670
        %703 = vst [vmem:[#allocation3 + $0x4f0] sm:$0xff] %v671
        %704 = vst [vmem:[#allocation3 + $0x538] sm:$0xff] %v672
        %705 = vst [vmem:[#allocation3 + $0x580] sm:$0xff] %v673
        %706 = vst [vmem:[#allocation3 + $0x5c8] sm:$0xff] %v674
        %707 = vst [vmem:[#allocation3 + $0x610] sm:$0xff] %v675
        %708 = vst [vmem:[#allocation3 + $0x658] sm:$0xff] %v676
        %709 = vst [vmem:[#allocation3 + $0x6a0] sm:$0xff] %v677
        %710 = vst [vmem:[#allocation3 + $0x6e8] sm:$0xff] %v678
        %711 = vst [vmem:[#allocation3 + $0x730] sm:$0xff] %v679
        %712 = vst [vmem:[#allocation3 + $0x778] sm:$0xff] %v680
        %713 = vst [vmem:[#allocation3 + $0x7c0] sm:$0xff] %v681
        %714 = vst [vmem:[#allocation3 + $0x808] sm:$0xff] %v682
        %715 = vst [vmem:[#allocation3 + $0x850] sm:$0xff] %v683
        %716 = vst [vmem:[#allocation3 + $0x898] sm:$0xff] %v684
        %717 = vst [vmem:[#allocation3 + $0x8e0] sm:$0xff] %v685
        %s718 = scalar_lea.vmem [#allocation2], 48
        %v719 = vld [vmem:[%s718] sm:$0xff]
        %v720 = vld [vmem:[%s718 + $0x8] sm:$0xff]
        %v721 = vld [vmem:[%s718 + $0x18] sm:$0xff]
        %v722 = vld [vmem:[%s718 + $0x20] sm:$0xff]
        %v723 = vld [vmem:[%s718 + $0x30] sm:$0xff]
        %v724 = vld [vmem:[%s718 + $0x38] sm:$0xff]
        %v725 = vld [vmem:[%s718 + $0x48] sm:$0xff]
        %v726 = vld [vmem:[%s718 + $0x50] sm:$0xff]
        %v727 = vld [vmem:[%s718 + $0x60] sm:$0xff]
        %v728 = vld [vmem:[%s718 + $0x68] sm:$0xff]
        %v729 = vld [vmem:[%s718 + $0x78] sm:$0xff]
        %v730 = vld [vmem:[%s718 + $0x80] sm:$0xff]
        %v731 = vld [vmem:[%s718 + $0x90] sm:$0xff]
        %v732 = vld [vmem:[%s718 + $0x98] sm:$0xff]
        %v733 = vld [vmem:[%s718 + $0xa8] sm:$0xff]
        %v734 = vld [vmem:[%s718 + $0xb0] sm:$0xff]
        %v735 = vld [vmem:[%s718 + $0xc0] sm:$0xff]
        %v736 = vld [vmem:[%s718 + $0xc8] sm:$0xff]
        %v737 = vld [vmem:[%s718 + $0xd8] sm:$0xff]
        %v738 = vld [vmem:[%s718 + $0xe0] sm:$0xff]
        %v739 = vld [vmem:[%s718 + $0xf0] sm:$0xff]
        %v740 = vld [vmem:[%s718 + $0xf8] sm:$0xff]
        %v741 = vld [vmem:[%s718 + $0x108] sm:$0xff]
        %v742 = vld [vmem:[%s718 + $0x110] sm:$0xff]
        %v743 = vld [vmem:[%s718 + $0x120] sm:$0xff]
        %v744 = vld [vmem:[%s718 + $0x128] sm:$0xff]
        %v745 = vld [vmem:[%s718 + $0x138] sm:$0xff]
        %v746 = vld [vmem:[%s718 + $0x140] sm:$0xff]
        %v747 = vld [vmem:[%s718 + $0x150] sm:$0xff]
        %v748 = vld [vmem:[%s718 + $0x158] sm:$0xff]
        %v749 = vld [vmem:[%s718 + $0x168] sm:$0xff]
        %v750 = vld [vmem:[%s718 + $0x170] sm:$0xff]
        %751 = vst [vmem:[#allocation3 + $0x30] sm:$0xff] %v719
        %752 = vst [vmem:[#allocation3 + $0x78] sm:$0xff] %v720
        %753 = vst [vmem:[#allocation3 + $0xc0] sm:$0xff] %v721
        %754 = vst [vmem:[#allocation3 + $0x108] sm:$0xff] %v722
        %755 = vst [vmem:[#allocation3 + $0x150] sm:$0xff] %v723
        %756 = vst [vmem:[#allocation3 + $0x198] sm:$0xff] %v724
        %757 = vst [vmem:[#allocation3 + $0x1e0] sm:$0xff] %v725
        %758 = vst [vmem:[#allocation3 + $0x228] sm:$0xff] %v726
        %759 = vst [vmem:[#allocation3 + $0x270] sm:$0xff] %v727
        %760 = vst [vmem:[#allocation3 + $0x2b8] sm:$0xff] %v728
        %761 = vst [vmem:[#allocation3 + $0x300] sm:$0xff] %v729
        %762 = vst [vmem:[#allocation3 + $0x348] sm:$0xff] %v730
        %763 = vst [vmem:[#allocation3 + $0x390] sm:$0xff] %v731
        %764 = vst [vmem:[#allocation3 + $0x3d8] sm:$0xff] %v732
        %765 = vst [vmem:[#allocation3 + $0x420] sm:$0xff] %v733
        %766 = vst [vmem:[#allocation3 + $0x468] sm:$0xff] %v734
        %767 = vst [vmem:[#allocation3 + $0x4b0] sm:$0xff] %v735
        %768 = vst [vmem:[#allocation3 + $0x4f8] sm:$0xff] %v736
        %769 = vst [vmem:[#allocation3 + $0x540] sm:$0xff] %v737
        %770 = vst [vmem:[#allocation3 + $0x588] sm:$0xff] %v738
        %771 = vst [vmem:[#allocation3 + $0x5d0] sm:$0xff] %v739
        %772 = vst [vmem:[#allocation3 + $0x618] sm:$0xff] %v740
        %773 = vst [vmem:[#allocation3 + $0x660] sm:$0xff] %v741
        %774 = vst [vmem:[#allocation3 + $0x6a8] sm:$0xff] %v742
        %775 = vst [vmem:[#allocation3 + $0x6f0] sm:$0xff] %v743
        %776 = vst [vmem:[#allocation3 + $0x738] sm:$0xff] %v744
        %777 = vst [vmem:[#allocation3 + $0x780] sm:$0xff] %v745
        %778 = vst [vmem:[#allocation3 + $0x7c8] sm:$0xff] %v746
        %779 = vst [vmem:[#allocation3 + $0x810] sm:$0xff] %v747
        %780 = vst [vmem:[#allocation3 + $0x858] sm:$0xff] %v748
        %781 = vst [vmem:[#allocation3 + $0x8a0] sm:$0xff] %v749
        %782 = vst [vmem:[#allocation3 + $0x8e8] sm:$0xff] %v750
        %v783 = vld [vmem:[%s718 + $0x1] sm:$0xff]
        %v784 = vld [vmem:[%s718 + $0x9] sm:$0xff]
        %v785 = vld [vmem:[%s718 + $0x19] sm:$0xff]
        %v786 = vld [vmem:[%s718 + $0x21] sm:$0xff]
        %v787 = vld [vmem:[%s718 + $0x31] sm:$0xff]
        %v788 = vld [vmem:[%s718 + $0x39] sm:$0xff]
        %v789 = vld [vmem:[%s718 + $0x49] sm:$0xff]
        %v790 = vld [vmem:[%s718 + $0x51] sm:$0xff]
        %v791 = vld [vmem:[%s718 + $0x61] sm:$0xff]
        %v792 = vld [vmem:[%s718 + $0x69] sm:$0xff]
        %v793 = vld [vmem:[%s718 + $0x79] sm:$0xff]
        %v794 = vld [vmem:[%s718 + $0x81] sm:$0xff]
        %v795 = vld [vmem:[%s718 + $0x91] sm:$0xff]
        %v796 = vld [vmem:[%s718 + $0x99] sm:$0xff]
        %v797 = vld [vmem:[%s718 + $0xa9] sm:$0xff]
        %v798 = vld [vmem:[%s718 + $0xb1] sm:$0xff]
        %v799 = vld [vmem:[%s718 + $0xc1] sm:$0xff]
        %v800 = vld [vmem:[%s718 + $0xc9] sm:$0xff]
        %v801 = vld [vmem:[%s718 + $0xd9] sm:$0xff]
        %v802 = vld [vmem:[%s718 + $0xe1] sm:$0xff]
        %v803 = vld [vmem:[%s718 + $0xf1] sm:$0xff]
        %v804 = vld [vmem:[%s718 + $0xf9] sm:$0xff]
        %v805 = vld [vmem:[%s718 + $0x109] sm:$0xff]
        %v806 = vld [vmem:[%s718 + $0x111] sm:$0xff]
        %v807 = vld [vmem:[%s718 + $0x121] sm:$0xff]
        %v808 = vld [vmem:[%s718 + $0x129] sm:$0xff]
        %v809 = vld [vmem:[%s718 + $0x139] sm:$0xff]
        %v810 = vld [vmem:[%s718 + $0x141] sm:$0xff]
        %v811 = vld [vmem:[%s718 + $0x151] sm:$0xff]
        %v812 = vld [vmem:[%s718 + $0x159] sm:$0xff]
        %v813 = vld [vmem:[%s718 + $0x169] sm:$0xff]
        %v814 = vld [vmem:[%s718 + $0x171] sm:$0xff]
        %815 = vst [vmem:[#allocation3 + $0x38] sm:$0xff] %v783
        %816 = vst [vmem:[#allocation3 + $0x80] sm:$0xff] %v784
        %817 = vst [vmem:[#allocation3 + $0xc8] sm:$0xff] %v785
        %818 = vst [vmem:[#allocation3 + $0x110] sm:$0xff] %v786
        %819 = vst [vmem:[#allocation3 + $0x158] sm:$0xff] %v787
        %820 = vst [vmem:[#allocation3 + $0x1a0] sm:$0xff] %v788
        %821 = vst [vmem:[#allocation3 + $0x1e8] sm:$0xff] %v789
        %822 = vst [vmem:[#allocation3 + $0x230] sm:$0xff] %v790
        %823 = vst [vmem:[#allocation3 + $0x278] sm:$0xff] %v791
        %824 = vst [vmem:[#allocation3 + $0x2c0] sm:$0xff] %v792
        %825 = vst [vmem:[#allocation3 + $0x308] sm:$0xff] %v793
        %826 = vst [vmem:[#allocation3 + $0x350] sm:$0xff] %v794
        %827 = vst [vmem:[#allocation3 + $0x398] sm:$0xff] %v795
        %828 = vst [vmem:[#allocation3 + $0x3e0] sm:$0xff] %v796
        %829 = vst [vmem:[#allocation3 + $0x428] sm:$0xff] %v797
        %830 = vst [vmem:[#allocation3 + $0x470] sm:$0xff] %v798
        %831 = vst [vmem:[#allocation3 + $0x4b8] sm:$0xff] %v799
        %832 = vst [vmem:[#allocation3 + $0x500] sm:$0xff] %v800
        %833 = vst [vmem:[#allocation3 + $0x548] sm:$0xff] %v801
        %834 = vst [vmem:[#allocation3 + $0x590] sm:$0xff] %v802
        %835 = vst [vmem:[#allocation3 + $0x5d8] sm:$0xff] %v803
        %836 = vst [vmem:[#allocation3 + $0x620] sm:$0xff] %v804
        %837 = vst [vmem:[#allocation3 + $0x668] sm:$0xff] %v805
        %838 = vst [vmem:[#allocation3 + $0x6b0] sm:$0xff] %v806
        %839 = vst [vmem:[#allocation3 + $0x6f8] sm:$0xff] %v807
        %840 = vst [vmem:[#allocation3 + $0x740] sm:$0xff] %v808
        %841 = vst [vmem:[#allocation3 + $0x788] sm:$0xff] %v809
        %842 = vst [vmem:[#allocation3 + $0x7d0] sm:$0xff] %v810
        %843 = vst [vmem:[#allocation3 + $0x818] sm:$0xff] %v811
        %844 = vst [vmem:[#allocation3 + $0x860] sm:$0xff] %v812
        %845 = vst [vmem:[#allocation3 + $0x8a8] sm:$0xff] %v813
        %846 = vst [vmem:[#allocation3 + $0x8f0] sm:$0xff] %v814
        %v847 = vld [vmem:[%s718 + $0x2] sm:$0xff]
        %v848 = vld [vmem:[%s718 + $0xa] sm:$0xff]
        %v849 = vld [vmem:[%s718 + $0x1a] sm:$0xff]
        %v850 = vld [vmem:[%s718 + $0x22] sm:$0xff]
        %v851 = vld [vmem:[%s718 + $0x32] sm:$0xff]
        %v852 = vld [vmem:[%s718 + $0x3a] sm:$0xff]
        %v853 = vld [vmem:[%s718 + $0x4a] sm:$0xff]
        %v854 = vld [vmem:[%s718 + $0x52] sm:$0xff]
        %v855 = vld [vmem:[%s718 + $0x62] sm:$0xff]
        %v856 = vld [vmem:[%s718 + $0x6a] sm:$0xff]
        %v857 = vld [vmem:[%s718 + $0x7a] sm:$0xff]
        %v858 = vld [vmem:[%s718 + $0x82] sm:$0xff]
        %v859 = vld [vmem:[%s718 + $0x92] sm:$0xff]
        %v860 = vld [vmem:[%s718 + $0x9a] sm:$0xff]
        %v861 = vld [vmem:[%s718 + $0xaa] sm:$0xff]
        %v862 = vld [vmem:[%s718 + $0xb2] sm:$0xff]
        %v863 = vld [vmem:[%s718 + $0xc2] sm:$0xff]
        %v864 = vld [vmem:[%s718 + $0xca] sm:$0xff]
        %v865 = vld [vmem:[%s718 + $0xda] sm:$0xff]
        %v866 = vld [vmem:[%s718 + $0xe2] sm:$0xff]
        %v867 = vld [vmem:[%s718 + $0xf2] sm:$0xff]
        %v868 = vld [vmem:[%s718 + $0xfa] sm:$0xff]
        %v869 = vld [vmem:[%s718 + $0x10a] sm:$0xff]
        %v870 = vld [vmem:[%s718 + $0x112] sm:$0xff]
        %v871 = vld [vmem:[%s718 + $0x122] sm:$0xff]
        %v872 = vld [vmem:[%s718 + $0x12a] sm:$0xff]
        %v873 = vld [vmem:[%s718 + $0x13a] sm:$0xff]
        %v874 = vld [vmem:[%s718 + $0x142] sm:$0xff]
        %v875 = vld [vmem:[%s718 + $0x152] sm:$0xff]
        %v876 = vld [vmem:[%s718 + $0x15a] sm:$0xff]
        %v877 = vld [vmem:[%s718 + $0x16a] sm:$0xff]
        %v878 = vld [vmem:[%s718 + $0x172] sm:$0xff]
        %879 = vst [vmem:[#allocation3 + $0x40] sm:$0xff] %v847
        %880 = vst [vmem:[#allocation3 + $0x88] sm:$0xff] %v848
        %881 = vst [vmem:[#allocation3 + $0xd0] sm:$0xff] %v849
        %882 = vst [vmem:[#allocation3 + $0x118] sm:$0xff] %v850
        %883 = vst [vmem:[#allocation3 + $0x160] sm:$0xff] %v851
        %884 = vst [vmem:[#allocation3 + $0x1a8] sm:$0xff] %v852
        %885 = vst [vmem:[#allocation3 + $0x1f0] sm:$0xff] %v853
        %886 = vst [vmem:[#allocation3 + $0x238] sm:$0xff] %v854
        %887 = vst [vmem:[#allocation3 + $0x280] sm:$0xff] %v855
        %888 = vst [vmem:[#allocation3 + $0x2c8] sm:$0xff] %v856
        %889 = vst [vmem:[#allocation3 + $0x310] sm:$0xff] %v857
        %890 = vst [vmem:[#allocation3 + $0x358] sm:$0xff] %v858
        %891 = vst [vmem:[#allocation3 + $0x3a0] sm:$0xff] %v859
        %892 = vst [vmem:[#allocation3 + $0x3e8] sm:$0xff] %v860
        %893 = vst [vmem:[#allocation3 + $0x430] sm:$0xff] %v861
        %894 = vst [vmem:[#allocation3 + $0x478] sm:$0xff] %v862
        %895 = vst [vmem:[#allocation3 + $0x4c0] sm:$0xff] %v863
        %896 = vst [vmem:[#allocation3 + $0x508] sm:$0xff] %v864
        %897 = vst [vmem:[#allocation3 + $0x550] sm:$0xff] %v865
        %898 = vst [vmem:[#allocation3 + $0x598] sm:$0xff] %v866
        %899 = vst [vmem:[#allocation3 + $0x5e0] sm:$0xff] %v867
        %900 = vst [vmem:[#allocation3 + $0x628] sm:$0xff] %v868
        %901 = vst [vmem:[#allocation3 + $0x670] sm:$0xff] %v869
        %902 = vst [vmem:[#allocation3 + $0x6b8] sm:$0xff] %v870
        %903 = vst [vmem:[#allocation3 + $0x700] sm:$0xff] %v871
        %904 = vst [vmem:[#allocation3 + $0x748] sm:$0xff] %v872
        %905 = vst [vmem:[#allocation3 + $0x790] sm:$0xff] %v873
        %906 = vst [vmem:[#allocation3 + $0x7d8] sm:$0xff] %v874
        %907 = vst [vmem:[#allocation3 + $0x820] sm:$0xff] %v875
        %908 = vst [vmem:[#allocation3 + $0x868] sm:$0xff] %v876
        %909 = vst [vmem:[#allocation3 + $0x8b0] sm:$0xff] %v877
        %910 = vst [vmem:[#allocation3 + $0x8f8] sm:$0xff] %v878
        %v911 = vld [vmem:[#allocation3] sm:$0xff]
        %v912 = vld [vmem:[#allocation3 + $0x8] sm:$0xff]
        %v913 = vld [vmem:[#allocation3 + $0x10] sm:$0xff]
        %v914 = vld [vmem:[#allocation3 + $0x18] sm:$0xff]
        %v915 = vld [vmem:[#allocation3 + $0x20] sm:$0xff]
        %v916 = vld [vmem:[#allocation3 + $0x28] sm:$0xff]
        %v917 = vld [vmem:[#allocation3 + $0x30] sm:$0xff]
        %v918 = vld [vmem:[#allocation3 + $0x38] sm:$0xff]
        %v919 = vld [vmem:[#allocation3 + $0x40] sm:$0xff]
        %v920 = vld [vmem:[#allocation3 + $0x48] sm:$0xff]
        %v921 = vld [vmem:[#allocation3 + $0x50] sm:$0xff]
        %v922 = vld [vmem:[#allocation3 + $0x58] sm:$0xff]
        %v923 = vld [vmem:[#allocation3 + $0x60] sm:$0xff]
        %v924 = vld [vmem:[#allocation3 + $0x68] sm:$0xff]
        %v925 = vld [vmem:[#allocation3 + $0x70] sm:$0xff]
        %v926 = vld [vmem:[#allocation3 + $0x78] sm:$0xff]
        %v927 = vld [vmem:[#allocation3 + $0x80] sm:$0xff]
        %v928 = vld [vmem:[#allocation3 + $0x88] sm:$0xff]
        %v929 = vld [vmem:[#allocation3 + $0x90] sm:$0xff]
        %v930 = vld [vmem:[#allocation3 + $0x98] sm:$0xff]
        %v931 = vld [vmem:[#allocation3 + $0xa0] sm:$0xff]
        %v932 = vld [vmem:[#allocation3 + $0xa8] sm:$0xff]
        %v933 = vld [vmem:[#allocation3 + $0xb0] sm:$0xff]
        %v934 = vld [vmem:[#allocation3 + $0xb8] sm:$0xff]
        %v935 = vld [vmem:[#allocation3 + $0xc0] sm:$0xff]
        %v936 = vld [vmem:[#allocation3 + $0xc8] sm:$0xff]
        %v937 = vld [vmem:[#allocation3 + $0xd0] sm:$0xff]
        %v938 = vld [vmem:[#allocation3 + $0xd8] sm:$0xff]
        %v939 = vld [vmem:[#allocation3 + $0xe0] sm:$0xff]
        %v940 = vld [vmem:[#allocation3 + $0xe8] sm:$0xff]
        %v941 = vld [vmem:[#allocation3 + $0xf0] sm:$0xff]
        %v942 = vld [vmem:[#allocation3 + $0xf8] sm:$0xff]
        %v943 = vld [vmem:[#allocation3 + $0x100] sm:$0xff]
        %v944 = vld [vmem:[#allocation3 + $0x108] sm:$0xff]
        %v945 = vld [vmem:[#allocation3 + $0x110] sm:$0xff]
        %v946 = vld [vmem:[#allocation3 + $0x118] sm:$0xff]
        %v947 = vld [vmem:[#allocation3 + $0x120] sm:$0xff]
        %v948 = vld [vmem:[#allocation3 + $0x128] sm:$0xff]
        %v949 = vld [vmem:[#allocation3 + $0x130] sm:$0xff]
        %v950 = vld [vmem:[#allocation3 + $0x138] sm:$0xff]
        %v951 = vld [vmem:[#allocation3 + $0x140] sm:$0xff]
        %v952 = vld [vmem:[#allocation3 + $0x148] sm:$0xff]
        %v953 = vld [vmem:[#allocation3 + $0x150] sm:$0xff]
        %v954 = vld [vmem:[#allocation3 + $0x158] sm:$0xff]
        %v955 = vld [vmem:[#allocation3 + $0x160] sm:$0xff]
        %v956 = vld [vmem:[#allocation3 + $0x168] sm:$0xff]
        %v957 = vld [vmem:[#allocation3 + $0x170] sm:$0xff]
        %v958 = vld [vmem:[#allocation3 + $0x178] sm:$0xff]
        %v959 = vld [vmem:[#allocation3 + $0x180] sm:$0xff]
        %v960 = vld [vmem:[#allocation3 + $0x188] sm:$0xff]
        %v961 = vld [vmem:[#allocation3 + $0x190] sm:$0xff]
        %v962 = vld [vmem:[#allocation3 + $0x198] sm:$0xff]
        %v963 = vld [vmem:[#allocation3 + $0x1a0] sm:$0xff]
        %v964 = vld [vmem:[#allocation3 + $0x1a8] sm:$0xff]
        %v965 = vld [vmem:[#allocation3 + $0x1b0] sm:$0xff]
        %v966 = vld [vmem:[#allocation3 + $0x1b8] sm:$0xff]
        %v967 = vld [vmem:[#allocation3 + $0x1c0] sm:$0xff]
        %v968 = vld [vmem:[#allocation3 + $0x1c8] sm:$0xff]
        %v969 = vld [vmem:[#allocation3 + $0x1d0] sm:$0xff]
        %v970 = vld [vmem:[#allocation3 + $0x1d8] sm:$0xff]
        %v971 = vld [vmem:[#allocation3 + $0x1e0] sm:$0xff]
        %v972 = vld [vmem:[#allocation3 + $0x1e8] sm:$0xff]
        %v973 = vld [vmem:[#allocation3 + $0x1f0] sm:$0xff]
        %v974 = vld [vmem:[#allocation3 + $0x1f8] sm:$0xff]
        %v975 = vld [vmem:[#allocation3 + $0x200] sm:$0xff]
        %v976 = vld [vmem:[#allocation3 + $0x208] sm:$0xff]
        %v977 = vld [vmem:[#allocation3 + $0x210] sm:$0xff]
        %v978 = vld [vmem:[#allocation3 + $0x218] sm:$0xff]
        %v979 = vld [vmem:[#allocation3 + $0x220] sm:$0xff]
        %v980 = vld [vmem:[#allocation3 + $0x228] sm:$0xff]
        %v981 = vld [vmem:[#allocation3 + $0x230] sm:$0xff]
        %v982 = vld [vmem:[#allocation3 + $0x238] sm:$0xff]
        %v983 = vld [vmem:[#allocation3 + $0x240] sm:$0xff]
        %v984 = vld [vmem:[#allocation3 + $0x248] sm:$0xff]
        %v985 = vld [vmem:[#allocation3 + $0x250] sm:$0xff]
        %v986 = vld [vmem:[#allocation3 + $0x258] sm:$0xff]
        %v987 = vld [vmem:[#allocation3 + $0x260] sm:$0xff]
        %v988 = vld [vmem:[#allocation3 + $0x268] sm:$0xff]
        %v989 = vld [vmem:[#allocation3 + $0x270] sm:$0xff]
        %v990 = vld [vmem:[#allocation3 + $0x278] sm:$0xff]
        %v991 = vld [vmem:[#allocation3 + $0x280] sm:$0xff]
        %v992 = vld [vmem:[#allocation3 + $0x288] sm:$0xff]
        %v993 = vld [vmem:[#allocation3 + $0x290] sm:$0xff]
        %v994 = vld [vmem:[#allocation3 + $0x298] sm:$0xff]
        %v995 = vld [vmem:[#allocation3 + $0x2a0] sm:$0xff]
        %v996 = vld [vmem:[#allocation3 + $0x2a8] sm:$0xff]
        %v997 = vld [vmem:[#allocation3 + $0x2b0] sm:$0xff]
        %v998 = vld [vmem:[#allocation3 + $0x2b8] sm:$0xff]
        %v999 = vld [vmem:[#allocation3 + $0x2c0] sm:$0xff]
        %v1000 = vld [vmem:[#allocation3 + $0x2c8] sm:$0xff]
        %v1001 = vld [vmem:[#allocation3 + $0x2d0] sm:$0xff]
        %v1002 = vld [vmem:[#allocation3 + $0x2d8] sm:$0xff]
        %v1003 = vld [vmem:[#allocation3 + $0x2e0] sm:$0xff]
        %v1004 = vld [vmem:[#allocation3 + $0x2e8] sm:$0xff]
        %v1005 = vld [vmem:[#allocation3 + $0x2f0] sm:$0xff]
        %v1006 = vld [vmem:[#allocation3 + $0x2f8] sm:$0xff]
        %v1007 = vld [vmem:[#allocation3 + $0x300] sm:$0xff]
        %v1008 = vld [vmem:[#allocation3 + $0x308] sm:$0xff]
        %v1009 = vld [vmem:[#allocation3 + $0x310] sm:$0xff]
        %v1010 = vld [vmem:[#allocation3 + $0x318] sm:$0xff]
        %v1011 = vld [vmem:[#allocation3 + $0x320] sm:$0xff]
        %v1012 = vld [vmem:[#allocation3 + $0x328] sm:$0xff]
        %v1013 = vld [vmem:[#allocation3 + $0x330] sm:$0xff]
        %v1014 = vld [vmem:[#allocation3 + $0x338] sm:$0xff]
        %v1015 = vld [vmem:[#allocation3 + $0x340] sm:$0xff]
        %v1016 = vld [vmem:[#allocation3 + $0x348] sm:$0xff]
        %v1017 = vld [vmem:[#allocation3 + $0x350] sm:$0xff]
        %v1018 = vld [vmem:[#allocation3 + $0x358] sm:$0xff]
        %v1019 = vld [vmem:[#allocation3 + $0x360] sm:$0xff]
        %v1020 = vld [vmem:[#allocation3 + $0x368] sm:$0xff]
        %v1021 = vld [vmem:[#allocation3 + $0x370] sm:$0xff]
        %v1022 = vld [vmem:[#allocation3 + $0x378] sm:$0xff]
        %v1023 = vld [vmem:[#allocation3 + $0x380] sm:$0xff]
        %v1024 = vld [vmem:[#allocation3 + $0x388] sm:$0xff]
        %v1025 = vld [vmem:[#allocation3 + $0x390] sm:$0xff]
        %v1026 = vld [vmem:[#allocation3 + $0x398] sm:$0xff]
        %v1027 = vld [vmem:[#allocation3 + $0x3a0] sm:$0xff]
        %v1028 = vld [vmem:[#allocation3 + $0x3a8] sm:$0xff]
        %v1029 = vld [vmem:[#allocation3 + $0x3b0] sm:$0xff]
        %v1030 = vld [vmem:[#allocation3 + $0x3b8] sm:$0xff]
        %v1031 = vld [vmem:[#allocation3 + $0x3c0] sm:$0xff]
        %v1032 = vld [vmem:[#allocation3 + $0x3c8] sm:$0xff]
        %v1033 = vld [vmem:[#allocation3 + $0x3d0] sm:$0xff]
        %v1034 = vld [vmem:[#allocation3 + $0x3d8] sm:$0xff]
        %v1035 = vld [vmem:[#allocation3 + $0x3e0] sm:$0xff]
        %v1036 = vld [vmem:[#allocation3 + $0x3e8] sm:$0xff]
        %v1037 = vld [vmem:[#allocation3 + $0x3f0] sm:$0xff]
        %v1038 = vld [vmem:[#allocation3 + $0x3f8] sm:$0xff]
        %v1039 = vld [vmem:[#allocation3 + $0x400] sm:$0xff]
        %v1040 = vld [vmem:[#allocation3 + $0x408] sm:$0xff]
        %v1041 = vld [vmem:[#allocation3 + $0x410] sm:$0xff]
        %v1042 = vld [vmem:[#allocation3 + $0x418] sm:$0xff]
        %v1043 = vld [vmem:[#allocation3 + $0x420] sm:$0xff]
        %v1044 = vld [vmem:[#allocation3 + $0x428] sm:$0xff]
        %v1045 = vld [vmem:[#allocation3 + $0x430] sm:$0xff]
        %v1046 = vld [vmem:[#allocation3 + $0x438] sm:$0xff]
        %v1047 = vld [vmem:[#allocation3 + $0x440] sm:$0xff]
        %v1048 = vld [vmem:[#allocation3 + $0x448] sm:$0xff]
        %v1049 = vld [vmem:[#allocation3 + $0x450] sm:$0xff]
        %v1050 = vld [vmem:[#allocation3 + $0x458] sm:$0xff]
        %v1051 = vld [vmem:[#allocation3 + $0x460] sm:$0xff]
        %v1052 = vld [vmem:[#allocation3 + $0x468] sm:$0xff]
        %v1053 = vld [vmem:[#allocation3 + $0x470] sm:$0xff]
        %v1054 = vld [vmem:[#allocation3 + $0x478] sm:$0xff]
        %v1055 = vld [vmem:[#allocation3 + $0x480] sm:$0xff]
        %v1056 = vld [vmem:[#allocation3 + $0x488] sm:$0xff]
        %v1057 = vld [vmem:[#allocation3 + $0x490] sm:$0xff]
        %v1058 = vld [vmem:[#allocation3 + $0x498] sm:$0xff]
        %v1059 = vld [vmem:[#allocation3 + $0x4a0] sm:$0xff]
        %v1060 = vld [vmem:[#allocation3 + $0x4a8] sm:$0xff]
        %v1061 = vld [vmem:[#allocation3 + $0x4b0] sm:$0xff]
        %v1062 = vld [vmem:[#allocation3 + $0x4b8] sm:$0xff]
        %v1063 = vld [vmem:[#allocation3 + $0x4c0] sm:$0xff]
        %v1064 = vld [vmem:[#allocation3 + $0x4c8] sm:$0xff]
        %v1065 = vld [vmem:[#allocation3 + $0x4d0] sm:$0xff]
        %v1066 = vld [vmem:[#allocation3 + $0x4d8] sm:$0xff]
        %v1067 = vld [vmem:[#allocation3 + $0x4e0] sm:$0xff]
        %v1068 = vld [vmem:[#allocation3 + $0x4e8] sm:$0xff]
        %v1069 = vld [vmem:[#allocation3 + $0x4f0] sm:$0xff]
        %v1070 = vld [vmem:[#allocation3 + $0x4f8] sm:$0xff]
        %v1071 = vld [vmem:[#allocation3 + $0x500] sm:$0xff]
        %v1072 = vld [vmem:[#allocation3 + $0x508] sm:$0xff]
        %v1073 = vld [vmem:[#allocation3 + $0x510] sm:$0xff]
        %v1074 = vld [vmem:[#allocation3 + $0x518] sm:$0xff]
        %v1075 = vld [vmem:[#allocation3 + $0x520] sm:$0xff]
        %v1076 = vld [vmem:[#allocation3 + $0x528] sm:$0xff]
        %v1077 = vld [vmem:[#allocation3 + $0x530] sm:$0xff]
        %v1078 = vld [vmem:[#allocation3 + $0x538] sm:$0xff]
        %v1079 = vld [vmem:[#allocation3 + $0x540] sm:$0xff]
        %v1080 = vld [vmem:[#allocation3 + $0x548] sm:$0xff]
        %v1081 = vld [vmem:[#allocation3 + $0x550] sm:$0xff]
        %v1082 = vld [vmem:[#allocation3 + $0x558] sm:$0xff]
        %v1083 = vld [vmem:[#allocation3 + $0x560] sm:$0xff]
        %v1084 = vld [vmem:[#allocation3 + $0x568] sm:$0xff]
        %v1085 = vld [vmem:[#allocation3 + $0x570] sm:$0xff]
        %v1086 = vld [vmem:[#allocation3 + $0x578] sm:$0xff]
        %v1087 = vld [vmem:[#allocation3 + $0x580] sm:$0xff]
        %v1088 = vld [vmem:[#allocation3 + $0x588] sm:$0xff]
        %v1089 = vld [vmem:[#allocation3 + $0x590] sm:$0xff]
        %v1090 = vld [vmem:[#allocation3 + $0x598] sm:$0xff]
        %v1091 = vld [vmem:[#allocation3 + $0x5a0] sm:$0xff]
        %v1092 = vld [vmem:[#allocation3 + $0x5a8] sm:$0xff]
        %v1093 = vld [vmem:[#allocation3 + $0x5b0] sm:$0xff]
        %v1094 = vld [vmem:[#allocation3 + $0x5b8] sm:$0xff]
        %v1095 = vld [vmem:[#allocation3 + $0x5c0] sm:$0xff]
        %v1096 = vld [vmem:[#allocation3 + $0x5c8] sm:$0xff]
        %v1097 = vld [vmem:[#allocation3 + $0x5d0] sm:$0xff]
        %v1098 = vld [vmem:[#allocation3 + $0x5d8] sm:$0xff]
        %v1099 = vld [vmem:[#allocation3 + $0x5e0] sm:$0xff]
        %v1100 = vld [vmem:[#allocation3 + $0x5e8] sm:$0xff]
        %v1101 = vld [vmem:[#allocation3 + $0x5f0] sm:$0xff]
        %v1102 = vld [vmem:[#allocation3 + $0x5f8] sm:$0xff]
        %v1103 = vld [vmem:[#allocation3 + $0x600] sm:$0xff]
        %v1104 = vld [vmem:[#allocation3 + $0x608] sm:$0xff]
        %v1105 = vld [vmem:[#allocation3 + $0x610] sm:$0xff]
        %v1106 = vld [vmem:[#allocation3 + $0x618] sm:$0xff]
        %v1107 = vld [vmem:[#allocation3 + $0x620] sm:$0xff]
        %v1108 = vld [vmem:[#allocation3 + $0x628] sm:$0xff]
        %v1109 = vld [vmem:[#allocation3 + $0x630] sm:$0xff]
        %v1110 = vld [vmem:[#allocation3 + $0x638] sm:$0xff]
        %v1111 = vld [vmem:[#allocation3 + $0x640] sm:$0xff]
        %v1112 = vld [vmem:[#allocation3 + $0x648] sm:$0xff]
        %v1113 = vld [vmem:[#allocation3 + $0x650] sm:$0xff]
        %v1114 = vld [vmem:[#allocation3 + $0x658] sm:$0xff]
        %v1115 = vld [vmem:[#allocation3 + $0x660] sm:$0xff]
        %v1116 = vld [vmem:[#allocation3 + $0x668] sm:$0xff]
        %v1117 = vld [vmem:[#allocation3 + $0x670] sm:$0xff]
        %v1118 = vld [vmem:[#allocation3 + $0x678] sm:$0xff]
        %v1119 = vld [vmem:[#allocation3 + $0x680] sm:$0xff]
        %v1120 = vld [vmem:[#allocation3 + $0x688] sm:$0xff]
        %v1121 = vld [vmem:[#allocation3 + $0x690] sm:$0xff]
        %v1122 = vld [vmem:[#allocation3 + $0x698] sm:$0xff]
        %v1123 = vld [vmem:[#allocation3 + $0x6a0] sm:$0xff]
        %v1124 = vld [vmem:[#allocation3 + $0x6a8] sm:$0xff]
        %v1125 = vld [vmem:[#allocation3 + $0x6b0] sm:$0xff]
        %v1126 = vld [vmem:[#allocation3 + $0x6b8] sm:$0xff]
        %v1127 = vld [vmem:[#allocation3 + $0x6c0] sm:$0xff]
        %v1128 = vld [vmem:[#allocation3 + $0x6c8] sm:$0xff]
        %v1129 = vld [vmem:[#allocation3 + $0x6d0] sm:$0xff]
        %v1130 = vld [vmem:[#allocation3 + $0x6d8] sm:$0xff]
        %v1131 = vld [vmem:[#allocation3 + $0x6e0] sm:$0xff]
        %v1132 = vld [vmem:[#allocation3 + $0x6e8] sm:$0xff]
        %v1133 = vld [vmem:[#allocation3 + $0x6f0] sm:$0xff]
        %v1134 = vld [vmem:[#allocation3 + $0x6f8] sm:$0xff]
        %v1135 = vld [vmem:[#allocation3 + $0x700] sm:$0xff]
        %v1136 = vld [vmem:[#allocation3 + $0x708] sm:$0xff]
        %v1137 = vld [vmem:[#allocation3 + $0x710] sm:$0xff]
        %v1138 = vld [vmem:[#allocation3 + $0x718] sm:$0xff]
        %v1139 = vld [vmem:[#allocation3 + $0x720] sm:$0xff]
        %v1140 = vld [vmem:[#allocation3 + $0x728] sm:$0xff]
        %v1141 = vld [vmem:[#allocation3 + $0x730] sm:$0xff]
        %v1142 = vld [vmem:[#allocation3 + $0x738] sm:$0xff]
        %v1143 = vld [vmem:[#allocation3 + $0x740] sm:$0xff]
        %v1144 = vld [vmem:[#allocation3 + $0x748] sm:$0xff]
        %v1145 = vld [vmem:[#allocation3 + $0x750] sm:$0xff]
        %v1146 = vld [vmem:[#allocation3 + $0x758] sm:$0xff]
        %v1147 = vld [vmem:[#allocation3 + $0x760] sm:$0xff]
        %v1148 = vld [vmem:[#allocation3 + $0x768] sm:$0xff]
        %v1149 = vld [vmem:[#allocation3 + $0x770] sm:$0xff]
        %v1150 = vld [vmem:[#allocation3 + $0x778] sm:$0xff]
        %v1151 = vld [vmem:[#allocation3 + $0x780] sm:$0xff]
        %v1152 = vld [vmem:[#allocation3 + $0x788] sm:$0xff]
        %v1153 = vld [vmem:[#allocation3 + $0x790] sm:$0xff]
        %v1154 = vld [vmem:[#allocation3 + $0x798] sm:$0xff]
        %v1155 = vld [vmem:[#allocation3 + $0x7a0] sm:$0xff]
        %v1156 = vld [vmem:[#allocation3 + $0x7a8] sm:$0xff]
        %v1157 = vld [vmem:[#allocation3 + $0x7b0] sm:$0xff]
        %v1158 = vld [vmem:[#allocation3 + $0x7b8] sm:$0xff]
        %v1159 = vld [vmem:[#allocation3 + $0x7c0] sm:$0xff]
        %v1160 = vld [vmem:[#allocation3 + $0x7c8] sm:$0xff]
        %v1161 = vld [vmem:[#allocation3 + $0x7d0] sm:$0xff]
        %v1162 = vld [vmem:[#allocation3 + $0x7d8] sm:$0xff]
        %v1163 = vld [vmem:[#allocation3 + $0x7e0] sm:$0xff]
        %v1164 = vld [vmem:[#allocation3 + $0x7e8] sm:$0xff]
        %v1165 = vld [vmem:[#allocation3 + $0x7f0] sm:$0xff]
        %v1166 = vld [vmem:[#allocation3 + $0x7f8] sm:$0xff]
        %v1167 = vld [vmem:[#allocation3 + $0x800] sm:$0xff]
        %v1168 = vld [vmem:[#allocation3 + $0x808] sm:$0xff]
        %v1169 = vld [vmem:[#allocation3 + $0x810] sm:$0xff]
        %v1170 = vld [vmem:[#allocation3 + $0x818] sm:$0xff]
        %v1171 = vld [vmem:[#allocation3 + $0x820] sm:$0xff]
        %v1172 = vld [vmem:[#allocation3 + $0x828] sm:$0xff]
        %v1173 = vld [vmem:[#allocation3 + $0x830] sm:$0xff]
        %v1174 = vld [vmem:[#allocation3 + $0x838] sm:$0xff]
        %v1175 = vld [vmem:[#allocation3 + $0x840] sm:$0xff]
        %v1176 = vld [vmem:[#allocation3 + $0x848] sm:$0xff]
        %v1177 = vld [vmem:[#allocation3 + $0x850] sm:$0xff]
        %v1178 = vld [vmem:[#allocation3 + $0x858] sm:$0xff]
        %v1179 = vld [vmem:[#allocation3 + $0x860] sm:$0xff]
        %v1180 = vld [vmem:[#allocation3 + $0x868] sm:$0xff]
        %v1181 = vld [vmem:[#allocation3 + $0x870] sm:$0xff]
        %v1182 = vld [vmem:[#allocation3 + $0x878] sm:$0xff]
        %v1183 = vld [vmem:[#allocation3 + $0x880] sm:$0xff]
        %v1184 = vld [vmem:[#allocation3 + $0x888] sm:$0xff]
        %v1185 = vld [vmem:[#allocation3 + $0x890] sm:$0xff]
        %v1186 = vld [vmem:[#allocation3 + $0x898] sm:$0xff]
        %v1187 = vld [vmem:[#allocation3 + $0x8a0] sm:$0xff]
        %v1188 = vld [vmem:[#allocation3 + $0x8a8] sm:$0xff]
        %v1189 = vld [vmem:[#allocation3 + $0x8b0] sm:$0xff]
        %v1190 = vld [vmem:[#allocation3 + $0x8b8] sm:$0xff]
        %v1191 = vld [vmem:[#allocation3 + $0x8c0] sm:$0xff]
        %v1192 = vld [vmem:[#allocation3 + $0x8c8] sm:$0xff]
        %v1193 = vld [vmem:[#allocation3 + $0x8d0] sm:$0xff]
        %v1194 = vld [vmem:[#allocation3 + $0x8d8] sm:$0xff]
        %v1195 = vld [vmem:[#allocation3 + $0x8e0] sm:$0xff]
        %v1196 = vld [vmem:[#allocation3 + $0x8e8] sm:$0xff]
        %v1197 = vld [vmem:[#allocation3 + $0x8f0] sm:$0xff]
        %v1198 = vld [vmem:[#allocation3 + $0x8f8] sm:$0xff]
        %v1199 = vld [vmem:[#allocation7] sm:$0xff]
        %v1200 = vld [vmem:[#allocation7 + $0x8] sm:$0xff]
        %v1201 = vld [vmem:[#allocation7 + $0x10] sm:$0xff]
        %v1202 = vld [vmem:[#allocation7 + $0x18] sm:$0xff]
        %v1203 = vld [vmem:[#allocation7 + $0x20] sm:$0xff]
        %v1204 = vld [vmem:[#allocation7 + $0x28] sm:$0xff]
        %v1205 = vld [vmem:[#allocation7 + $0x30] sm:$0xff]
        %v1206 = vld [vmem:[#allocation7 + $0x38] sm:$0xff]
        %v1207 = vld [vmem:[#allocation7 + $0x40] sm:$0xff]
        %v1208 = vld [vmem:[#allocation7 + $0x48] sm:$0xff]
        %v1209 = vld [vmem:[#allocation7 + $0x50] sm:$0xff]
        %v1210 = vld [vmem:[#allocation7 + $0x58] sm:$0xff]
        %v1211 = vld [vmem:[#allocation7 + $0x60] sm:$0xff]
        %v1212 = vld [vmem:[#allocation7 + $0x68] sm:$0xff]
        %v1213 = vld [vmem:[#allocation7 + $0x70] sm:$0xff]
        %v1214 = vld [vmem:[#allocation7 + $0x78] sm:$0xff]
        %v1215 = vld [vmem:[#allocation7 + $0x80] sm:$0xff]
        %v1216 = vld [vmem:[#allocation7 + $0x88] sm:$0xff]
        %v1217 = vld [vmem:[#allocation7 + $0x90] sm:$0xff]
        %v1218 = vld [vmem:[#allocation7 + $0x98] sm:$0xff]
        %v1219 = vld [vmem:[#allocation7 + $0xa0] sm:$0xff]
        %v1220 = vld [vmem:[#allocation7 + $0xa8] sm:$0xff]
        %v1221 = vld [vmem:[#allocation7 + $0xb0] sm:$0xff]
        %v1222 = vld [vmem:[#allocation7 + $0xb8] sm:$0xff]
        %v1223 = vld [vmem:[#allocation7 + $0xc0] sm:$0xff]
        %v1224 = vld [vmem:[#allocation7 + $0xc8] sm:$0xff]
        %v1225 = vld [vmem:[#allocation7 + $0xd0] sm:$0xff]
        %v1226 = vld [vmem:[#allocation7 + $0xd8] sm:$0xff]
        %v1227 = vld [vmem:[#allocation7 + $0xe0] sm:$0xff]
        %v1228 = vld [vmem:[#allocation7 + $0xe8] sm:$0xff]
        %v1229 = vld [vmem:[#allocation7 + $0xf0] sm:$0xff]
        %v1230 = vld [vmem:[#allocation7 + $0xf8] sm:$0xff]
        %v1231 = vld [vmem:[#allocation7 + $0x100] sm:$0xff]
        %v1232 = vld [vmem:[#allocation7 + $0x108] sm:$0xff]
        %v1233 = vld [vmem:[#allocation7 + $0x110] sm:$0xff]
        %v1234 = vld [vmem:[#allocation7 + $0x118] sm:$0xff]
        %v1235 = vld [vmem:[#allocation7 + $0x120] sm:$0xff]
        %v1236 = vld [vmem:[#allocation7 + $0x128] sm:$0xff]
        %v1237 = vld [vmem:[#allocation7 + $0x130] sm:$0xff]
        %v1238 = vld [vmem:[#allocation7 + $0x138] sm:$0xff]
        %v1239 = vld [vmem:[#allocation7 + $0x140] sm:$0xff]
        %v1240 = vld [vmem:[#allocation7 + $0x148] sm:$0xff]
        %v1241 = vld [vmem:[#allocation7 + $0x150] sm:$0xff]
        %v1242 = vld [vmem:[#allocation7 + $0x158] sm:$0xff]
        %v1243 = vld [vmem:[#allocation7 + $0x160] sm:$0xff]
        %v1244 = vld [vmem:[#allocation7 + $0x168] sm:$0xff]
        %v1245 = vld [vmem:[#allocation7 + $0x170] sm:$0xff]
        %v1246 = vld [vmem:[#allocation7 + $0x178] sm:$0xff]
        %v1247 = vld [vmem:[#allocation7 + $0x180] sm:$0xff]
        %v1248 = vld [vmem:[#allocation7 + $0x188] sm:$0xff]
        %v1249 = vld [vmem:[#allocation7 + $0x190] sm:$0xff]
        %v1250 = vld [vmem:[#allocation7 + $0x198] sm:$0xff]
        %v1251 = vld [vmem:[#allocation7 + $0x1a0] sm:$0xff]
        %v1252 = vld [vmem:[#allocation7 + $0x1a8] sm:$0xff]
        %v1253 = vld [vmem:[#allocation7 + $0x1b0] sm:$0xff]
        %v1254 = vld [vmem:[#allocation7 + $0x1b8] sm:$0xff]
        %v1255 = vld [vmem:[#allocation7 + $0x1c0] sm:$0xff]
        %v1256 = vld [vmem:[#allocation7 + $0x1c8] sm:$0xff]
        %v1257 = vld [vmem:[#allocation7 + $0x1d0] sm:$0xff]
        %v1258 = vld [vmem:[#allocation7 + $0x1d8] sm:$0xff]
        %v1259 = vld [vmem:[#allocation7 + $0x1e0] sm:$0xff]
        %v1260 = vld [vmem:[#allocation7 + $0x1e8] sm:$0xff]
        %v1261 = vld [vmem:[#allocation7 + $0x1f0] sm:$0xff]
        %v1262 = vld [vmem:[#allocation7 + $0x1f8] sm:$0xff]
        %v1263 = vld [vmem:[#allocation7 + $0x200] sm:$0xff]
        %v1264 = vld [vmem:[#allocation7 + $0x208] sm:$0xff]
        %v1265 = vld [vmem:[#allocation7 + $0x210] sm:$0xff]
        %v1266 = vld [vmem:[#allocation7 + $0x218] sm:$0xff]
        %v1267 = vld [vmem:[#allocation7 + $0x220] sm:$0xff]
        %v1268 = vld [vmem:[#allocation7 + $0x228] sm:$0xff]
        %v1269 = vld [vmem:[#allocation7 + $0x230] sm:$0xff]
        %v1270 = vld [vmem:[#allocation7 + $0x238] sm:$0xff]
        %v1271 = vld [vmem:[#allocation7 + $0x240] sm:$0xff]
        %v1272 = vld [vmem:[#allocation7 + $0x248] sm:$0xff]
        %v1273 = vld [vmem:[#allocation7 + $0x250] sm:$0xff]
        %v1274 = vld [vmem:[#allocation7 + $0x258] sm:$0xff]
        %v1275 = vld [vmem:[#allocation7 + $0x260] sm:$0xff]
        %v1276 = vld [vmem:[#allocation7 + $0x268] sm:$0xff]
        %v1277 = vld [vmem:[#allocation7 + $0x270] sm:$0xff]
        %v1278 = vld [vmem:[#allocation7 + $0x278] sm:$0xff]
        %v1279 = vld [vmem:[#allocation7 + $0x280] sm:$0xff]
        %v1280 = vld [vmem:[#allocation7 + $0x288] sm:$0xff]
        %v1281 = vld [vmem:[#allocation7 + $0x290] sm:$0xff]
        %v1282 = vld [vmem:[#allocation7 + $0x298] sm:$0xff]
        %v1283 = vld [vmem:[#allocation7 + $0x2a0] sm:$0xff]
        %v1284 = vld [vmem:[#allocation7 + $0x2a8] sm:$0xff]
        %v1285 = vld [vmem:[#allocation7 + $0x2b0] sm:$0xff]
        %v1286 = vld [vmem:[#allocation7 + $0x2b8] sm:$0xff]
        %v1287 = vld [vmem:[#allocation7 + $0x2c0] sm:$0xff]
        %v1288 = vld [vmem:[#allocation7 + $0x2c8] sm:$0xff]
        %v1289 = vld [vmem:[#allocation7 + $0x2d0] sm:$0xff]
        %v1290 = vld [vmem:[#allocation7 + $0x2d8] sm:$0xff]
        %v1291 = vld [vmem:[#allocation7 + $0x2e0] sm:$0xff]
        %v1292 = vld [vmem:[#allocation7 + $0x2e8] sm:$0xff]
        %v1293 = vld [vmem:[#allocation7 + $0x2f0] sm:$0xff]
        %v1294 = vld [vmem:[#allocation7 + $0x2f8] sm:$0xff]
        %v1295 = vld [vmem:[#allocation7 + $0x300] sm:$0xff]
        %v1296 = vld [vmem:[#allocation7 + $0x308] sm:$0xff]
        %v1297 = vld [vmem:[#allocation7 + $0x310] sm:$0xff]
        %v1298 = vld [vmem:[#allocation7 + $0x318] sm:$0xff]
        %v1299 = vld [vmem:[#allocation7 + $0x320] sm:$0xff]
        %v1300 = vld [vmem:[#allocation7 + $0x328] sm:$0xff]
        %v1301 = vld [vmem:[#allocation7 + $0x330] sm:$0xff]
        %v1302 = vld [vmem:[#allocation7 + $0x338] sm:$0xff]
        %v1303 = vld [vmem:[#allocation7 + $0x340] sm:$0xff]
        %v1304 = vld [vmem:[#allocation7 + $0x348] sm:$0xff]
        %v1305 = vld [vmem:[#allocation7 + $0x350] sm:$0xff]
        %v1306 = vld [vmem:[#allocation7 + $0x358] sm:$0xff]
        %v1307 = vld [vmem:[#allocation7 + $0x360] sm:$0xff]
        %v1308 = vld [vmem:[#allocation7 + $0x368] sm:$0xff]
        %v1309 = vld [vmem:[#allocation7 + $0x370] sm:$0xff]
        %v1310 = vld [vmem:[#allocation7 + $0x378] sm:$0xff]
        %v1311 = vld [vmem:[#allocation7 + $0x380] sm:$0xff]
        %v1312 = vld [vmem:[#allocation7 + $0x388] sm:$0xff]
        %v1313 = vld [vmem:[#allocation7 + $0x390] sm:$0xff]
        %v1314 = vld [vmem:[#allocation7 + $0x398] sm:$0xff]
        %v1315 = vld [vmem:[#allocation7 + $0x3a0] sm:$0xff]
        %v1316 = vld [vmem:[#allocation7 + $0x3a8] sm:$0xff]
        %v1317 = vld [vmem:[#allocation7 + $0x3b0] sm:$0xff]
        %v1318 = vld [vmem:[#allocation7 + $0x3b8] sm:$0xff]
        %v1319 = vld [vmem:[#allocation7 + $0x3c0] sm:$0xff]
        %v1320 = vld [vmem:[#allocation7 + $0x3c8] sm:$0xff]
        %v1321 = vld [vmem:[#allocation7 + $0x3d0] sm:$0xff]
        %v1322 = vld [vmem:[#allocation7 + $0x3d8] sm:$0xff]
        %v1323 = vld [vmem:[#allocation7 + $0x3e0] sm:$0xff]
        %v1324 = vld [vmem:[#allocation7 + $0x3e8] sm:$0xff]
        %v1325 = vld [vmem:[#allocation7 + $0x3f0] sm:$0xff]
        %v1326 = vld [vmem:[#allocation7 + $0x3f8] sm:$0xff]
        %v1327 = vld [vmem:[#allocation7 + $0x400] sm:$0xff]
        %v1328 = vld [vmem:[#allocation7 + $0x408] sm:$0xff]
        %v1329 = vld [vmem:[#allocation7 + $0x410] sm:$0xff]
        %v1330 = vld [vmem:[#allocation7 + $0x418] sm:$0xff]
        %v1331 = vld [vmem:[#allocation7 + $0x420] sm:$0xff]
        %v1332 = vld [vmem:[#allocation7 + $0x428] sm:$0xff]
        %v1333 = vld [vmem:[#allocation7 + $0x430] sm:$0xff]
        %v1334 = vld [vmem:[#allocation7 + $0x438] sm:$0xff]
        %v1335 = vld [vmem:[#allocation7 + $0x440] sm:$0xff]
        %v1336 = vld [vmem:[#allocation7 + $0x448] sm:$0xff]
        %v1337 = vld [vmem:[#allocation7 + $0x450] sm:$0xff]
        %v1338 = vld [vmem:[#allocation7 + $0x458] sm:$0xff]
        %v1339 = vld [vmem:[#allocation7 + $0x460] sm:$0xff]
        %v1340 = vld [vmem:[#allocation7 + $0x468] sm:$0xff]
        %v1341 = vld [vmem:[#allocation7 + $0x470] sm:$0xff]
        %v1342 = vld [vmem:[#allocation7 + $0x478] sm:$0xff]
        %1343 = vmatprep.subr.mxu0 0.0
        %1344 = vmatpush1.msra.mxu0 %v1214
        %1345 = vmatprep.subr.mxu0 0.0
        %1346 = vmatpush1.msra.mxu0 %v1213
        %1347 = vmatprep.subr.mxu0 0.0
        %1348 = vmatpush1.msra.mxu0 %v1212
        %1349 = vmatprep.subr.mxu0 0.0
        %1350 = vmatpush1.msra.mxu0 %v1211
        %1351 = vmatprep.subr.mxu0 0.0
        %1352 = vmatpush1.msra.mxu0 %v1210
        %1353 = vmatprep.subr.mxu0 0.0
        %1354 = vmatpush1.msra.mxu0 %v1209
        %1355 = vmatprep.subr.mxu0 0.0
        %1356 = vmatpush1.msra.mxu0 %v1208
        %1357 = vmatprep.subr.mxu0 0.0
        %1358 = vmatpush1.msra.mxu0 %v1207
        %1359 = vmatprep.subr.mxu0 0.0
        %1360 = vmatpush1.msra.mxu0 %v1206
        %1361 = vmatprep.subr.mxu0 0.0
        %1362 = vmatpush1.msra.mxu0 %v1205
        %1363 = vmatprep.subr.mxu0 0.0
        %1364 = vmatpush1.msra.mxu0 %v1204
        %1365 = vmatprep.subr.mxu0 0.0
        %1366 = vmatpush1.msra.mxu0 %v1203
        %1367 = vmatprep.subr.mxu0 0.0
        %1368 = vmatpush1.msra.mxu0 %v1202
        %1369 = vmatprep.subr.mxu0 0.0
        %1370 = vmatpush1.msra.mxu0 %v1201
        %1371 = vmatprep.subr.mxu0 0.0
        %1372 = vmatpush1.msra.mxu0 %v1200
        %1373 = vmatprep.subr.mxu0 0.0
        %1374 = vmatpush1.msra.mxu0 %v1199
        %1375 = vmatprep.subr.mxu0 0.0
        %1376 = vmatpush2.msra.mxu0 %v1230
        %1377 = vmatprep.subr.mxu0 0.0
        %1378 = vmatpush2.msra.mxu0 %v1229
        %1379 = vmatprep.subr.mxu0 0.0
        %1380 = vmatpush2.msra.mxu0 %v1228
        %1381 = vmatprep.subr.mxu0 0.0
        %1382 = vmatpush2.msra.mxu0 %v1227
        %1383 = vmatprep.subr.mxu0 0.0
        %1384 = vmatpush2.msra.mxu0 %v1226
        %1385 = vmatprep.subr.mxu0 0.0
        %1386 = vmatpush2.msra.mxu0 %v1225
        %1387 = vmatprep.subr.mxu0 0.0
        %1388 = vmatpush2.msra.mxu0 %v1224
        %1389 = vmatprep.subr.mxu0 0.0
        %1390 = vmatpush2.msra.mxu0 %v1223
        %1391 = vmatprep.subr.mxu0 0.0
        %1392 = vmatpush2.msra.mxu0 %v1222
        %1393 = vmatprep.subr.mxu0 0.0
        %1394 = vmatpush2.msra.mxu0 %v1221
        %1395 = vmatprep.subr.mxu0 0.0
        %1396 = vmatpush2.msra.mxu0 %v1220
        %1397 = vmatprep.subr.mxu0 0.0
        %1398 = vmatpush2.msra.mxu0 %v1219
        %1399 = vmatprep.subr.mxu0 0.0
        %1400 = vmatpush2.msra.mxu0 %v1218
        %1401 = vmatprep.subr.mxu0 0.0
        %1402 = vmatpush2.msra.mxu0 %v1217
        %1403 = vmatprep.subr.mxu0 0.0
        %1404 = vmatpush2.msra.mxu0 %v1216
        %1405 = vmatprep.subr.mxu0 0.0
        %1406 = vmatpush2.msra.mxu0 %v1215
        %1407 = vmatprep.mubr.f32.mxu0 %v912
        %1408 = vmatmul.mubr.f32.gmra.mxu0 %v911
        %v1409 = vpop.f32.mrf.mxu0
        %v1410 = vadd.f32 0.0, %v1409
        %v1411 = vpop.f32.mrf.mxu0
        %1412 = vmatprep.mubr.f32.mxu0 %v921
        %1413 = vmatmul.mubr.f32.gmra.mxu0 %v920
        %v1414 = vpop.f32.mrf.mxu0
        %v1415 = vadd.f32 0.0, %v1414
        %v1416 = vpop.f32.mrf.mxu0
        %1417 = vmatprep.mubr.f32.mxu0 %v930
        %1418 = vmatmul.mubr.f32.gmra.mxu0 %v929
        %v1419 = vpop.f32.mrf.mxu0
        %v1420 = vadd.f32 0.0, %v1419
        %v1421 = vpop.f32.mrf.mxu0
        %1422 = vmatprep.mubr.f32.mxu0 %v939
        %1423 = vmatmul.mubr.f32.gmra.mxu0 %v938
        %v1424 = vpop.f32.mrf.mxu0
        %v1425 = vadd.f32 0.0, %v1424
        %v1426 = vpop.f32.mrf.mxu0
        %1427 = vmatprep.mubr.f32.mxu0 %v948
        %1428 = vmatmul.mubr.f32.gmra.mxu0 %v947
        %v1429 = vpop.f32.mrf.mxu0
        %v1430 = vadd.f32 0.0, %v1429
        %v1431 = vpop.f32.mrf.mxu0
        %1432 = vmatprep.mubr.f32.mxu0 %v957
        %1433 = vmatmul.mubr.f32.gmra.mxu0 %v956
        %v1434 = vpop.f32.mrf.mxu0
        %v1435 = vadd.f32 0.0, %v1434
        %v1436 = vpop.f32.mrf.mxu0
        %1437 = vmatprep.mubr.f32.mxu0 %v966
        %1438 = vmatmul.mubr.f32.gmra.mxu0 %v965
        %v1439 = vpop.f32.mrf.mxu0
        %v1440 = vadd.f32 0.0, %v1439
        %v1441 = vpop.f32.mrf.mxu0
        %1442 = vmatprep.mubr.f32.mxu0 %v975
        %1443 = vmatmul.mubr.f32.gmra.mxu0 %v974
        %v1444 = vpop.f32.mrf.mxu0
        %v1445 = vadd.f32 0.0, %v1444
        %v1446 = vpop.f32.mrf.mxu0
        %1447 = vmatprep.mubr.f32.mxu0 %v984
        %1448 = vmatmul.mubr.f32.gmra.mxu0 %v983
        %v1449 = vpop.f32.mrf.mxu0
        %v1450 = vadd.f32 0.0, %v1449
        %v1451 = vpop.f32.mrf.mxu0
        %1452 = vmatprep.mubr.f32.mxu0 %v993
        %1453 = vmatmul.mubr.f32.gmra.mxu0 %v992
        %v1454 = vpop.f32.mrf.mxu0
        %v1455 = vadd.f32 0.0, %v1454
        %v1456 = vpop.f32.mrf.mxu0
        %1457 = vmatprep.mubr.f32.mxu0 %v1002
        %1458 = vmatmul.mubr.f32.gmra.mxu0 %v1001
        %v1459 = vpop.f32.mrf.mxu0
        %v1460 = vadd.f32 0.0, %v1459
        %v1461 = vpop.f32.mrf.mxu0
        %1462 = vmatprep.mubr.f32.mxu0 %v1011
        %1463 = vmatmul.mubr.f32.gmra.mxu0 %v1010
        %v1464 = vpop.f32.mrf.mxu0
        %v1465 = vadd.f32 0.0, %v1464
        %v1466 = vpop.f32.mrf.mxu0
        %1467 = vmatprep.mubr.f32.mxu0 %v1020
        %1468 = vmatmul.mubr.f32.gmra.mxu0 %v1019
        %v1469 = vpop.f32.mrf.mxu0
        %v1470 = vadd.f32 0.0, %v1469
        %v1471 = vpop.f32.mrf.mxu0
        %1472 = vmatprep.mubr.f32.mxu0 %v1029
        %1473 = vmatmul.mubr.f32.gmra.mxu0 %v1028
        %v1474 = vpop.f32.mrf.mxu0
        %v1475 = vadd.f32 0.0, %v1474
        %v1476 = vpop.f32.mrf.mxu0
        %1477 = vmatprep.mubr.f32.mxu0 %v1038
        %1478 = vmatmul.mubr.f32.gmra.mxu0 %v1037
        %v1479 = vpop.f32.mrf.mxu0
        %v1480 = vadd.f32 0.0, %v1479
        %v1481 = vpop.f32.mrf.mxu0
        %1482 = vmatprep.mubr.f32.mxu0 %v1047
        %1483 = vmatmul.mubr.f32.gmra.mxu0 %v1046
        %v1484 = vpop.f32.mrf.mxu0
        %v1485 = vadd.f32 0.0, %v1484
        %v1486 = vpop.f32.mrf.mxu0
        %1487 = vmatprep.mubr.f32.mxu0 %v1056
        %1488 = vmatmul.mubr.f32.gmra.mxu0 %v1055
        %v1489 = vpop.f32.mrf.mxu0
        %v1490 = vadd.f32 0.0, %v1489
        %v1491 = vpop.f32.mrf.mxu0
        %1492 = vmatprep.mubr.f32.mxu0 %v1065
        %1493 = vmatmul.mubr.f32.gmra.mxu0 %v1064
        %v1494 = vpop.f32.mrf.mxu0
        %v1495 = vadd.f32 0.0, %v1494
        %v1496 = vpop.f32.mrf.mxu0
        %1497 = vmatprep.mubr.f32.mxu0 %v1074
        %1498 = vmatmul.mubr.f32.gmra.mxu0 %v1073
        %v1499 = vpop.f32.mrf.mxu0
        %v1500 = vadd.f32 0.0, %v1499
        %v1501 = vpop.f32.mrf.mxu0
        %1502 = vmatprep.mubr.f32.mxu0 %v1083
        %1503 = vmatmul.mubr.f32.gmra.mxu0 %v1082
        %v1504 = vpop.f32.mrf.mxu0
        %v1505 = vadd.f32 0.0, %v1504
        %v1506 = vpop.f32.mrf.mxu0
        %1507 = vmatprep.mubr.f32.mxu0 %v1092
        %1508 = vmatmul.mubr.f32.gmra.mxu0 %v1091
        %v1509 = vpop.f32.mrf.mxu0
        %v1510 = vadd.f32 0.0, %v1509
        %v1511 = vpop.f32.mrf.mxu0
        %1512 = vmatprep.mubr.f32.mxu0 %v1101
        %1513 = vmatmul.mubr.f32.gmra.mxu0 %v1100
        %v1514 = vpop.f32.mrf.mxu0
        %v1515 = vadd.f32 0.0, %v1514
        %v1516 = vpop.f32.mrf.mxu0
        %1517 = vmatprep.mubr.f32.mxu0 %v1110
        %1518 = vmatmul.mubr.f32.gmra.mxu0 %v1109
        %v1519 = vpop.f32.mrf.mxu0
        %v1520 = vadd.f32 0.0, %v1519
        %v1521 = vpop.f32.mrf.mxu0
        %1522 = vmatprep.mubr.f32.mxu0 %v1119
        %1523 = vmatmul.mubr.f32.gmra.mxu0 %v1118
        %v1524 = vpop.f32.mrf.mxu0
        %v1525 = vadd.f32 0.0, %v1524
        %v1526 = vpop.f32.mrf.mxu0
        %1527 = vmatprep.mubr.f32.mxu0 %v1128
        %1528 = vmatmul.mubr.f32.gmra.mxu0 %v1127
        %v1529 = vpop.f32.mrf.mxu0
        %v1530 = vadd.f32 0.0, %v1529
        %v1531 = vpop.f32.mrf.mxu0
        %1532 = vmatprep.mubr.f32.mxu0 %v1137
        %1533 = vmatmul.mubr.f32.gmra.mxu0 %v1136
        %v1534 = vpop.f32.mrf.mxu0
        %v1535 = vadd.f32 0.0, %v1534
        %v1536 = vpop.f32.mrf.mxu0
        %1537 = vmatprep.mubr.f32.mxu0 %v1146
        %1538 = vmatmul.mubr.f32.gmra.mxu0 %v1145
        %v1539 = vpop.f32.mrf.mxu0
        %v1540 = vadd.f32 0.0, %v1539
        %v1541 = vpop.f32.mrf.mxu0
        %1542 = vmatprep.mubr.f32.mxu0 %v1155
        %1543 = vmatmul.mubr.f32.gmra.mxu0 %v1154
        %v1544 = vpop.f32.mrf.mxu0
        %v1545 = vadd.f32 0.0, %v1544
        %v1546 = vpop.f32.mrf.mxu0
        %1547 = vmatprep.mubr.f32.mxu0 %v1164
        %1548 = vmatmul.mubr.f32.gmra.mxu0 %v1163
        %v1549 = vpop.f32.mrf.mxu0
        %v1550 = vadd.f32 0.0, %v1549
        %v1551 = vpop.f32.mrf.mxu0
        %1552 = vmatprep.mubr.f32.mxu0 %v1173
        %1553 = vmatmul.mubr.f32.gmra.mxu0 %v1172
        %v1554 = vpop.f32.mrf.mxu0
        %v1555 = vadd.f32 0.0, %v1554
        %v1556 = vpop.f32.mrf.mxu0
        %1557 = vmatprep.mubr.f32.mxu0 %v1182
        %1558 = vmatmul.mubr.f32.gmra.mxu0 %v1181
        %v1559 = vpop.f32.mrf.mxu0
        %v1560 = vadd.f32 0.0, %v1559
        %v1561 = vpop.f32.mrf.mxu0
        %1562 = vmatprep.mubr.f32.mxu0 %v1191
        %1563 = vmatmul.mubr.f32.gmra.mxu0 %v1190
        %v1564 = vpop.f32.mrf.mxu0
        %v1565 = vadd.f32 0.0, %v1564
        %v1566 = vpop.f32.mrf.mxu0
        %1567 = vdwg.mxu0
        %1568 = vmatprep.subr.mxu0 0.0
        %1569 = vmatpush1.msra.mxu0 %v1246
        %1570 = vmatprep.subr.mxu0 0.0
        %1571 = vmatpush1.msra.mxu0 %v1245
        %1572 = vmatprep.subr.mxu0 0.0
        %1573 = vmatpush1.msra.mxu0 %v1244
        %1574 = vmatprep.subr.mxu0 0.0
        %1575 = vmatpush1.msra.mxu0 %v1243
        %1576 = vmatprep.subr.mxu0 0.0
        %1577 = vmatpush1.msra.mxu0 %v1242
        %1578 = vmatprep.subr.mxu0 0.0
        %1579 = vmatpush1.msra.mxu0 %v1241
        %1580 = vmatprep.subr.mxu0 0.0
        %1581 = vmatpush1.msra.mxu0 %v1240
        %1582 = vmatprep.subr.mxu0 0.0
        %1583 = vmatpush1.msra.mxu0 %v1239
        %1584 = vmatprep.subr.mxu0 0.0
        %1585 = vmatpush1.msra.mxu0 %v1238
        %1586 = vmatprep.subr.mxu0 0.0
        %1587 = vmatpush1.msra.mxu0 %v1237
        %1588 = vmatprep.subr.mxu0 0.0
        %1589 = vmatpush1.msra.mxu0 %v1236
        %1590 = vmatprep.subr.mxu0 0.0
        %1591 = vmatpush1.msra.mxu0 %v1235
        %1592 = vmatprep.subr.mxu0 0.0
        %1593 = vmatpush1.msra.mxu0 %v1234
        %1594 = vmatprep.subr.mxu0 0.0
        %1595 = vmatpush1.msra.mxu0 %v1233
        %1596 = vmatprep.subr.mxu0 0.0
        %1597 = vmatpush1.msra.mxu0 %v1232
        %1598 = vmatprep.subr.mxu0 0.0
        %1599 = vmatpush1.msra.mxu0 %v1231
        %1600 = vmatprep.subr.mxu0 0.0
        %1601 = vmatpush2.msra.mxu0 %v1262
        %1602 = vmatprep.subr.mxu0 0.0
        %1603 = vmatpush2.msra.mxu0 %v1261
        %1604 = vmatprep.subr.mxu0 0.0
        %1605 = vmatpush2.msra.mxu0 %v1260
        %1606 = vmatprep.subr.mxu0 0.0
        %1607 = vmatpush2.msra.mxu0 %v1259
        %1608 = vmatprep.subr.mxu0 0.0
        %1609 = vmatpush2.msra.mxu0 %v1258
        %1610 = vmatprep.subr.mxu0 0.0
        %1611 = vmatpush2.msra.mxu0 %v1257
        %1612 = vmatprep.subr.mxu0 0.0
        %1613 = vmatpush2.msra.mxu0 %v1256
        %1614 = vmatprep.subr.mxu0 0.0
        %1615 = vmatpush2.msra.mxu0 %v1255
        %1616 = vmatprep.subr.mxu0 0.0
        %1617 = vmatpush2.msra.mxu0 %v1254
        %1618 = vmatprep.subr.mxu0 0.0
        %1619 = vmatpush2.msra.mxu0 %v1253
        %1620 = vmatprep.subr.mxu0 0.0
        %1621 = vmatpush2.msra.mxu0 %v1252
        %1622 = vmatprep.subr.mxu0 0.0
        %1623 = vmatpush2.msra.mxu0 %v1251
        %1624 = vmatprep.subr.mxu0 0.0
        %1625 = vmatpush2.msra.mxu0 %v1250
        %1626 = vmatprep.subr.mxu0 0.0
        %1627 = vmatpush2.msra.mxu0 %v1249
        %1628 = vmatprep.subr.mxu0 0.0
        %1629 = vmatpush2.msra.mxu0 %v1248
        %1630 = vmatprep.subr.mxu0 0.0
        %1631 = vmatpush2.msra.mxu0 %v1247
        %1632 = vmatprep.mubr.f32.mxu0 %v914
        %1633 = vmatmul.mubr.f32.gmra.mxu0 %v913
        %v1634 = vpop.f32.mrf.mxu0
        %v1635 = vadd.f32 %v1410, %v1634
        %v1636 = vpop.f32.mrf.mxu0
        %1637 = vmatprep.mubr.f32.mxu0 %v923
        %1638 = vmatmul.mubr.f32.gmra.mxu0 %v922
        %v1639 = vpop.f32.mrf.mxu0
        %v1640 = vadd.f32 %v1415, %v1639
        %v1641 = vpop.f32.mrf.mxu0
        %1642 = vmatprep.mubr.f32.mxu0 %v932
        %1643 = vmatmul.mubr.f32.gmra.mxu0 %v931
        %v1644 = vpop.f32.mrf.mxu0
        %v1645 = vadd.f32 %v1420, %v1644
        %v1646 = vpop.f32.mrf.mxu0
        %1647 = vmatprep.mubr.f32.mxu0 %v941
        %1648 = vmatmul.mubr.f32.gmra.mxu0 %v940
        %v1649 = vpop.f32.mrf.mxu0
        %v1650 = vadd.f32 %v1425, %v1649
        %v1651 = vpop.f32.mrf.mxu0
        %1652 = vmatprep.mubr.f32.mxu0 %v950
        %1653 = vmatmul.mubr.f32.gmra.mxu0 %v949
        %v1654 = vpop.f32.mrf.mxu0
        %v1655 = vadd.f32 %v1430, %v1654
        %v1656 = vpop.f32.mrf.mxu0
        %1657 = vmatprep.mubr.f32.mxu0 %v959
        %1658 = vmatmul.mubr.f32.gmra.mxu0 %v958
        %v1659 = vpop.f32.mrf.mxu0
        %v1660 = vadd.f32 %v1435, %v1659
        %v1661 = vpop.f32.mrf.mxu0
        %1662 = vmatprep.mubr.f32.mxu0 %v968
        %1663 = vmatmul.mubr.f32.gmra.mxu0 %v967
        %v1664 = vpop.f32.mrf.mxu0
        %v1665 = vadd.f32 %v1440, %v1664
        %v1666 = vpop.f32.mrf.mxu0
        %1667 = vmatprep.mubr.f32.mxu0 %v977
        %1668 = vmatmul.mubr.f32.gmra.mxu0 %v976
        %v1669 = vpop.f32.mrf.mxu0
        %v1670 = vadd.f32 %v1445, %v1669
        %v1671 = vpop.f32.mrf.mxu0
        %1672 = vmatprep.mubr.f32.mxu0 %v986
        %1673 = vmatmul.mubr.f32.gmra.mxu0 %v985
        %v1674 = vpop.f32.mrf.mxu0
        %v1675 = vadd.f32 %v1450, %v1674
        %v1676 = vpop.f32.mrf.mxu0
        %1677 = vmatprep.mubr.f32.mxu0 %v995
        %1678 = vmatmul.mubr.f32.gmra.mxu0 %v994
        %v1679 = vpop.f32.mrf.mxu0
        %v1680 = vadd.f32 %v1455, %v1679
        %v1681 = vpop.f32.mrf.mxu0
        %1682 = vmatprep.mubr.f32.mxu0 %v1004
        %1683 = vmatmul.mubr.f32.gmra.mxu0 %v1003
        %v1684 = vpop.f32.mrf.mxu0
        %v1685 = vadd.f32 %v1460, %v1684
        %v1686 = vpop.f32.mrf.mxu0
        %1687 = vmatprep.mubr.f32.mxu0 %v1013
        %1688 = vmatmul.mubr.f32.gmra.mxu0 %v1012
        %v1689 = vpop.f32.mrf.mxu0
        %v1690 = vadd.f32 %v1465, %v1689
        %v1691 = vpop.f32.mrf.mxu0
        %1692 = vmatprep.mubr.f32.mxu0 %v1022
        %1693 = vmatmul.mubr.f32.gmra.mxu0 %v1021
        %v1694 = vpop.f32.mrf.mxu0
        %v1695 = vadd.f32 %v1470, %v1694
        %v1696 = vpop.f32.mrf.mxu0
        %1697 = vmatprep.mubr.f32.mxu0 %v1031
        %1698 = vmatmul.mubr.f32.gmra.mxu0 %v1030
        %v1699 = vpop.f32.mrf.mxu0
        %v1700 = vadd.f32 %v1475, %v1699
        %v1701 = vpop.f32.mrf.mxu0
        %1702 = vmatprep.mubr.f32.mxu0 %v1040
        %1703 = vmatmul.mubr.f32.gmra.mxu0 %v1039
        %v1704 = vpop.f32.mrf.mxu0
        %v1705 = vadd.f32 %v1480, %v1704
        %v1706 = vpop.f32.mrf.mxu0
        %1707 = vmatprep.mubr.f32.mxu0 %v1049
        %1708 = vmatmul.mubr.f32.gmra.mxu0 %v1048
        %v1709 = vpop.f32.mrf.mxu0
        %v1710 = vadd.f32 %v1485, %v1709
        %v1711 = vpop.f32.mrf.mxu0
        %1712 = vmatprep.mubr.f32.mxu0 %v1058
        %1713 = vmatmul.mubr.f32.gmra.mxu0 %v1057
        %v1714 = vpop.f32.mrf.mxu0
        %v1715 = vadd.f32 %v1490, %v1714
        %v1716 = vpop.f32.mrf.mxu0
        %1717 = vmatprep.mubr.f32.mxu0 %v1067
        %1718 = vmatmul.mubr.f32.gmra.mxu0 %v1066
        %v1719 = vpop.f32.mrf.mxu0
        %v1720 = vadd.f32 %v1495, %v1719
        %v1721 = vpop.f32.mrf.mxu0
        %1722 = vmatprep.mubr.f32.mxu0 %v1076
        %1723 = vmatmul.mubr.f32.gmra.mxu0 %v1075
        %v1724 = vpop.f32.mrf.mxu0
        %v1725 = vadd.f32 %v1500, %v1724
        %v1726 = vpop.f32.mrf.mxu0
        %1727 = vmatprep.mubr.f32.mxu0 %v1085
        %1728 = vmatmul.mubr.f32.gmra.mxu0 %v1084
        %v1729 = vpop.f32.mrf.mxu0
        %v1730 = vadd.f32 %v1505, %v1729
        %v1731 = vpop.f32.mrf.mxu0
        %1732 = vmatprep.mubr.f32.mxu0 %v1094
        %1733 = vmatmul.mubr.f32.gmra.mxu0 %v1093
        %v1734 = vpop.f32.mrf.mxu0
        %v1735 = vadd.f32 %v1510, %v1734
        %v1736 = vpop.f32.mrf.mxu0
        %1737 = vmatprep.mubr.f32.mxu0 %v1103
        %1738 = vmatmul.mubr.f32.gmra.mxu0 %v1102
        %v1739 = vpop.f32.mrf.mxu0
        %v1740 = vadd.f32 %v1515, %v1739
        %v1741 = vpop.f32.mrf.mxu0
        %1742 = vmatprep.mubr.f32.mxu0 %v1112
        %1743 = vmatmul.mubr.f32.gmra.mxu0 %v1111
        %v1744 = vpop.f32.mrf.mxu0
        %v1745 = vadd.f32 %v1520, %v1744
        %v1746 = vpop.f32.mrf.mxu0
        %1747 = vmatprep.mubr.f32.mxu0 %v1121
        %1748 = vmatmul.mubr.f32.gmra.mxu0 %v1120
        %v1749 = vpop.f32.mrf.mxu0
        %v1750 = vadd.f32 %v1525, %v1749
        %v1751 = vpop.f32.mrf.mxu0
        %1752 = vmatprep.mubr.f32.mxu0 %v1130
        %1753 = vmatmul.mubr.f32.gmra.mxu0 %v1129
        %v1754 = vpop.f32.mrf.mxu0
        %v1755 = vadd.f32 %v1530, %v1754
        %v1756 = vpop.f32.mrf.mxu0
        %1757 = vmatprep.mubr.f32.mxu0 %v1139
        %1758 = vmatmul.mubr.f32.gmra.mxu0 %v1138
        %v1759 = vpop.f32.mrf.mxu0
        %v1760 = vadd.f32 %v1535, %v1759
        %v1761 = vpop.f32.mrf.mxu0
        %1762 = vmatprep.mubr.f32.mxu0 %v1148
        %1763 = vmatmul.mubr.f32.gmra.mxu0 %v1147
        %v1764 = vpop.f32.mrf.mxu0
        %v1765 = vadd.f32 %v1540, %v1764
        %v1766 = vpop.f32.mrf.mxu0
        %1767 = vmatprep.mubr.f32.mxu0 %v1157
        %1768 = vmatmul.mubr.f32.gmra.mxu0 %v1156
        %v1769 = vpop.f32.mrf.mxu0
        %v1770 = vadd.f32 %v1545, %v1769
        %v1771 = vpop.f32.mrf.mxu0
        %1772 = vmatprep.mubr.f32.mxu0 %v1166
        %1773 = vmatmul.mubr.f32.gmra.mxu0 %v1165
        %v1774 = vpop.f32.mrf.mxu0
        %v1775 = vadd.f32 %v1550, %v1774
        %v1776 = vpop.f32.mrf.mxu0
        %1777 = vmatprep.mubr.f32.mxu0 %v1175
        %1778 = vmatmul.mubr.f32.gmra.mxu0 %v1174
        %v1779 = vpop.f32.mrf.mxu0
        %v1780 = vadd.f32 %v1555, %v1779
        %v1781 = vpop.f32.mrf.mxu0
        %1782 = vmatprep.mubr.f32.mxu0 %v1184
        %1783 = vmatmul.mubr.f32.gmra.mxu0 %v1183
        %v1784 = vpop.f32.mrf.mxu0
        %v1785 = vadd.f32 %v1560, %v1784
        %v1786 = vpop.f32.mrf.mxu0
        %1787 = vmatprep.mubr.f32.mxu0 %v1193
        %1788 = vmatmul.mubr.f32.gmra.mxu0 %v1192
        %v1789 = vpop.f32.mrf.mxu0
        %v1790 = vadd.f32 %v1565, %v1789
        %v1791 = vpop.f32.mrf.mxu0
        %1792 = vdwg.mxu0
        %1793 = vmatprep.subr.mxu0 0.0
        %1794 = vmatpush1.msra.mxu0 %v1278
        %1795 = vmatprep.subr.mxu0 0.0
        %1796 = vmatpush1.msra.mxu0 %v1277
        %1797 = vmatprep.subr.mxu0 0.0
        %1798 = vmatpush1.msra.mxu0 %v1276
        %1799 = vmatprep.subr.mxu0 0.0
        %1800 = vmatpush1.msra.mxu0 %v1275
        %1801 = vmatprep.subr.mxu0 0.0
        %1802 = vmatpush1.msra.mxu0 %v1274
        %1803 = vmatprep.subr.mxu0 0.0
        %1804 = vmatpush1.msra.mxu0 %v1273
        %1805 = vmatprep.subr.mxu0 0.0
        %1806 = vmatpush1.msra.mxu0 %v1272
        %1807 = vmatprep.subr.mxu0 0.0
        %1808 = vmatpush1.msra.mxu0 %v1271
        %1809 = vmatprep.subr.mxu0 0.0
        %1810 = vmatpush1.msra.mxu0 %v1270
        %1811 = vmatprep.subr.mxu0 0.0
        %1812 = vmatpush1.msra.mxu0 %v1269
        %1813 = vmatprep.subr.mxu0 0.0
        %1814 = vmatpush1.msra.mxu0 %v1268
        %1815 = vmatprep.subr.mxu0 0.0
        %1816 = vmatpush1.msra.mxu0 %v1267
        %1817 = vmatprep.subr.mxu0 0.0
        %1818 = vmatpush1.msra.mxu0 %v1266
        %1819 = vmatprep.subr.mxu0 0.0
        %1820 = vmatpush1.msra.mxu0 %v1265
        %1821 = vmatprep.subr.mxu0 0.0
        %1822 = vmatpush1.msra.mxu0 %v1264
        %1823 = vmatprep.subr.mxu0 0.0
        %1824 = vmatpush1.msra.mxu0 %v1263
        %1825 = vmatprep.subr.mxu0 0.0
        %1826 = vmatpush2.msra.mxu0 %v1294
        %1827 = vmatprep.subr.mxu0 0.0
        %1828 = vmatpush2.msra.mxu0 %v1293
        %1829 = vmatprep.subr.mxu0 0.0
        %1830 = vmatpush2.msra.mxu0 %v1292
        %1831 = vmatprep.subr.mxu0 0.0
        %1832 = vmatpush2.msra.mxu0 %v1291
        %1833 = vmatprep.subr.mxu0 0.0
        %1834 = vmatpush2.msra.mxu0 %v1290
        %1835 = vmatprep.subr.mxu0 0.0
        %1836 = vmatpush2.msra.mxu0 %v1289
        %1837 = vmatprep.subr.mxu0 0.0
        %1838 = vmatpush2.msra.mxu0 %v1288
        %1839 = vmatprep.subr.mxu0 0.0
        %1840 = vmatpush2.msra.mxu0 %v1287
        %1841 = vmatprep.subr.mxu0 0.0
        %1842 = vmatpush2.msra.mxu0 %v1286
        %1843 = vmatprep.subr.mxu0 0.0
        %1844 = vmatpush2.msra.mxu0 %v1285
        %1845 = vmatprep.subr.mxu0 0.0
        %1846 = vmatpush2.msra.mxu0 %v1284
        %1847 = vmatprep.subr.mxu0 0.0
        %1848 = vmatpush2.msra.mxu0 %v1283
        %1849 = vmatprep.subr.mxu0 0.0
        %1850 = vmatpush2.msra.mxu0 %v1282
        %1851 = vmatprep.subr.mxu0 0.0
        %1852 = vmatpush2.msra.mxu0 %v1281
        %1853 = vmatprep.subr.mxu0 0.0
        %1854 = vmatpush2.msra.mxu0 %v1280
        %1855 = vmatprep.subr.mxu0 0.0
        %1856 = vmatpush2.msra.mxu0 %v1279
        %1857 = vmatprep.mubr.f32.mxu0 %v916
        %1858 = vmatmul.mubr.f32.gmra.mxu0 %v915
        %v1859 = vpop.f32.mrf.mxu0
        %v1860 = vadd.f32 %v1635, %v1859
        %v1861 = vpop.f32.mrf.mxu0
        %1862 = vmatprep.mubr.f32.mxu0 %v925
        %1863 = vmatmul.mubr.f32.gmra.mxu0 %v924
        %v1864 = vpop.f32.mrf.mxu0
        %v1865 = vadd.f32 %v1640, %v1864
        %v1866 = vpop.f32.mrf.mxu0
        %1867 = vmatprep.mubr.f32.mxu0 %v934
        %1868 = vmatmul.mubr.f32.gmra.mxu0 %v933
        %v1869 = vpop.f32.mrf.mxu0
        %v1870 = vadd.f32 %v1645, %v1869
        %v1871 = vpop.f32.mrf.mxu0
        %1872 = vmatprep.mubr.f32.mxu0 %v943
        %1873 = vmatmul.mubr.f32.gmra.mxu0 %v942
        %v1874 = vpop.f32.mrf.mxu0
        %v1875 = vadd.f32 %v1650, %v1874
        %v1876 = vpop.f32.mrf.mxu0
        %1877 = vmatprep.mubr.f32.mxu0 %v952
        %1878 = vmatmul.mubr.f32.gmra.mxu0 %v951
        %v1879 = vpop.f32.mrf.mxu0
        %v1880 = vadd.f32 %v1655, %v1879
        %v1881 = vpop.f32.mrf.mxu0
        %1882 = vmatprep.mubr.f32.mxu0 %v961
        %1883 = vmatmul.mubr.f32.gmra.mxu0 %v960
        %v1884 = vpop.f32.mrf.mxu0
        %v1885 = vadd.f32 %v1660, %v1884
        %v1886 = vpop.f32.mrf.mxu0
        %1887 = vmatprep.mubr.f32.mxu0 %v970
        %1888 = vmatmul.mubr.f32.gmra.mxu0 %v969
        %v1889 = vpop.f32.mrf.mxu0
        %v1890 = vadd.f32 %v1665, %v1889
        %v1891 = vpop.f32.mrf.mxu0
        %1892 = vmatprep.mubr.f32.mxu0 %v979
        %1893 = vmatmul.mubr.f32.gmra.mxu0 %v978
        %v1894 = vpop.f32.mrf.mxu0
        %v1895 = vadd.f32 %v1670, %v1894
        %v1896 = vpop.f32.mrf.mxu0
        %1897 = vmatprep.mubr.f32.mxu0 %v988
        %1898 = vmatmul.mubr.f32.gmra.mxu0 %v987
        %v1899 = vpop.f32.mrf.mxu0
        %v1900 = vadd.f32 %v1675, %v1899
        %v1901 = vpop.f32.mrf.mxu0
        %1902 = vmatprep.mubr.f32.mxu0 %v997
        %1903 = vmatmul.mubr.f32.gmra.mxu0 %v996
        %v1904 = vpop.f32.mrf.mxu0
        %v1905 = vadd.f32 %v1680, %v1904
        %v1906 = vpop.f32.mrf.mxu0
        %1907 = vmatprep.mubr.f32.mxu0 %v1006
        %1908 = vmatmul.mubr.f32.gmra.mxu0 %v1005
        %v1909 = vpop.f32.mrf.mxu0
        %v1910 = vadd.f32 %v1685, %v1909
        %v1911 = vpop.f32.mrf.mxu0
        %1912 = vmatprep.mubr.f32.mxu0 %v1015
        %1913 = vmatmul.mubr.f32.gmra.mxu0 %v1014
        %v1914 = vpop.f32.mrf.mxu0
        %v1915 = vadd.f32 %v1690, %v1914
        %v1916 = vpop.f32.mrf.mxu0
        %1917 = vmatprep.mubr.f32.mxu0 %v1024
        %1918 = vmatmul.mubr.f32.gmra.mxu0 %v1023
        %v1919 = vpop.f32.mrf.mxu0
        %v1920 = vadd.f32 %v1695, %v1919
        %v1921 = vpop.f32.mrf.mxu0
        %1922 = vmatprep.mubr.f32.mxu0 %v1033
        %1923 = vmatmul.mubr.f32.gmra.mxu0 %v1032
        %v1924 = vpop.f32.mrf.mxu0
        %v1925 = vadd.f32 %v1700, %v1924
        %v1926 = vpop.f32.mrf.mxu0
        %1927 = vmatprep.mubr.f32.mxu0 %v1042
        %1928 = vmatmul.mubr.f32.gmra.mxu0 %v1041
        %v1929 = vpop.f32.mrf.mxu0
        %v1930 = vadd.f32 %v1705, %v1929
        %v1931 = vpop.f32.mrf.mxu0
        %1932 = vmatprep.mubr.f32.mxu0 %v1051
        %1933 = vmatmul.mubr.f32.gmra.mxu0 %v1050
        %v1934 = vpop.f32.mrf.mxu0
        %v1935 = vadd.f32 %v1710, %v1934
        %v1936 = vpop.f32.mrf.mxu0
        %1937 = vmatprep.mubr.f32.mxu0 %v1060
        %1938 = vmatmul.mubr.f32.gmra.mxu0 %v1059
        %v1939 = vpop.f32.mrf.mxu0
        %v1940 = vadd.f32 %v1715, %v1939
        %v1941 = vpop.f32.mrf.mxu0
        %1942 = vmatprep.mubr.f32.mxu0 %v1069
        %1943 = vmatmul.mubr.f32.gmra.mxu0 %v1068
        %v1944 = vpop.f32.mrf.mxu0
        %v1945 = vadd.f32 %v1720, %v1944
        %v1946 = vpop.f32.mrf.mxu0
        %1947 = vmatprep.mubr.f32.mxu0 %v1078
        %1948 = vmatmul.mubr.f32.gmra.mxu0 %v1077
        %v1949 = vpop.f32.mrf.mxu0
        %v1950 = vadd.f32 %v1725, %v1949
        %v1951 = vpop.f32.mrf.mxu0
        %1952 = vmatprep.mubr.f32.mxu0 %v1087
        %1953 = vmatmul.mubr.f32.gmra.mxu0 %v1086
        %v1954 = vpop.f32.mrf.mxu0
        %v1955 = vadd.f32 %v1730, %v1954
        %v1956 = vpop.f32.mrf.mxu0
        %1957 = vmatprep.mubr.f32.mxu0 %v1096
        %1958 = vmatmul.mubr.f32.gmra.mxu0 %v1095
        %v1959 = vpop.f32.mrf.mxu0
        %v1960 = vadd.f32 %v1735, %v1959
        %v1961 = vpop.f32.mrf.mxu0
        %1962 = vmatprep.mubr.f32.mxu0 %v1105
        %1963 = vmatmul.mubr.f32.gmra.mxu0 %v1104
        %v1964 = vpop.f32.mrf.mxu0
        %v1965 = vadd.f32 %v1740, %v1964
        %v1966 = vpop.f32.mrf.mxu0
        %1967 = vmatprep.mubr.f32.mxu0 %v1114
        %1968 = vmatmul.mubr.f32.gmra.mxu0 %v1113
        %v1969 = vpop.f32.mrf.mxu0
        %v1970 = vadd.f32 %v1745, %v1969
        %v1971 = vpop.f32.mrf.mxu0
        %1972 = vmatprep.mubr.f32.mxu0 %v1123
        %1973 = vmatmul.mubr.f32.gmra.mxu0 %v1122
        %v1974 = vpop.f32.mrf.mxu0
        %v1975 = vadd.f32 %v1750, %v1974
        %v1976 = vpop.f32.mrf.mxu0
        %1977 = vmatprep.mubr.f32.mxu0 %v1132
        %1978 = vmatmul.mubr.f32.gmra.mxu0 %v1131
        %v1979 = vpop.f32.mrf.mxu0
        %v1980 = vadd.f32 %v1755, %v1979
        %v1981 = vpop.f32.mrf.mxu0
        %1982 = vmatprep.mubr.f32.mxu0 %v1141
        %1983 = vmatmul.mubr.f32.gmra.mxu0 %v1140
        %v1984 = vpop.f32.mrf.mxu0
        %v1985 = vadd.f32 %v1760, %v1984
        %v1986 = vpop.f32.mrf.mxu0
        %1987 = vmatprep.mubr.f32.mxu0 %v1150
        %1988 = vmatmul.mubr.f32.gmra.mxu0 %v1149
        %v1989 = vpop.f32.mrf.mxu0
        %v1990 = vadd.f32 %v1765, %v1989
        %v1991 = vpop.f32.mrf.mxu0
        %1992 = vmatprep.mubr.f32.mxu0 %v1159
        %1993 = vmatmul.mubr.f32.gmra.mxu0 %v1158
        %v1994 = vpop.f32.mrf.mxu0
        %v1995 = vadd.f32 %v1770, %v1994
        %v1996 = vpop.f32.mrf.mxu0
        %1997 = vmatprep.mubr.f32.mxu0 %v1168
        %1998 = vmatmul.mubr.f32.gmra.mxu0 %v1167
        %v1999 = vpop.f32.mrf.mxu0
        %v2000 = vadd.f32 %v1775, %v1999
        %v2001 = vpop.f32.mrf.mxu0
        %2002 = vmatprep.mubr.f32.mxu0 %v1177
        %2003 = vmatmul.mubr.f32.gmra.mxu0 %v1176
        %v2004 = vpop.f32.mrf.mxu0
        %v2005 = vadd.f32 %v1780, %v2004
        %v2006 = vpop.f32.mrf.mxu0
        %2007 = vmatprep.mubr.f32.mxu0 %v1186
        %2008 = vmatmul.mubr.f32.gmra.mxu0 %v1185
        %v2009 = vpop.f32.mrf.mxu0
        %v2010 = vadd.f32 %v1785, %v2009
        %v2011 = vpop.f32.mrf.mxu0
        %2012 = vmatprep.mubr.f32.mxu0 %v1195
        %2013 = vmatmul.mubr.f32.gmra.mxu0 %v1194
        %v2014 = vpop.f32.mrf.mxu0
        %v2015 = vadd.f32 %v1790, %v2014
        %v2016 = vpop.f32.mrf.mxu0
        %2017 = vdwg.mxu0
        %2018 = vmatprep.subr.mxu0 0.0
        %2019 = vmatpush1.msra.mxu0 %v1310
        %2020 = vmatprep.subr.mxu0 0.0
        %2021 = vmatpush1.msra.mxu0 %v1309
        %2022 = vmatprep.subr.mxu0 0.0
        %2023 = vmatpush1.msra.mxu0 %v1308
        %2024 = vmatprep.subr.mxu0 0.0
        %2025 = vmatpush1.msra.mxu0 %v1307
        %2026 = vmatprep.subr.mxu0 0.0
        %2027 = vmatpush1.msra.mxu0 %v1306
        %2028 = vmatprep.subr.mxu0 0.0
        %2029 = vmatpush1.msra.mxu0 %v1305
        %2030 = vmatprep.subr.mxu0 0.0
        %2031 = vmatpush1.msra.mxu0 %v1304
        %2032 = vmatprep.subr.mxu0 0.0
        %2033 = vmatpush1.msra.mxu0 %v1303
        %2034 = vmatprep.subr.mxu0 0.0
        %2035 = vmatpush1.msra.mxu0 %v1302
        %2036 = vmatprep.subr.mxu0 0.0
        %2037 = vmatpush1.msra.mxu0 %v1301
        %2038 = vmatprep.subr.mxu0 0.0
        %2039 = vmatpush1.msra.mxu0 %v1300
        %2040 = vmatprep.subr.mxu0 0.0
        %2041 = vmatpush1.msra.mxu0 %v1299
        %2042 = vmatprep.subr.mxu0 0.0
        %2043 = vmatpush1.msra.mxu0 %v1298
        %2044 = vmatprep.subr.mxu0 0.0
        %2045 = vmatpush1.msra.mxu0 %v1297
        %2046 = vmatprep.subr.mxu0 0.0
        %2047 = vmatpush1.msra.mxu0 %v1296
        %2048 = vmatprep.subr.mxu0 0.0
        %2049 = vmatpush1.msra.mxu0 %v1295
        %2050 = vmatprep.subr.mxu0 0.0
        %2051 = vmatpush2.msra.mxu0 %v1326
        %2052 = vmatprep.subr.mxu0 0.0
        %2053 = vmatpush2.msra.mxu0 %v1325
        %2054 = vmatprep.subr.mxu0 0.0
        %2055 = vmatpush2.msra.mxu0 %v1324
        %2056 = vmatprep.subr.mxu0 0.0
        %2057 = vmatpush2.msra.mxu0 %v1323
        %2058 = vmatprep.subr.mxu0 0.0
        %2059 = vmatpush2.msra.mxu0 %v1322
        %2060 = vmatprep.subr.mxu0 0.0
        %2061 = vmatpush2.msra.mxu0 %v1321
        %2062 = vmatprep.subr.mxu0 0.0
        %2063 = vmatpush2.msra.mxu0 %v1320
        %2064 = vmatprep.subr.mxu0 0.0
        %2065 = vmatpush2.msra.mxu0 %v1319
        %2066 = vmatprep.subr.mxu0 0.0
        %2067 = vmatpush2.msra.mxu0 %v1318
        %2068 = vmatprep.subr.mxu0 0.0
        %2069 = vmatpush2.msra.mxu0 %v1317
        %2070 = vmatprep.subr.mxu0 0.0
        %2071 = vmatpush2.msra.mxu0 %v1316
        %2072 = vmatprep.subr.mxu0 0.0
        %2073 = vmatpush2.msra.mxu0 %v1315
        %2074 = vmatprep.subr.mxu0 0.0
        %2075 = vmatpush2.msra.mxu0 %v1314
        %2076 = vmatprep.subr.mxu0 0.0
        %2077 = vmatpush2.msra.mxu0 %v1313
        %2078 = vmatprep.subr.mxu0 0.0
        %2079 = vmatpush2.msra.mxu0 %v1312
        %2080 = vmatprep.subr.mxu0 0.0
        %2081 = vmatpush2.msra.mxu0 %v1311
        %2082 = vmatprep.mubr.f32.mxu0 %v918
        %2083 = vmatmul.mubr.f32.gmra.mxu0 %v917
        %v2084 = vpop.f32.mrf.mxu0
        %v2085 = vadd.f32 %v1860, %v2084
        %v2086 = vpop.f32.mrf.mxu0
        %2087 = vmatprep.mubr.f32.mxu0 %v927
        %2088 = vmatmul.mubr.f32.gmra.mxu0 %v926
        %v2089 = vpop.f32.mrf.mxu0
        %v2090 = vadd.f32 %v1865, %v2089
        %v2091 = vpop.f32.mrf.mxu0
        %2092 = vmatprep.mubr.f32.mxu0 %v936
        %2093 = vmatmul.mubr.f32.gmra.mxu0 %v935
        %v2094 = vpop.f32.mrf.mxu0
        %v2095 = vadd.f32 %v1870, %v2094
        %v2096 = vpop.f32.mrf.mxu0
        %2097 = vmatprep.mubr.f32.mxu0 %v945
        %2098 = vmatmul.mubr.f32.gmra.mxu0 %v944
        %v2099 = vpop.f32.mrf.mxu0
        %v2100 = vadd.f32 %v1875, %v2099
        %v2101 = vpop.f32.mrf.mxu0
        %2102 = vmatprep.mubr.f32.mxu0 %v954
        %2103 = vmatmul.mubr.f32.gmra.mxu0 %v953
        %v2104 = vpop.f32.mrf.mxu0
        %v2105 = vadd.f32 %v1880, %v2104
        %v2106 = vpop.f32.mrf.mxu0
        %2107 = vmatprep.mubr.f32.mxu0 %v963
        %2108 = vmatmul.mubr.f32.gmra.mxu0 %v962
        %v2109 = vpop.f32.mrf.mxu0
        %v2110 = vadd.f32 %v1885, %v2109
        %v2111 = vpop.f32.mrf.mxu0
        %2112 = vmatprep.mubr.f32.mxu0 %v972
        %2113 = vmatmul.mubr.f32.gmra.mxu0 %v971
        %v2114 = vpop.f32.mrf.mxu0
        %v2115 = vadd.f32 %v1890, %v2114
        %v2116 = vpop.f32.mrf.mxu0
        %2117 = vmatprep.mubr.f32.mxu0 %v981
        %2118 = vmatmul.mubr.f32.gmra.mxu0 %v980
        %v2119 = vpop.f32.mrf.mxu0
        %v2120 = vadd.f32 %v1895, %v2119
        %v2121 = vpop.f32.mrf.mxu0
        %2122 = vmatprep.mubr.f32.mxu0 %v990
        %2123 = vmatmul.mubr.f32.gmra.mxu0 %v989
        %v2124 = vpop.f32.mrf.mxu0
        %v2125 = vadd.f32 %v1900, %v2124
        %v2126 = vpop.f32.mrf.mxu0
        %2127 = vmatprep.mubr.f32.mxu0 %v999
        %2128 = vmatmul.mubr.f32.gmra.mxu0 %v998
        %v2129 = vpop.f32.mrf.mxu0
        %v2130 = vadd.f32 %v1905, %v2129
        %v2131 = vpop.f32.mrf.mxu0
        %2132 = vmatprep.mubr.f32.mxu0 %v1008
        %2133 = vmatmul.mubr.f32.gmra.mxu0 %v1007
        %v2134 = vpop.f32.mrf.mxu0
        %v2135 = vadd.f32 %v1910, %v2134
        %v2136 = vpop.f32.mrf.mxu0
        %2137 = vmatprep.mubr.f32.mxu0 %v1017
        %2138 = vmatmul.mubr.f32.gmra.mxu0 %v1016
        %v2139 = vpop.f32.mrf.mxu0
        %v2140 = vadd.f32 %v1915, %v2139
        %v2141 = vpop.f32.mrf.mxu0
        %2142 = vmatprep.mubr.f32.mxu0 %v1026
        %2143 = vmatmul.mubr.f32.gmra.mxu0 %v1025
        %v2144 = vpop.f32.mrf.mxu0
        %v2145 = vadd.f32 %v1920, %v2144
        %v2146 = vpop.f32.mrf.mxu0
        %2147 = vmatprep.mubr.f32.mxu0 %v1035
        %2148 = vmatmul.mubr.f32.gmra.mxu0 %v1034
        %v2149 = vpop.f32.mrf.mxu0
        %v2150 = vadd.f32 %v1925, %v2149
        %v2151 = vpop.f32.mrf.mxu0
        %2152 = vmatprep.mubr.f32.mxu0 %v1044
        %2153 = vmatmul.mubr.f32.gmra.mxu0 %v1043
        %v2154 = vpop.f32.mrf.mxu0
        %v2155 = vadd.f32 %v1930, %v2154
        %v2156 = vpop.f32.mrf.mxu0
        %2157 = vmatprep.mubr.f32.mxu0 %v1053
        %2158 = vmatmul.mubr.f32.gmra.mxu0 %v1052
        %v2159 = vpop.f32.mrf.mxu0
        %v2160 = vadd.f32 %v1935, %v2159
        %v2161 = vpop.f32.mrf.mxu0
        %2162 = vmatprep.mubr.f32.mxu0 %v1062
        %2163 = vmatmul.mubr.f32.gmra.mxu0 %v1061
        %v2164 = vpop.f32.mrf.mxu0
        %v2165 = vadd.f32 %v1940, %v2164
        %v2166 = vpop.f32.mrf.mxu0
        %2167 = vmatprep.mubr.f32.mxu0 %v1071
        %2168 = vmatmul.mubr.f32.gmra.mxu0 %v1070
        %v2169 = vpop.f32.mrf.mxu0
        %v2170 = vadd.f32 %v1945, %v2169
        %v2171 = vpop.f32.mrf.mxu0
        %2172 = vmatprep.mubr.f32.mxu0 %v1080
        %2173 = vmatmul.mubr.f32.gmra.mxu0 %v1079
        %v2174 = vpop.f32.mrf.mxu0
        %v2175 = vadd.f32 %v1950, %v2174
        %v2176 = vpop.f32.mrf.mxu0
        %2177 = vmatprep.mubr.f32.mxu0 %v1089
        %2178 = vmatmul.mubr.f32.gmra.mxu0 %v1088
        %v2179 = vpop.f32.mrf.mxu0
        %v2180 = vadd.f32 %v1955, %v2179
        %v2181 = vpop.f32.mrf.mxu0
        %2182 = vmatprep.mubr.f32.mxu0 %v1098
        %2183 = vmatmul.mubr.f32.gmra.mxu0 %v1097
        %v2184 = vpop.f32.mrf.mxu0
        %v2185 = vadd.f32 %v1960, %v2184
        %v2186 = vpop.f32.mrf.mxu0
        %2187 = vmatprep.mubr.f32.mxu0 %v1107
        %2188 = vmatmul.mubr.f32.gmra.mxu0 %v1106
        %v2189 = vpop.f32.mrf.mxu0
        %v2190 = vadd.f32 %v1965, %v2189
        %v2191 = vpop.f32.mrf.mxu0
        %2192 = vmatprep.mubr.f32.mxu0 %v1116
        %2193 = vmatmul.mubr.f32.gmra.mxu0 %v1115
        %v2194 = vpop.f32.mrf.mxu0
        %v2195 = vadd.f32 %v1970, %v2194
        %v2196 = vpop.f32.mrf.mxu0
        %2197 = vmatprep.mubr.f32.mxu0 %v1125
        %2198 = vmatmul.mubr.f32.gmra.mxu0 %v1124
        %v2199 = vpop.f32.mrf.mxu0
        %v2200 = vadd.f32 %v1975, %v2199
        %v2201 = vpop.f32.mrf.mxu0
        %2202 = vmatprep.mubr.f32.mxu0 %v1134
        %2203 = vmatmul.mubr.f32.gmra.mxu0 %v1133
        %v2204 = vpop.f32.mrf.mxu0
        %v2205 = vadd.f32 %v1980, %v2204
        %v2206 = vpop.f32.mrf.mxu0
        %2207 = vmatprep.mubr.f32.mxu0 %v1143
        %2208 = vmatmul.mubr.f32.gmra.mxu0 %v1142
        %v2209 = vpop.f32.mrf.mxu0
        %v2210 = vadd.f32 %v1985, %v2209
        %v2211 = vpop.f32.mrf.mxu0
        %2212 = vmatprep.mubr.f32.mxu0 %v1152
        %2213 = vmatmul.mubr.f32.gmra.mxu0 %v1151
        %v2214 = vpop.f32.mrf.mxu0
        %v2215 = vadd.f32 %v1990, %v2214
        %v2216 = vpop.f32.mrf.mxu0
        %2217 = vmatprep.mubr.f32.mxu0 %v1161
        %2218 = vmatmul.mubr.f32.gmra.mxu0 %v1160
        %v2219 = vpop.f32.mrf.mxu0
        %v2220 = vadd.f32 %v1995, %v2219
        %v2221 = vpop.f32.mrf.mxu0
        %2222 = vmatprep.mubr.f32.mxu0 %v1170
        %2223 = vmatmul.mubr.f32.gmra.mxu0 %v1169
        %v2224 = vpop.f32.mrf.mxu0
        %v2225 = vadd.f32 %v2000, %v2224
        %v2226 = vpop.f32.mrf.mxu0
        %2227 = vmatprep.mubr.f32.mxu0 %v1179
        %2228 = vmatmul.mubr.f32.gmra.mxu0 %v1178
        %v2229 = vpop.f32.mrf.mxu0
        %v2230 = vadd.f32 %v2005, %v2229
        %v2231 = vpop.f32.mrf.mxu0
        %2232 = vmatprep.mubr.f32.mxu0 %v1188
        %2233 = vmatmul.mubr.f32.gmra.mxu0 %v1187
        %v2234 = vpop.f32.mrf.mxu0
        %v2235 = vadd.f32 %v2010, %v2234
        %v2236 = vpop.f32.mrf.mxu0
        %2237 = vmatprep.mubr.f32.mxu0 %v1197
        %2238 = vmatmul.mubr.f32.gmra.mxu0 %v1196
        %v2239 = vpop.f32.mrf.mxu0
        %v2240 = vadd.f32 %v2015, %v2239
        %v2241 = vpop.f32.mrf.mxu0
        %2242 = vdwg.mxu0
        %2243 = vmatprep.subr.mxu0 0.0
        %2244 = vmatpush1.msra.mxu0 %v1342
        %2245 = vmatprep.subr.mxu0 0.0
        %2246 = vmatpush1.msra.mxu0 %v1341
        %2247 = vmatprep.subr.mxu0 0.0
        %2248 = vmatpush1.msra.mxu0 %v1340
        %2249 = vmatprep.subr.mxu0 0.0
        %2250 = vmatpush1.msra.mxu0 %v1339
        %2251 = vmatprep.subr.mxu0 0.0
        %2252 = vmatpush1.msra.mxu0 %v1338
        %2253 = vmatprep.subr.mxu0 0.0
        %2254 = vmatpush1.msra.mxu0 %v1337
        %2255 = vmatprep.subr.mxu0 0.0
        %2256 = vmatpush1.msra.mxu0 %v1336
        %2257 = vmatprep.subr.mxu0 0.0
        %2258 = vmatpush1.msra.mxu0 %v1335
        %2259 = vmatprep.subr.mxu0 0.0
        %2260 = vmatpush1.msra.mxu0 %v1334
        %2261 = vmatprep.subr.mxu0 0.0
        %2262 = vmatpush1.msra.mxu0 %v1333
        %2263 = vmatprep.subr.mxu0 0.0
        %2264 = vmatpush1.msra.mxu0 %v1332
        %2265 = vmatprep.subr.mxu0 0.0
        %2266 = vmatpush1.msra.mxu0 %v1331
        %2267 = vmatprep.subr.mxu0 0.0
        %2268 = vmatpush1.msra.mxu0 %v1330
        %2269 = vmatprep.subr.mxu0 0.0
        %2270 = vmatpush1.msra.mxu0 %v1329
        %2271 = vmatprep.subr.mxu0 0.0
        %2272 = vmatpush1.msra.mxu0 %v1328
        %2273 = vmatprep.subr.mxu0 0.0
        %2274 = vmatpush1.msra.mxu0 %v1327
        %2275 = vmatprep.subr.mxu0 0.0
        %2276 = vmatpush2.msra.mxu0 0.0
        %2277 = vmatprep.subr.mxu0 0.0
        %2278 = vmatpush2.msra.mxu0 0.0
        %2279 = vmatprep.subr.mxu0 0.0
        %2280 = vmatpush2.msra.mxu0 0.0
        %2281 = vmatprep.subr.mxu0 0.0
        %2282 = vmatpush2.msra.mxu0 0.0
        %2283 = vmatprep.subr.mxu0 0.0
        %2284 = vmatpush2.msra.mxu0 0.0
        %2285 = vmatprep.subr.mxu0 0.0
        %2286 = vmatpush2.msra.mxu0 0.0
        %2287 = vmatprep.subr.mxu0 0.0
        %2288 = vmatpush2.msra.mxu0 0.0
        %2289 = vmatprep.subr.mxu0 0.0
        %2290 = vmatpush2.msra.mxu0 0.0
        %2291 = vmatprep.subr.mxu0 0.0
        %2292 = vmatpush2.msra.mxu0 0.0
        %2293 = vmatprep.subr.mxu0 0.0
        %2294 = vmatpush2.msra.mxu0 0.0
        %2295 = vmatprep.subr.mxu0 0.0
        %2296 = vmatpush2.msra.mxu0 0.0
        %2297 = vmatprep.subr.mxu0 0.0
        %2298 = vmatpush2.msra.mxu0 0.0
        %2299 = vmatprep.subr.mxu0 0.0
        %2300 = vmatpush2.msra.mxu0 0.0
        %2301 = vmatprep.subr.mxu0 0.0
        %2302 = vmatpush2.msra.mxu0 0.0
        %2303 = vmatprep.subr.mxu0 0.0
        %2304 = vmatpush2.msra.mxu0 0.0
        %2305 = vmatprep.subr.mxu0 0.0
        %2306 = vmatpush2.msra.mxu0 0.0
        %2307 = vmatprep.mubr.f32.mxu0 0.0
        %2308 = vmatmul.mubr.f32.gmra.mxu0 %v919
        %v2309 = vpop.f32.mrf.mxu0
        %v2310 = vadd.f32 %v2085, %v2309
        %v2311 = vpop.f32.mrf.mxu0
        %2312 = vmatprep.mubr.f32.mxu0 0.0
        %2313 = vmatmul.mubr.f32.gmra.mxu0 %v928
        %v2314 = vpop.f32.mrf.mxu0
        %v2315 = vadd.f32 %v2090, %v2314
        %v2316 = vpop.f32.mrf.mxu0
        %2317 = vmatprep.mubr.f32.mxu0 0.0
        %2318 = vmatmul.mubr.f32.gmra.mxu0 %v937
        %v2319 = vpop.f32.mrf.mxu0
        %v2320 = vadd.f32 %v2095, %v2319
        %v2321 = vpop.f32.mrf.mxu0
        %2322 = vmatprep.mubr.f32.mxu0 0.0
        %2323 = vmatmul.mubr.f32.gmra.mxu0 %v946
        %v2324 = vpop.f32.mrf.mxu0
        %v2325 = vadd.f32 %v2100, %v2324
        %v2326 = vpop.f32.mrf.mxu0
        %2327 = vmatprep.mubr.f32.mxu0 0.0
        %2328 = vmatmul.mubr.f32.gmra.mxu0 %v955
        %v2329 = vpop.f32.mrf.mxu0
        %v2330 = vadd.f32 %v2105, %v2329
        %v2331 = vpop.f32.mrf.mxu0
        %2332 = vmatprep.mubr.f32.mxu0 0.0
        %2333 = vmatmul.mubr.f32.gmra.mxu0 %v964
        %v2334 = vpop.f32.mrf.mxu0
        %v2335 = vadd.f32 %v2110, %v2334
        %v2336 = vpop.f32.mrf.mxu0
        %2337 = vmatprep.mubr.f32.mxu0 0.0
        %2338 = vmatmul.mubr.f32.gmra.mxu0 %v973
        %v2339 = vpop.f32.mrf.mxu0
        %v2340 = vadd.f32 %v2115, %v2339
        %v2341 = vpop.f32.mrf.mxu0
        %2342 = vmatprep.mubr.f32.mxu0 0.0
        %2343 = vmatmul.mubr.f32.gmra.mxu0 %v982
        %v2344 = vpop.f32.mrf.mxu0
        %v2345 = vadd.f32 %v2120, %v2344
        %v2346 = vpop.f32.mrf.mxu0
        %2347 = vmatprep.mubr.f32.mxu0 0.0
        %2348 = vmatmul.mubr.f32.gmra.mxu0 %v991
        %v2349 = vpop.f32.mrf.mxu0
        %v2350 = vadd.f32 %v2125, %v2349
        %v2351 = vpop.f32.mrf.mxu0
        %2352 = vmatprep.mubr.f32.mxu0 0.0
        %2353 = vmatmul.mubr.f32.gmra.mxu0 %v1000
        %v2354 = vpop.f32.mrf.mxu0
        %v2355 = vadd.f32 %v2130, %v2354
        %v2356 = vpop.f32.mrf.mxu0
        %2357 = vmatprep.mubr.f32.mxu0 0.0
        %2358 = vmatmul.mubr.f32.gmra.mxu0 %v1009
        %v2359 = vpop.f32.mrf.mxu0
        %v2360 = vadd.f32 %v2135, %v2359
        %v2361 = vpop.f32.mrf.mxu0
        %2362 = vmatprep.mubr.f32.mxu0 0.0
        %2363 = vmatmul.mubr.f32.gmra.mxu0 %v1018
        %v2364 = vpop.f32.mrf.mxu0
        %v2365 = vadd.f32 %v2140, %v2364
        %v2366 = vpop.f32.mrf.mxu0
        %2367 = vmatprep.mubr.f32.mxu0 0.0
        %2368 = vmatmul.mubr.f32.gmra.mxu0 %v1027
        %v2369 = vpop.f32.mrf.mxu0
        %v2370 = vadd.f32 %v2145, %v2369
        %v2371 = vpop.f32.mrf.mxu0
        %2372 = vmatprep.mubr.f32.mxu0 0.0
        %2373 = vmatmul.mubr.f32.gmra.mxu0 %v1036
        %v2374 = vpop.f32.mrf.mxu0
        %v2375 = vadd.f32 %v2150, %v2374
        %v2376 = vpop.f32.mrf.mxu0
        %2377 = vmatprep.mubr.f32.mxu0 0.0
        %2378 = vmatmul.mubr.f32.gmra.mxu0 %v1045
        %v2379 = vpop.f32.mrf.mxu0
        %v2380 = vadd.f32 %v2155, %v2379
        %v2381 = vpop.f32.mrf.mxu0
        %2382 = vmatprep.mubr.f32.mxu0 0.0
        %2383 = vmatmul.mubr.f32.gmra.mxu0 %v1054
        %v2384 = vpop.f32.mrf.mxu0
        %v2385 = vadd.f32 %v2160, %v2384
        %v2386 = vpop.f32.mrf.mxu0
        %2387 = vmatprep.mubr.f32.mxu0 0.0
        %2388 = vmatmul.mubr.f32.gmra.mxu0 %v1063
        %v2389 = vpop.f32.mrf.mxu0
        %v2390 = vadd.f32 %v2165, %v2389
        %v2391 = vpop.f32.mrf.mxu0
        %2392 = vmatprep.mubr.f32.mxu0 0.0
        %2393 = vmatmul.mubr.f32.gmra.mxu0 %v1072
        %v2394 = vpop.f32.mrf.mxu0
        %v2395 = vadd.f32 %v2170, %v2394
        %v2396 = vpop.f32.mrf.mxu0
        %2397 = vmatprep.mubr.f32.mxu0 0.0
        %2398 = vmatmul.mubr.f32.gmra.mxu0 %v1081
        %v2399 = vpop.f32.mrf.mxu0
        %v2400 = vadd.f32 %v2175, %v2399
        %v2401 = vpop.f32.mrf.mxu0
        %2402 = vmatprep.mubr.f32.mxu0 0.0
        %2403 = vmatmul.mubr.f32.gmra.mxu0 %v1090
        %v2404 = vpop.f32.mrf.mxu0
        %v2405 = vadd.f32 %v2180, %v2404
        %v2406 = vpop.f32.mrf.mxu0
        %2407 = vmatprep.mubr.f32.mxu0 0.0
        %2408 = vmatmul.mubr.f32.gmra.mxu0 %v1099
        %v2409 = vpop.f32.mrf.mxu0
        %v2410 = vadd.f32 %v2185, %v2409
        %v2411 = vpop.f32.mrf.mxu0
        %2412 = vmatprep.mubr.f32.mxu0 0.0
        %2413 = vmatmul.mubr.f32.gmra.mxu0 %v1108
        %v2414 = vpop.f32.mrf.mxu0
        %v2415 = vadd.f32 %v2190, %v2414
        %v2416 = vpop.f32.mrf.mxu0
        %2417 = vmatprep.mubr.f32.mxu0 0.0
        %2418 = vmatmul.mubr.f32.gmra.mxu0 %v1117
        %v2419 = vpop.f32.mrf.mxu0
        %v2420 = vadd.f32 %v2195, %v2419
        %v2421 = vpop.f32.mrf.mxu0
        %2422 = vmatprep.mubr.f32.mxu0 0.0
        %2423 = vmatmul.mubr.f32.gmra.mxu0 %v1126
        %v2424 = vpop.f32.mrf.mxu0
        %v2425 = vadd.f32 %v2200, %v2424
        %v2426 = vpop.f32.mrf.mxu0
        %2427 = vmatprep.mubr.f32.mxu0 0.0
        %2428 = vmatmul.mubr.f32.gmra.mxu0 %v1135
        %v2429 = vpop.f32.mrf.mxu0
        %v2430 = vadd.f32 %v2205, %v2429
        %v2431 = vpop.f32.mrf.mxu0
        %2432 = vmatprep.mubr.f32.mxu0 0.0
        %2433 = vmatmul.mubr.f32.gmra.mxu0 %v1144
        %v2434 = vpop.f32.mrf.mxu0
        %v2435 = vadd.f32 %v2210, %v2434
        %v2436 = vpop.f32.mrf.mxu0
        %2437 = vmatprep.mubr.f32.mxu0 0.0
        %2438 = vmatmul.mubr.f32.gmra.mxu0 %v1153
        %v2439 = vpop.f32.mrf.mxu0
        %v2440 = vadd.f32 %v2215, %v2439
        %v2441 = vpop.f32.mrf.mxu0
        %2442 = vmatprep.mubr.f32.mxu0 0.0
        %2443 = vmatmul.mubr.f32.gmra.mxu0 %v1162
        %v2444 = vpop.f32.mrf.mxu0
        %v2445 = vadd.f32 %v2220, %v2444
        %v2446 = vpop.f32.mrf.mxu0
        %2447 = vmatprep.mubr.f32.mxu0 0.0
        %2448 = vmatmul.mubr.f32.gmra.mxu0 %v1171
        %v2449 = vpop.f32.mrf.mxu0
        %v2450 = vadd.f32 %v2225, %v2449
        %v2451 = vpop.f32.mrf.mxu0
        %2452 = vmatprep.mubr.f32.mxu0 0.0
        %2453 = vmatmul.mubr.f32.gmra.mxu0 %v1180
        %v2454 = vpop.f32.mrf.mxu0
        %v2455 = vadd.f32 %v2230, %v2454
        %v2456 = vpop.f32.mrf.mxu0
        %2457 = vmatprep.mubr.f32.mxu0 0.0
        %2458 = vmatmul.mubr.f32.gmra.mxu0 %v1189
        %v2459 = vpop.f32.mrf.mxu0
        %v2460 = vadd.f32 %v2235, %v2459
        %v2461 = vpop.f32.mrf.mxu0
        %2462 = vmatprep.mubr.f32.mxu0 0.0
        %2463 = vmatmul.mubr.f32.gmra.mxu0 %v1198
        %v2464 = vpop.f32.mrf.mxu0
        %v2465 = vadd.f32 %v2240, %v2464
        %v2466 = vpop.f32.mrf.mxu0
        %2467 = vdwg.mxu0
        %2468 = vst [vmem:[%s207] sm:$0xff] %v2310
        %2469 = vst [vmem:[%s207 + $0x8] sm:$0xff] %v2315
        %2470 = vst [vmem:[%s207 + $0x10] sm:$0xff] %v2320
        %2471 = vst [vmem:[%s207 + $0x18] sm:$0xff] %v2325
        %2472 = vst [vmem:[%s207 + $0x20] sm:$0xff] %v2330
        %2473 = vst [vmem:[%s207 + $0x28] sm:$0xff] %v2335
        %2474 = vst [vmem:[%s207 + $0x30] sm:$0xff] %v2340
        %2475 = vst [vmem:[%s207 + $0x38] sm:$0xff] %v2345
        %2476 = vst [vmem:[%s207 + $0x40] sm:$0xff] %v2350
        %2477 = vst [vmem:[%s207 + $0x48] sm:$0xff] %v2355
        %2478 = vst [vmem:[%s207 + $0x50] sm:$0xff] %v2360
        %2479 = vst [vmem:[%s207 + $0x58] sm:$0xff] %v2365
        %2480 = vst [vmem:[%s207 + $0x60] sm:$0xff] %v2370
        %2481 = vst [vmem:[%s207 + $0x68] sm:$0xff] %v2375
        %2482 = vst [vmem:[%s207 + $0x70] sm:$0xff] %v2380
        %2483 = vst [vmem:[%s207 + $0x78] sm:$0xff] %v2385
        %2484 = vst [vmem:[%s207 + $0x80] sm:$0xff] %v2390
        %2485 = vst [vmem:[%s207 + $0x88] sm:$0xff] %v2395
        %2486 = vst [vmem:[%s207 + $0x90] sm:$0xff] %v2400
        %2487 = vst [vmem:[%s207 + $0x98] sm:$0xff] %v2405
        %2488 = vst [vmem:[%s207 + $0xa0] sm:$0xff] %v2410
        %2489 = vst [vmem:[%s207 + $0xa8] sm:$0xff] %v2415
        %2490 = vst [vmem:[%s207 + $0xb0] sm:$0xff] %v2420
        %2491 = vst [vmem:[%s207 + $0xb8] sm:$0xff] %v2425
        %2492 = vst [vmem:[%s207 + $0xc0] sm:$0xff] %v2430
        %2493 = vst [vmem:[%s207 + $0xc8] sm:$0xff] %v2435
        %2494 = vst [vmem:[%s207 + $0xd0] sm:$0xff] %v2440
        %2495 = vst [vmem:[%s207 + $0xd8] sm:$0xff] %v2445
        %2496 = vst [vmem:[%s207 + $0xe0] sm:$0xff] %v2450
        %2497 = vst [vmem:[%s207 + $0xe8] sm:$0xff] %v2455
        %2498 = vst [vmem:[%s207 + $0xf0] sm:$0xff] %v2460
        %2499 = vst [vmem:[%s207 + $0xf8] sm:$0xff] %v2465
        %v2500 = vadd.f32 %v2310, %v2315
        %v2501 = vadd.f32 %v2500, %v2320
        %v2502 = vadd.f32 %v2501, %v2325
        %v2503 = vadd.f32 %v2502, %v2330
        %v2504 = vadd.f32 %v2503, %v2335
        %v2505 = vadd.f32 %v2504, %v2340
        %v2506 = vadd.f32 %v2505, %v2345
        %v2507 = vadd.f32 %v2506, %v2350
        %v2508 = vadd.f32 %v2507, %v2355
        %v2509 = vadd.f32 %v2508, %v2360
        %v2510 = vadd.f32 %v2509, %v2365
        %v2511 = vadd.f32 %v2510, %v2370
        %v2512 = vadd.f32 %v2511, %v2375
        %v2513 = vadd.f32 %v2512, %v2380
        %v2514 = vadd.f32 %v2513, %v2385
        %v2515 = vadd.f32 %v2514, %v2390
        %v2516 = vadd.f32 %v2515, %v2395
        %v2517 = vadd.f32 %v2516, %v2400
        %v2518 = vadd.f32 %v2517, %v2405
        %v2519 = vadd.f32 %v2518, %v2410
        %v2520 = vadd.f32 %v2519, %v2415
        %v2521 = vadd.f32 %v2520, %v2420
        %v2522 = vadd.f32 %v2521, %v2425
        %v2523 = vadd.f32 %v2522, %v2430
        %v2524 = vadd.f32 %v2523, %v2435
        %v2525 = vadd.f32 %v2524, %v2440
        %v2526 = vadd.f32 %v2525, %v2445
        %v2527 = vadd.f32 %v2526, %v2450
        %v2528 = vadd.f32 %v2527, %v2455
        %v2529 = vadd.f32 %v2528, %v2460
        %v2530 = vadd.f32 %v2529, %v2465
        %v2531 = vrot.slane %v2530, 4
        %v2532 = vadd.f32 %v2530, %v2531
        %v2533 = vrot.slane %v2532, 2
        %v2534 = vadd.f32 %v2532, %v2533
        %v2535 = vrot.slane %v2534, 1
        %v2536 = vadd.f32 %v2534, %v2535
        %v2537 = vmul.f32 %v2310, %v2310
        %v2538 = vmul.f32 %v2315, %v2315
        %v2539 = vmul.f32 %v2320, %v2320
        %v2540 = vmul.f32 %v2325, %v2325
        %v2541 = vmul.f32 %v2330, %v2330
        %v2542 = vmul.f32 %v2335, %v2335
        %v2543 = vmul.f32 %v2340, %v2340
        %v2544 = vmul.f32 %v2345, %v2345
        %v2545 = vmul.f32 %v2350, %v2350
        %v2546 = vmul.f32 %v2355, %v2355
        %v2547 = vmul.f32 %v2360, %v2360
        %v2548 = vmul.f32 %v2365, %v2365
        %v2549 = vmul.f32 %v2370, %v2370
        %v2550 = vmul.f32 %v2375, %v2375
        %v2551 = vmul.f32 %v2380, %v2380
        %v2552 = vmul.f32 %v2385, %v2385
        %v2553 = vmul.f32 %v2390, %v2390
        %v2554 = vmul.f32 %v2395, %v2395
        %v2555 = vmul.f32 %v2400, %v2400
        %v2556 = vmul.f32 %v2405, %v2405
        %v2557 = vmul.f32 %v2410, %v2410
        %v2558 = vmul.f32 %v2415, %v2415
        %v2559 = vmul.f32 %v2420, %v2420
        %v2560 = vmul.f32 %v2425, %v2425
        %v2561 = vmul.f32 %v2430, %v2430
        %v2562 = vmul.f32 %v2435, %v2435
        %v2563 = vmul.f32 %v2440, %v2440
        %v2564 = vmul.f32 %v2445, %v2445
        %v2565 = vmul.f32 %v2450, %v2450
        %v2566 = vmul.f32 %v2455, %v2455
        %v2567 = vmul.f32 %v2460, %v2460
        %v2568 = vmul.f32 %v2465, %v2465
        %v2569 = vadd.f32 %v2537, %v2538
        %v2570 = vadd.f32 %v2569, %v2539
        %v2571 = vadd.f32 %v2570, %v2540
        %v2572 = vadd.f32 %v2571, %v2541
        %v2573 = vadd.f32 %v2572, %v2542
        %v2574 = vadd.f32 %v2573, %v2543
        %v2575 = vadd.f32 %v2574, %v2544
        %v2576 = vadd.f32 %v2575, %v2545
        %v2577 = vadd.f32 %v2576, %v2546
        %v2578 = vadd.f32 %v2577, %v2547
        %v2579 = vadd.f32 %v2578, %v2548
        %v2580 = vadd.f32 %v2579, %v2549
        %v2581 = vadd.f32 %v2580, %v2550
        %v2582 = vadd.f32 %v2581, %v2551
        %v2583 = vadd.f32 %v2582, %v2552
        %v2584 = vadd.f32 %v2583, %v2553
        %v2585 = vadd.f32 %v2584, %v2554
        %v2586 = vadd.f32 %v2585, %v2555
        %v2587 = vadd.f32 %v2586, %v2556
        %v2588 = vadd.f32 %v2587, %v2557
        %v2589 = vadd.f32 %v2588, %v2558
        %v2590 = vadd.f32 %v2589, %v2559
        %v2591 = vadd.f32 %v2590, %v2560
        %v2592 = vadd.f32 %v2591, %v2561
        %v2593 = vadd.f32 %v2592, %v2562
        %v2594 = vadd.f32 %v2593, %v2563
        %v2595 = vadd.f32 %v2594, %v2564
        %v2596 = vadd.f32 %v2595, %v2565
        %v2597 = vadd.f32 %v2596, %v2566
        %v2598 = vadd.f32 %v2597, %v2567
        %v2599 = vadd.f32 %v2598, %v2568
        %v2600 = vrot.slane %v2599, 4
        %v2601 = vadd.f32 %v2599, %v2600
        %v2602 = vrot.slane %v2601, 2
        %v2603 = vadd.f32 %v2601, %v2602
        %v2604 = vrot.slane %v2603, 1
        %v2605 = vadd.f32 %v2603, %v2604
        %vm2606 = vcmask 1040384
        %v2607 = vsel %vm2606, %v2536, %v2605
        %2608 = vst [vmem:[%s214] sm:$0x3] %v2607
        %s2609 = sand.u32 %s80, 1
        %s2610 = scalar_lea.sflag [#allocation6], %s2609
        %s2611 = sand.u32 %s80, 1
        %s2612 = smul.addr %s2611, 256
        %s2613 = scalar_lea.vmem [#allocation9], %s2612
        %s2614 = sand.u32 %s106, 1
        %s2615 = scalar_lea.sflag [#allocation11], %s2614
        %s2616 = sand.u32 %s106, 1
        %s2617 = smul.addr %s2616, 2
        %s2618 = scalar_lea.vmem [#allocation10], %s2617
        // Predicated region
        $region37: #{tpu_custom_call.1} parent=27 // pred_check
          %p2619 = pneg %p90
        $region38: #{tpu_custom_call.1} parent=27 // pred_check_branch
          %2621 = sbr.rel (%p2619) target = $region40
        $region39: #{tpu_custom_call.1} parent=27 // pred_region
          %s2623 = ssub.s32 4096, 4096
          %2624 = vsyncadd %s2610, %s2623
          %s2625 = smul.addr %s25, 32
          %s2626 = smul.addr %s2625, 128
          %s2627 = scalar_lea.hbm %s2, %s2626
          %s2628 = sshll.u32 %s2613, 4
          %s2629 = int_to_ptr.vmem [resolvable:$true] %s2628
          %2634 = dma.vmem_to_hbm [thread:$0]  %s2629, 4096, %s2627, %s2610, 128, 128, 8
        $region40: #{tpu_custom_call.1} parent=27 // pred_fallthru
          _
        // Predicated region
        $region41: #{tpu_custom_call.1} parent=27 // pred_check
          %p2635 = pneg %p116
        $region42: #{tpu_custom_call.1} parent=27 // pred_check_branch
          %2637 = sbr.rel (%p2635) target = $region44
        $region43: #{tpu_custom_call.1} parent=27 // pred_region
          %s2639 = ssub.s32 32, 32
          %2640 = vsyncadd %s2615, %s2639
          %s2641 = smul.addr %s25, 32
          %s2642 = scalar_lea.hbm %s3, %s2641
          %s2644 = sshll.u32 %s2618, 4
          %s2645 = int_to_ptr.vmem [resolvable:$true] %s2644
          %2647 = dma.vmem_to_hbm [thread:$0]  %s2645, 32, %s2642, %s2615
        $region44: #{tpu_custom_call.1} parent=27 // pred_fallthru
          _
      $region28: #{tpu_custom_call.1} parent=5 // pred_fallthru
        _
      %p2648 = scmp.le.s32.totalorder 2, %s20
      // Predicated region
      $region45: #{tpu_custom_call.1} parent=5 // pred_check
        %p2649 = pneg %p2648
      $region46: #{tpu_custom_call.1} parent=5 // pred_check_branch
        %2651 = sbr.rel (%p2649) target = $region48
      $region47: #{tpu_custom_call.1} parent=5 // pred_region
        %s2652 = ssub.s32 %s20, 2
        // Predicated region
        $region49: #{tpu_custom_call.1} parent=47 // pred_check
          %p2653 = pneg %p96
        $region50: #{tpu_custom_call.1} parent=47 // pred_check_branch
          %2655 = sbr.rel (%p2653) target = $region52
        $region51: #{tpu_custom_call.1} parent=47 // pred_region
          %s2656 = sand.u32 %s81, 1
          %s2657 = scalar_lea.sflag [#allocation6], %s2656
          %s2658 = sand.u32 %s81, 1
          %s2659 = smul.addr %s2658, 256
          %s2660 = scalar_lea.vmem [#allocation9], %s2659
          %2661 = dma.done %s2657, 4096
        $region52: #{tpu_custom_call.1} parent=47 // pred_fallthru
          _
        // Predicated region
        $region53: #{tpu_custom_call.1} parent=47 // pred_check
          %p2662 = pneg %p122
        $region54: #{tpu_custom_call.1} parent=47 // pred_check_branch
          %2664 = sbr.rel (%p2662) target = $region56
        $region55: #{tpu_custom_call.1} parent=47 // pred_region
          %s2665 = sand.u32 %s107, 1
          %s2666 = scalar_lea.sflag [#allocation11], %s2665
          %s2667 = sand.u32 %s107, 1
          %s2668 = smul.addr %s2667, 2
          %s2669 = scalar_lea.vmem [#allocation10], %s2668
          %2670 = dma.done %s2666, 32
        $region56: #{tpu_custom_call.1} parent=47 // pred_fallthru
          _
      $region48: #{tpu_custom_call.1} parent=5 // pred_fallthru
        _
    $region6: #{tpu_custom_call.1} parent=1 // loop_footer
      %s24 = sadd.s32 1, %s20
    $region7: #{tpu_custom_call.1} parent=1 // loop_footer_branch
      %19 = sbr.rel target = $region3
    $region8: #{tpu_custom_call.1} parent=1 // loop_exit
      _
    %2671 = vsyncpa [#allocation5], 1
    %s2672 = scalar_lea.sflag [#allocation5], 1
    %2673 = vsyncpa %s2672, 1
    %2674 = vsyncpa [#allocation8], 1
    %2675 = vsyncpa [#allocation6], 1
    %s2676 = scalar_lea.sflag [#allocation6], 1
    %2677 = vsyncpa %s2676, 1
    %2678 = vsyncpa [#allocation11], 1
    %s2679 = scalar_lea.sflag [#allocation11], 1
    %2680 = vsyncpa %s2679, 1

</llo_original>
